<compile_context>
chip_gen: v7x
topology: tpu7x:2x2x1
jax: 0.10.0
libtpu: 0.0.40
codegen_flags: <defaults>
</compile_context>

<pallas_src>
import functools
import math

import jax
import jax.numpy as jnp
from jax.experimental import pallas as pl
from jax.experimental.pallas import tpu as pltpu


# Row indices of the packed bias / LayerNorm parameter matrix `vec` ([10, 2H]).
_R_BQ, _R_BK, _R_BV, _R_BO, _R_BF1, _R_BF2 = 0, 1, 2, 3, 4, 5
_R_LN1G, _R_LN1B, _R_LN2G, _R_LN2B = 6, 7, 8, 9
_NUM_VEC_ROWS = 10


def _erf(x):
    """Abramowitz & Stegun 7.1.26 polynomial erf (|err| <= 1.5e-7), f32 only."""
    a1, a2, a3, a4, a5 = (0.254829592, -0.284496736, 1.421413741,
                          -1.453152027, 1.061405429)
    p = 0.3275911
    ax = jnp.abs(x)
    t = 1.0 / (1.0 + p * ax)
    poly = ((((a5 * t + a4) * t + a3) * t + a2) * t + a1) * t
    y = 1.0 - poly * jnp.exp(-(ax * ax))
    return jnp.where(x < 0.0, -y, y)


def _gelu_exact(x):
    # PyTorch nn.GELU() default = exact erf-based GELU.
    return 0.5 * x * (1.0 + _erf(x * (1.0 / math.sqrt(2.0))))


def _layernorm(x, gamma, beta, eps=1e-5):
    mu = jnp.mean(x, axis=-1, keepdims=True)
    var = jnp.mean((x - mu) ** 2, axis=-1, keepdims=True)
    return (x - mu) * jax.lax.rsqrt(var + eps) * gamma + beta


def gt_layer_kernel(h_ref, wqkv_ref, wo_ref, wf1_ref, wf2_ref, vec_ref, out_ref,
                    *, num_heads):
    BT, S, H = h_ref.shape
    dh = H // num_heads
    n = BT * S

    # Residual / LayerNorm path stays f32; a bf16 copy feeds the MXU.
    h32 = h_ref[...].astype(jnp.float32).reshape(n, H)
    hb = h32.astype(jnp.bfloat16)

    vec = vec_ref[...]                                      # [10, 2H] f32

    def prow(r, width=H):
        # One parameter per sublane row; offset-0 lane slice (free view).
        return vec[r:r + 1, 0:width]

    # ---- Fused Q/K/V projection (one MXU pass, bf16 operands, f32 accum) ----
    qkv = jnp.dot(hb, wqkv_ref[...], preferred_element_type=jnp.float32)  # [n, 3H]
    q = qkv[:, 0:H] + prow(_R_BQ)        # 1/sqrt(dh) folded into wq / bq
    k = qkv[:, H:2 * H] + prow(_R_BK)
    v = qkv[:, 2 * H:3 * H] + prow(_R_BV)

    qb = q.astype(jnp.bfloat16).reshape(BT, S, H)
    kb = k.astype(jnp.bfloat16).reshape(BT, S, H)
    vb = v.astype(jnp.bfloat16).reshape(BT, S, H)

    # ---- Multi-head self-attention (softmax in f32) --------------------------
    # Per-head loop kept (num_heads is tiny); single batch dim per einsum is the
    # proven Mosaic bmm pattern.
    ctx_heads = []
    for hd in range(num_heads):
        lo = hd * dh
        qh = qb[:, :, lo:lo + dh]
        kh = kb[:, :, lo:lo + dh]
        vh = vb[:, :, lo:lo + dh]
        s = jnp.einsum("bqd,bkd->bqk", qh, kh,
                       preferred_element_type=jnp.float32)               # [BT,S,S]
        s = s - jnp.max(s, axis=-1, keepdims=True)
        e = jnp.exp(s)
        p = e * pl.reciprocal(jnp.sum(e, axis=-1, keepdims=True), approx=True)
        ctx_heads.append(jnp.einsum("bqk,bkd->bqd", p.astype(jnp.bfloat16), vh,
                                    preferred_element_type=jnp.float32))
    ctx = jnp.concatenate(ctx_heads, axis=-1).reshape(n, H)
    # Single full-width output projection (contraction depth H, not dh).
    att = jnp.dot(ctx.astype(jnp.bfloat16), wo_ref[...],
                  preferred_element_type=jnp.float32) + prow(_R_BO)

    # ---- Residual + LayerNorm 1 (dropout = identity in eval mode) -----------
    x = _layernorm(att + h32, prow(_R_LN1G), prow(_R_LN1B))

    # ---- FFN (exact GELU, f32 on the vector units) ---------------------------
    y = jnp.dot(x.astype(jnp.bfloat16), wf1_ref[...],
                preferred_element_type=jnp.float32) + prow(_R_BF1, 2 * H)
    y = _gelu_exact(y)
    y = jnp.dot(y.astype(jnp.bfloat16), wf2_ref[...],
                preferred_element_type=jnp.float32) + prow(_R_BF2)

    # ---- Residual + LayerNorm 2 ----------------------------------------------
    out = _layernorm(x + y, prow(_R_LN2G), prow(_R_LN2B))
    out_ref[...] = out.reshape(BT, S, H).astype(out_ref.dtype)


def pack_params(p, num_heads):
    """Pack parameters: bf16 weight matrices + one f32 row-per-parameter matrix.

    The 1/sqrt(dh) attention scale is folded into the Q projection weight/bias.
    """
    H = p["wq"].shape[0]
    dh = H // num_heads
    scale = 1.0 / math.sqrt(dh)

    wqkv = jnp.concatenate([p["wq"] * scale, p["wk"], p["wv"]],
                           axis=1).astype(jnp.bfloat16)                  # [H, 3H]
    wo = p["wo"].astype(jnp.bfloat16)                                    # [H, H]
    wf1 = p["wf1"].astype(jnp.bfloat16)                                  # [H, 2H]
    wf2 = p["wf2"].astype(jnp.bfloat16)                                  # [2H, H]

    vec = jnp.zeros((_NUM_VEC_ROWS, 2 * H), jnp.float32)
    rows = [(_R_BQ, p["bq"] * scale), (_R_BK, p["bk"]), (_R_BV, p["bv"]),
            (_R_BO, p["bo"]), (_R_BF1, p["bf1"]), (_R_BF2, p["bf2"]),
            (_R_LN1G, p["ln1_g"]), (_R_LN1B, p["ln1_b"]),
            (_R_LN2G, p["ln2_g"]), (_R_LN2B, p["ln2_b"])]
    for r, val in rows:
        flat = jnp.ravel(val)
        vec = vec.at[r, :flat.shape[0]].set(flat)
    return wqkv, wo, wf1, wf2, vec


def gt_layer(h, params, num_heads, *, block_b=None):
    """Run the GTLayer forward pass on a batch of graphs.  h: [B, S, H] f32."""
    B, S, H = h.shape
    if block_b is None:
        # Prefer >=4 grid steps (>=2 per v7x TensorCore) while keeping blocks big.
        block_b = B // 4 if B % 4 == 0 else B
    assert B % block_b == 0, "batch must be divisible by block_b"

    wqkv, wo, wf1, wf2, vec = pack_params(params, num_heads)
    kernel = functools.partial(gt_layer_kernel, num_heads=num_heads)

    def const_spec(shape):
        # Full-array block, constant index_map -> resident in VMEM across steps.
        return pl.BlockSpec(shape, lambda b: (0, 0))

    return pl.pallas_call(
        kernel,
        out_shape=jax.ShapeDtypeStruct((B, S, H), h.dtype),
        grid_spec=pltpu.PrefetchScalarGridSpec(
            num_scalar_prefetch=0,
            grid=(B // block_b,),
            in_specs=[
                pl.BlockSpec((block_b, S, H), lambda b: (b, 0, 0)),
                const_spec(wqkv.shape),
                const_spec(wo.shape),
                const_spec(wf1.shape),
                const_spec(wf2.shape),
                const_spec(vec.shape),
            ],
            out_specs=pl.BlockSpec((block_b, S, H), lambda b: (b, 0, 0)),
        ),
        compiler_params=pltpu.CompilerParams(
            dimension_semantics=("parallel",),
            vmem_limit_bytes=48 * 1024 * 1024),
    )(h, wqkv, wo, wf1, wf2, vec)


def init_params(key, hidden_size):
    """Deterministic synthetic parameter init (shapes match GTLayer)."""
    keys = jax.random.split(key, 8)
    H, F = hidden_size, 2 * hidden_size

    def w(k, shape, fan_in):
        s = 1.0 / math.sqrt(fan_in)
        return jax.random.uniform(k, shape, jnp.float32, -s, s)

    # Weights stored as (in, out) so the kernel computes x @ W + b
    # (equivalent to PyTorch's x @ W.T + b with W of shape (out, in)).
    return {
        "wq": w(keys[0], (H, H), H), "bq": jnp.zeros((1, H), jnp.float32),
        "wk": w(keys[1], (H, H), H), "bk": jnp.zeros((1, H), jnp.float32),
        "wv": w(keys[2], (H, H), H), "bv": jnp.zeros((1, H), jnp.float32),
        "wo": w(keys[3], (H, H), H), "bo": jnp.zeros((1, H), jnp.float32),
        "ln1_g": jnp.ones((1, H), jnp.float32),
        "ln1_b": jnp.zeros((1, H), jnp.float32),
        "wf1": w(keys[4], (H, F), H),
        "bf1": w(keys[5], (1, F), H),
        "wf2": w(keys[6], (F, H), F),
        "bf2": w(keys[7], (1, H), F),
        "ln2_g": jnp.ones((1, H), jnp.float32),
        "ln2_b": jnp.zeros((1, H), jnp.float32),
    }


def _quantize_like_kernel(p):
    """Weights rounded to bf16 (as the kernel consumes them), math stays f32."""
    q = dict(p)
    for k in ("wq", "wk", "wv", "wo", "wf1", "wf2"):
        q[k] = p[k].astype(jnp.bfloat16).astype(jnp.float32)
    return q


def _reference_single(h, p, num_heads):
    """Pure-JAX (f32) reference for one graph [S, H]."""
    H = h.shape[-1]
    dh = H // num_heads
    q = h @ p["wq"] + p["bq"]
    k = h @ p["wk"] + p["bk"]
    v = h @ p["wv"] + p["bv"]
    outs = []
    for i in range(num_heads):
        sl = slice(i * dh, (i + 1) * dh)
        s = (q[:, sl] @ k[:, sl].T) / math.sqrt(dh)
        a = jax.nn.softmax(s, axis=-1)
        outs.append(a @ v[:, sl])
    att = jnp.concatenate(outs, axis=-1) @ p["wo"] + p["bo"]

    def ln(x, g, b, eps=1e-5):
        mu = x.mean(-1, keepdims=True)
        var = ((x - mu) ** 2).mean(-1, keepdims=True)
        return (x - mu) / jnp.sqrt(var + eps) * g + b

    x = ln(att + h, p["ln1_g"], p["ln1_b"])
    y = x @ p["wf1"] + p["bf1"]
    y = jax.nn.gelu(y, approximate=False)
    y = y @ p["wf2"] + p["bf2"]
    return ln(x + y, p["ln2_g"], p["ln2_b"])


def _reference(h, p, num_heads):
    return jax.vmap(lambda hh: _reference_single(hh, p, num_heads))(h)


if __name__ == "__main__":
    hidden_size = 12     # GTLayer defaults
    num_heads = 3
    seq = 8
    batch = 32           # batch of graphs; block_b=8 -> grid=(4,), 2 steps per v7x core

    key = jax.random.PRNGKey(0)
    k_h, k_p = jax.random.split(key)
    h = jax.random.normal(k_h, (batch, seq, hidden_size), jnp.float32)
    params = init_params(k_p, hidden_size)

    out = gt_layer(h, params, num_heads, block_b=8)
    out = jax.block_until_ready(out)

    # Reference uses the same bf16-quantized weights the kernel consumes (the
    # quantization is an intentional precision choice); remaining mismatch comes
    # from bf16 activation rounding at the MXU and the approx softmax reciprocal.
    ref = _reference(h, _quantize_like_kernel(params), num_heads)
    assert out.shape == (batch, seq, hidden_size)
    assert jnp.allclose(out, ref, atol=5e-2, rtol=5e-2), "mismatch vs JAX reference"

    print("KERNEL_OK")
</pallas_src>

<mosaic_0001>
module attributes {stable_mosaic.version = 11 : i64} {
  func.func @gt_layer_kernel(%arg0: i32, %arg1: memref<8x8x12xf32, #tpu.memory_space<vmem>>, %arg2: memref<12x36xbf16, #tpu.memory_space<vmem>>, %arg3: memref<12x12xbf16, #tpu.memory_space<vmem>>, %arg4: memref<12x24xbf16, #tpu.memory_space<vmem>>, %arg5: memref<24x12xbf16, #tpu.memory_space<vmem>>, %arg6: memref<10x24xf32, #tpu.memory_space<vmem>>, %arg7: memref<8x8x12xf32, #tpu.memory_space<vmem>>) attributes {dimension_semantics = [#tpu.dimension_semantics<parallel>], iteration_bounds = array<i64: 4>, scalar_prefetch = 0 : i64, scratch_operands = 0 : i64, tpu.core_type = #tpu.core_type<tc>, window_params = [{transform_indices = @transform_0, window_bounds = array<i64: 8, 8, 12>}, {pipeline_mode = #tpu.pipeline_mode<synchronous>, transform_indices = @transform_1, window_bounds = array<i64: 12, 36>}, {pipeline_mode = #tpu.pipeline_mode<synchronous>, transform_indices = @transform_2, window_bounds = array<i64: 12, 12>}, {pipeline_mode = #tpu.pipeline_mode<synchronous>, transform_indices = @transform_3, window_bounds = array<i64: 12, 24>}, {pipeline_mode = #tpu.pipeline_mode<synchronous>, transform_indices = @transform_4, window_bounds = array<i64: 24, 12>}, {pipeline_mode = #tpu.pipeline_mode<synchronous>, transform_indices = @transform_5, window_bounds = array<i64: 10, 24>}, {transform_indices = @transform_6, window_bounds = array<i64: 8, 8, 12>}]} {
    %c0 = arith.constant 0 : index
    %c0_0 = arith.constant 0 : index
    %c0_1 = arith.constant 0 : index
    %0 = vector.load %arg1[%c0, %c0_0, %c0_1] : memref<8x8x12xf32, #tpu.memory_space<vmem>>, vector<8x8x12xf32>
    %1 = vector.shape_cast %0 : vector<8x8x12xf32> to vector<64x12xf32>
    %2 = arith.truncf %1 : vector<64x12xf32> to vector<64x12xbf16>
    %c0_2 = arith.constant 0 : index
    %c0_3 = arith.constant 0 : index
    %3 = vector.load %arg6[%c0_2, %c0_3] : memref<10x24xf32, #tpu.memory_space<vmem>>, vector<10x24xf32>
    %c0_4 = arith.constant 0 : index
    %c0_5 = arith.constant 0 : index
    %4 = vector.load %arg2[%c0_4, %c0_5] : memref<12x36xbf16, #tpu.memory_space<vmem>>, vector<12x36xbf16>
    %cst = arith.constant dense<0.000000e+00> : vector<64x36xf32>
    %5 = tpu.matmul %2, %4, %cst {dimension_numbers = #tpu.dot_dimension_numbers<[1], [0], [0], [1], [0, 0, 1, 1], [], []>} : vector<64x12xbf16>, vector<12x36xbf16>, vector<64x36xf32> -> vector<64x36xf32>
    %6 = vector.extract_strided_slice %5 {offsets = [0, 0], sizes = [64, 12], strides = [1, 1]} : vector<64x36xf32> to vector<64x12xf32>
    %7 = vector.extract_strided_slice %3 {offsets = [0, 0], sizes = [1, 12], strides = [1, 1]} : vector<10x24xf32> to vector<1x12xf32>
    %8 = vector.broadcast %7 : vector<1x12xf32> to vector<64x12xf32>
    %9 = arith.addf %6, %8 : vector<64x12xf32>
    %10 = vector.extract_strided_slice %5 {offsets = [0, 12], sizes = [64, 12], strides = [1, 1]} : vector<64x36xf32> to vector<64x12xf32>
    %11 = vector.extract_strided_slice %3 {offsets = [1, 0], sizes = [1, 12], strides = [1, 1]} : vector<10x24xf32> to vector<1x12xf32>
    %12 = vector.broadcast %11 : vector<1x12xf32> to vector<64x12xf32>
    %13 = arith.addf %10, %12 : vector<64x12xf32>
    %14 = vector.extract_strided_slice %5 {offsets = [0, 24], sizes = [64, 12], strides = [1, 1]} : vector<64x36xf32> to vector<64x12xf32>
    %15 = vector.extract_strided_slice %3 {offsets = [2, 0], sizes = [1, 12], strides = [1, 1]} : vector<10x24xf32> to vector<1x12xf32>
    %16 = vector.broadcast %15 : vector<1x12xf32> to vector<64x12xf32>
    %17 = arith.addf %14, %16 : vector<64x12xf32>
    %18 = arith.truncf %9 : vector<64x12xf32> to vector<64x12xbf16>
    %19 = vector.shape_cast %18 : vector<64x12xbf16> to vector<8x8x12xbf16>
    %20 = arith.truncf %13 : vector<64x12xf32> to vector<64x12xbf16>
    %21 = vector.shape_cast %20 : vector<64x12xbf16> to vector<8x8x12xbf16>
    %22 = arith.truncf %17 : vector<64x12xf32> to vector<64x12xbf16>
    %23 = vector.shape_cast %22 : vector<64x12xbf16> to vector<8x8x12xbf16>
    %24 = vector.extract_strided_slice %19 {offsets = [0, 0, 0], sizes = [8, 8, 4], strides = [1, 1, 1]} : vector<8x8x12xbf16> to vector<8x8x4xbf16>
    %25 = vector.extract_strided_slice %21 {offsets = [0, 0, 0], sizes = [8, 8, 4], strides = [1, 1, 1]} : vector<8x8x12xbf16> to vector<8x8x4xbf16>
    %26 = vector.extract_strided_slice %23 {offsets = [0, 0, 0], sizes = [8, 8, 4], strides = [1, 1, 1]} : vector<8x8x12xbf16> to vector<8x8x4xbf16>
    "tpu.trace_start"() <{level = 10 : i32, message = "bqd,bkd->bqk"}> : () -> ()
    %cst_6 = arith.constant dense<0.000000e+00> : vector<8x8x8xf32>
    %27 = tpu.matmul %24, %25, %cst_6 {dimension_numbers = #tpu.dot_dimension_numbers<[2], [2], [1], [1], [0, 0, 0, 1, 1, 1], [0], [0]>} : vector<8x8x4xbf16>, vector<8x8x4xbf16>, vector<8x8x8xf32> -> vector<8x8x8xf32>
    "tpu.trace_stop"() : () -> ()
    %cst_7 = arith.constant dense<0xFF800000> : vector<8x8xf32>
    %28 = vector.multi_reduction <maximumf>, %27, %cst_7 [2] : vector<8x8x8xf32> to vector<8x8xf32>
    %29 = vector.shape_cast %28 : vector<8x8xf32> to vector<8x8x1xf32>
    %30 = vector.broadcast %29 : vector<8x8x1xf32> to vector<8x8x8xf32>
    %31 = arith.subf %27, %30 : vector<8x8x8xf32>
    %32 = math.exp %31 : vector<8x8x8xf32>
    %cst_8 = arith.constant dense<0.000000e+00> : vector<8x8xf32>
    %33 = vector.multi_reduction <add>, %32, %cst_8 [2] : vector<8x8x8xf32> to vector<8x8xf32>
    %34 = vector.shape_cast %33 : vector<8x8xf32> to vector<8x8x1xf32>
    %35 = tpu.reciprocal %34 {approx = true} : vector<8x8x1xf32> -> vector<8x8x1xf32>
    %36 = vector.broadcast %35 : vector<8x8x1xf32> to vector<8x8x8xf32>
    %37 = arith.mulf %32, %36 : vector<8x8x8xf32>
    %38 = arith.truncf %37 : vector<8x8x8xf32> to vector<8x8x8xbf16>
    "tpu.trace_start"() <{level = 10 : i32, message = "bqk,bkd->bqd"}> : () -> ()
    %cst_9 = arith.constant dense<0.000000e+00> : vector<8x8x4xf32>
    %39 = tpu.matmul %38, %26, %cst_9 {dimension_numbers = #tpu.dot_dimension_numbers<[2], [1], [1], [2], [0, 0, 0, 1, 1, 2], [0], [0]>} : vector<8x8x8xbf16>, vector<8x8x4xbf16>, vector<8x8x4xf32> -> vector<8x8x4xf32>
    "tpu.trace_stop"() : () -> ()
    %40 = vector.extract_strided_slice %19 {offsets = [0, 0, 4], sizes = [8, 8, 4], strides = [1, 1, 1]} : vector<8x8x12xbf16> to vector<8x8x4xbf16>
    %41 = vector.extract_strided_slice %21 {offsets = [0, 0, 4], sizes = [8, 8, 4], strides = [1, 1, 1]} : vector<8x8x12xbf16> to vector<8x8x4xbf16>
    %42 = vector.extract_strided_slice %23 {offsets = [0, 0, 4], sizes = [8, 8, 4], strides = [1, 1, 1]} : vector<8x8x12xbf16> to vector<8x8x4xbf16>
    "tpu.trace_start"() <{level = 10 : i32, message = "bqd,bkd->bqk"}> : () -> ()
    %cst_10 = arith.constant dense<0.000000e+00> : vector<8x8x8xf32>
    %43 = tpu.matmul %40, %41, %cst_10 {dimension_numbers = #tpu.dot_dimension_numbers<[2], [2], [1], [1], [0, 0, 0, 1, 1, 1], [0], [0]>} : vector<8x8x4xbf16>, vector<8x8x4xbf16>, vector<8x8x8xf32> -> vector<8x8x8xf32>
    "tpu.trace_stop"() : () -> ()
    %cst_11 = arith.constant dense<0xFF800000> : vector<8x8xf32>
    %44 = vector.multi_reduction <maximumf>, %43, %cst_11 [2] : vector<8x8x8xf32> to vector<8x8xf32>
    %45 = vector.shape_cast %44 : vector<8x8xf32> to vector<8x8x1xf32>
    %46 = vector.broadcast %45 : vector<8x8x1xf32> to vector<8x8x8xf32>
    %47 = arith.subf %43, %46 : vector<8x8x8xf32>
    %48 = math.exp %47 : vector<8x8x8xf32>
    %cst_12 = arith.constant dense<0.000000e+00> : vector<8x8xf32>
    %49 = vector.multi_reduction <add>, %48, %cst_12 [2] : vector<8x8x8xf32> to vector<8x8xf32>
    %50 = vector.shape_cast %49 : vector<8x8xf32> to vector<8x8x1xf32>
    %51 = tpu.reciprocal %50 {approx = true} : vector<8x8x1xf32> -> vector<8x8x1xf32>
    %52 = vector.broadcast %51 : vector<8x8x1xf32> to vector<8x8x8xf32>
    %53 = arith.mulf %48, %52 : vector<8x8x8xf32>
    %54 = arith.truncf %53 : vector<8x8x8xf32> to vector<8x8x8xbf16>
    "tpu.trace_start"() <{level = 10 : i32, message = "bqk,bkd->bqd"}> : () -> ()
    %cst_13 = arith.constant dense<0.000000e+00> : vector<8x8x4xf32>
    %55 = tpu.matmul %54, %42, %cst_13 {dimension_numbers = #tpu.dot_dimension_numbers<[2], [1], [1], [2], [0, 0, 0, 1, 1, 2], [0], [0]>} : vector<8x8x8xbf16>, vector<8x8x4xbf16>, vector<8x8x4xf32> -> vector<8x8x4xf32>
    "tpu.trace_stop"() : () -> ()
    %56 = vector.extract_strided_slice %19 {offsets = [0, 0, 8], sizes = [8, 8, 4], strides = [1, 1, 1]} : vector<8x8x12xbf16> to vector<8x8x4xbf16>
    %57 = vector.extract_strided_slice %21 {offsets = [0, 0, 8], sizes = [8, 8, 4], strides = [1, 1, 1]} : vector<8x8x12xbf16> to vector<8x8x4xbf16>
    %58 = vector.extract_strided_slice %23 {offsets = [0, 0, 8], sizes = [8, 8, 4], strides = [1, 1, 1]} : vector<8x8x12xbf16> to vector<8x8x4xbf16>
    "tpu.trace_start"() <{level = 10 : i32, message = "bqd,bkd->bqk"}> : () -> ()
    %cst_14 = arith.constant dense<0.000000e+00> : vector<8x8x8xf32>
    %59 = tpu.matmul %56, %57, %cst_14 {dimension_numbers = #tpu.dot_dimension_numbers<[2], [2], [1], [1], [0, 0, 0, 1, 1, 1], [0], [0]>} : vector<8x8x4xbf16>, vector<8x8x4xbf16>, vector<8x8x8xf32> -> vector<8x8x8xf32>
    "tpu.trace_stop"() : () -> ()
    %cst_15 = arith.constant dense<0xFF800000> : vector<8x8xf32>
    %60 = vector.multi_reduction <maximumf>, %59, %cst_15 [2] : vector<8x8x8xf32> to vector<8x8xf32>
    %61 = vector.shape_cast %60 : vector<8x8xf32> to vector<8x8x1xf32>
    %62 = vector.broadcast %61 : vector<8x8x1xf32> to vector<8x8x8xf32>
    %63 = arith.subf %59, %62 : vector<8x8x8xf32>
    %64 = math.exp %63 : vector<8x8x8xf32>
    %cst_16 = arith.constant dense<0.000000e+00> : vector<8x8xf32>
    %65 = vector.multi_reduction <add>, %64, %cst_16 [2] : vector<8x8x8xf32> to vector<8x8xf32>
    %66 = vector.shape_cast %65 : vector<8x8xf32> to vector<8x8x1xf32>
    %67 = tpu.reciprocal %66 {approx = true} : vector<8x8x1xf32> -> vector<8x8x1xf32>
    %68 = vector.broadcast %67 : vector<8x8x1xf32> to vector<8x8x8xf32>
    %69 = arith.mulf %64, %68 : vector<8x8x8xf32>
    %70 = arith.truncf %69 : vector<8x8x8xf32> to vector<8x8x8xbf16>
    "tpu.trace_start"() <{level = 10 : i32, message = "bqk,bkd->bqd"}> : () -> ()
    %cst_17 = arith.constant dense<0.000000e+00> : vector<8x8x4xf32>
    %71 = tpu.matmul %70, %58, %cst_17 {dimension_numbers = #tpu.dot_dimension_numbers<[2], [1], [1], [2], [0, 0, 0, 1, 1, 2], [0], [0]>} : vector<8x8x8xbf16>, vector<8x8x4xbf16>, vector<8x8x4xf32> -> vector<8x8x4xf32>
    "tpu.trace_stop"() : () -> ()
    %72 = tpu.concatenate %39, %55, %71 in 2 : vector<8x8x4xf32>, vector<8x8x4xf32>, vector<8x8x4xf32> -> vector<8x8x12xf32>
    %73 = vector.shape_cast %72 : vector<8x8x12xf32> to vector<64x12xf32>
    %74 = arith.truncf %73 : vector<64x12xf32> to vector<64x12xbf16>
    %c0_18 = arith.constant 0 : index
    %c0_19 = arith.constant 0 : index
    %75 = vector.load %arg3[%c0_18, %c0_19] : memref<12x12xbf16, #tpu.memory_space<vmem>>, vector<12x12xbf16>
    %cst_20 = arith.constant dense<0.000000e+00> : vector<64x12xf32>
    %76 = tpu.matmul %74, %75, %cst_20 {dimension_numbers = #tpu.dot_dimension_numbers<[1], [0], [0], [1], [0, 0, 1, 1], [], []>} : vector<64x12xbf16>, vector<12x12xbf16>, vector<64x12xf32> -> vector<64x12xf32>
    %77 = vector.extract_strided_slice %3 {offsets = [3, 0], sizes = [1, 12], strides = [1, 1]} : vector<10x24xf32> to vector<1x12xf32>
    %78 = vector.broadcast %77 : vector<1x12xf32> to vector<64x12xf32>
    %79 = arith.addf %76, %78 : vector<64x12xf32>
    %80 = arith.addf %79, %1 : vector<64x12xf32>
    %81 = vector.extract_strided_slice %3 {offsets = [6, 0], sizes = [1, 12], strides = [1, 1]} : vector<10x24xf32> to vector<1x12xf32>
    %82 = vector.extract_strided_slice %3 {offsets = [7, 0], sizes = [1, 12], strides = [1, 1]} : vector<10x24xf32> to vector<1x12xf32>
    %cst_21 = arith.constant dense<0.000000e+00> : vector<64xf32>
    %83 = vector.multi_reduction <add>, %80, %cst_21 [1] : vector<64x12xf32> to vector<64xf32>
    %84 = vector.shape_cast %83 : vector<64xf32> to vector<64x1xf32>
    %cst_22 = arith.constant 1.200000e+01 : f32
    %85 = vector.broadcast %cst_22 : f32 to vector<64x1xf32>
    %86 = arith.divf %84, %85 : vector<64x1xf32>
    %87 = vector.broadcast %86 : vector<64x1xf32> to vector<64x12xf32>
    %88 = arith.subf %80, %87 : vector<64x12xf32>
    %89 = arith.mulf %88, %88 : vector<64x12xf32>
    %cst_23 = arith.constant dense<0.000000e+00> : vector<64xf32>
    %90 = vector.multi_reduction <add>, %89, %cst_23 [1] : vector<64x12xf32> to vector<64xf32>
    %91 = vector.shape_cast %90 : vector<64xf32> to vector<64x1xf32>
    %cst_24 = arith.constant 1.200000e+01 : f32
    %92 = vector.broadcast %cst_24 : f32 to vector<64x1xf32>
    %93 = arith.divf %91, %92 : vector<64x1xf32>
    %94 = vector.broadcast %86 : vector<64x1xf32> to vector<64x12xf32>
    %95 = arith.subf %80, %94 : vector<64x12xf32>
    %cst_25 = arith.constant 9.99999974E-6 : f32
    %96 = vector.broadcast %cst_25 : f32 to vector<64x1xf32>
    %97 = arith.addf %93, %96 : vector<64x1xf32>
    %98 = math.rsqrt %97 : vector<64x1xf32>
    %99 = vector.broadcast %98 : vector<64x1xf32> to vector<64x12xf32>
    %100 = arith.mulf %95, %99 : vector<64x12xf32>
    %101 = vector.broadcast %81 : vector<1x12xf32> to vector<64x12xf32>
    %102 = arith.mulf %100, %101 : vector<64x12xf32>
    %103 = vector.broadcast %82 : vector<1x12xf32> to vector<64x12xf32>
    %104 = arith.addf %102, %103 : vector<64x12xf32>
    %105 = arith.truncf %104 : vector<64x12xf32> to vector<64x12xbf16>
    %c0_26 = arith.constant 0 : index
    %c0_27 = arith.constant 0 : index
    %106 = vector.load %arg4[%c0_26, %c0_27] : memref<12x24xbf16, #tpu.memory_space<vmem>>, vector<12x24xbf16>
    %cst_28 = arith.constant dense<0.000000e+00> : vector<64x24xf32>
    %107 = tpu.matmul %105, %106, %cst_28 {dimension_numbers = #tpu.dot_dimension_numbers<[1], [0], [0], [1], [0, 0, 1, 1], [], []>} : vector<64x12xbf16>, vector<12x24xbf16>, vector<64x24xf32> -> vector<64x24xf32>
    %108 = vector.extract_strided_slice %3 {offsets = [4, 0], sizes = [1, 24], strides = [1, 1]} : vector<10x24xf32> to vector<1x24xf32>
    %109 = vector.broadcast %108 : vector<1x24xf32> to vector<64x24xf32>
    %110 = arith.addf %107, %109 : vector<64x24xf32>
    %cst_29 = arith.constant 5.000000e-01 : f32
    %111 = vector.broadcast %cst_29 : f32 to vector<64x24xf32>
    %112 = arith.mulf %111, %110 : vector<64x24xf32>
    %cst_30 = arith.constant 0.707106769 : f32
    %113 = vector.broadcast %cst_30 : f32 to vector<64x24xf32>
    %114 = arith.mulf %110, %113 : vector<64x24xf32>
    %115 = math.absf %114 : vector<64x24xf32>
    %cst_31 = arith.constant 0.327591091 : f32
    %116 = vector.broadcast %cst_31 : f32 to vector<64x24xf32>
    %117 = arith.mulf %116, %115 : vector<64x24xf32>
    %cst_32 = arith.constant 1.000000e+00 : f32
    %118 = vector.broadcast %cst_32 : f32 to vector<64x24xf32>
    %119 = arith.addf %118, %117 : vector<64x24xf32>
    %cst_33 = arith.constant 1.000000e+00 : f32
    %120 = vector.broadcast %cst_33 : f32 to vector<64x24xf32>
    %121 = arith.divf %120, %119 : vector<64x24xf32>
    %cst_34 = arith.constant 1.06140542 : f32
    %122 = vector.broadcast %cst_34 : f32 to vector<64x24xf32>
    %123 = arith.mulf %122, %121 : vector<64x24xf32>
    %cst_35 = arith.constant -1.45315206 : f32
    %124 = vector.broadcast %cst_35 : f32 to vector<64x24xf32>
    %125 = arith.addf %123, %124 : vector<64x24xf32>
    %126 = arith.mulf %125, %121 : vector<64x24xf32>
    %cst_36 = arith.constant 1.42141378 : f32
    %127 = vector.broadcast %cst_36 : f32 to vector<64x24xf32>
    %128 = arith.addf %126, %127 : vector<64x24xf32>
    %129 = arith.mulf %128, %121 : vector<64x24xf32>
    %cst_37 = arith.constant -0.284496725 : f32
    %130 = vector.broadcast %cst_37 : f32 to vector<64x24xf32>
    %131 = arith.addf %129, %130 : vector<64x24xf32>
    %132 = arith.mulf %131, %121 : vector<64x24xf32>
    %cst_38 = arith.constant 0.254829586 : f32
    %133 = vector.broadcast %cst_38 : f32 to vector<64x24xf32>
    %134 = arith.addf %132, %133 : vector<64x24xf32>
    %135 = arith.mulf %134, %121 : vector<64x24xf32>
    %136 = arith.mulf %115, %115 : vector<64x24xf32>
    %cst_39 = arith.constant 0.000000e+00 : f32
    %137 = vector.broadcast %cst_39 : f32 to vector<64x24xf32>
    %138 = arith.subf %137, %136 : vector<64x24xf32>
    %139 = math.exp %138 : vector<64x24xf32>
    %140 = arith.mulf %135, %139 : vector<64x24xf32>
    %cst_40 = arith.constant 1.000000e+00 : f32
    %141 = vector.broadcast %cst_40 : f32 to vector<64x24xf32>
    %142 = arith.subf %141, %140 : vector<64x24xf32>
    %cst_41 = arith.constant 0.000000e+00 : f32
    %143 = vector.broadcast %cst_41 : f32 to vector<64x24xf32>
    %144 = arith.cmpf olt, %114, %143 : vector<64x24xf32>
    %cst_42 = arith.constant 0.000000e+00 : f32
    %145 = vector.broadcast %cst_42 : f32 to vector<64x24xf32>
    %146 = arith.subf %145, %142 : vector<64x24xf32>
    %147 = arith.select %144, %146, %142 : vector<64x24xi1>, vector<64x24xf32>
    %cst_43 = arith.constant 1.000000e+00 : f32
    %148 = vector.broadcast %cst_43 : f32 to vector<64x24xf32>
    %149 = arith.addf %148, %147 : vector<64x24xf32>
    %150 = arith.mulf %112, %149 : vector<64x24xf32>
    %151 = arith.truncf %150 : vector<64x24xf32> to vector<64x24xbf16>
    %c0_44 = arith.constant 0 : index
    %c0_45 = arith.constant 0 : index
    %152 = vector.load %arg5[%c0_44, %c0_45] : memref<24x12xbf16, #tpu.memory_space<vmem>>, vector<24x12xbf16>
    %cst_46 = arith.constant dense<0.000000e+00> : vector<64x12xf32>
    %153 = tpu.matmul %151, %152, %cst_46 {dimension_numbers = #tpu.dot_dimension_numbers<[1], [0], [0], [1], [0, 0, 1, 1], [], []>} : vector<64x24xbf16>, vector<24x12xbf16>, vector<64x12xf32> -> vector<64x12xf32>
    %154 = vector.extract_strided_slice %3 {offsets = [5, 0], sizes = [1, 12], strides = [1, 1]} : vector<10x24xf32> to vector<1x12xf32>
    %155 = vector.broadcast %154 : vector<1x12xf32> to vector<64x12xf32>
    %156 = arith.addf %153, %155 : vector<64x12xf32>
    %157 = arith.addf %104, %156 : vector<64x12xf32>
    %158 = vector.extract_strided_slice %3 {offsets = [8, 0], sizes = [1, 12], strides = [1, 1]} : vector<10x24xf32> to vector<1x12xf32>
    %159 = vector.extract_strided_slice %3 {offsets = [9, 0], sizes = [1, 12], strides = [1, 1]} : vector<10x24xf32> to vector<1x12xf32>
    %cst_47 = arith.constant dense<0.000000e+00> : vector<64xf32>
    %160 = vector.multi_reduction <add>, %157, %cst_47 [1] : vector<64x12xf32> to vector<64xf32>
    %161 = vector.shape_cast %160 : vector<64xf32> to vector<64x1xf32>
    %cst_48 = arith.constant 1.200000e+01 : f32
    %162 = vector.broadcast %cst_48 : f32 to vector<64x1xf32>
    %163 = arith.divf %161, %162 : vector<64x1xf32>
    %164 = vector.broadcast %163 : vector<64x1xf32> to vector<64x12xf32>
    %165 = arith.subf %157, %164 : vector<64x12xf32>
    %166 = arith.mulf %165, %165 : vector<64x12xf32>
    %cst_49 = arith.constant dense<0.000000e+00> : vector<64xf32>
    %167 = vector.multi_reduction <add>, %166, %cst_49 [1] : vector<64x12xf32> to vector<64xf32>
    %168 = vector.shape_cast %167 : vector<64xf32> to vector<64x1xf32>
    %cst_50 = arith.constant 1.200000e+01 : f32
    %169 = vector.broadcast %cst_50 : f32 to vector<64x1xf32>
    %170 = arith.divf %168, %169 : vector<64x1xf32>
    %171 = vector.broadcast %163 : vector<64x1xf32> to vector<64x12xf32>
    %172 = arith.subf %157, %171 : vector<64x12xf32>
    %cst_51 = arith.constant 9.99999974E-6 : f32
    %173 = vector.broadcast %cst_51 : f32 to vector<64x1xf32>
    %174 = arith.addf %170, %173 : vector<64x1xf32>
    %175 = math.rsqrt %174 : vector<64x1xf32>
    %176 = vector.broadcast %175 : vector<64x1xf32> to vector<64x12xf32>
    %177 = arith.mulf %172, %176 : vector<64x12xf32>
    %178 = vector.broadcast %158 : vector<1x12xf32> to vector<64x12xf32>
    %179 = arith.mulf %177, %178 : vector<64x12xf32>
    %180 = vector.broadcast %159 : vector<1x12xf32> to vector<64x12xf32>
    %181 = arith.addf %179, %180 : vector<64x12xf32>
    %182 = vector.shape_cast %181 : vector<64x12xf32> to vector<8x8x12xf32>
    %c0_52 = arith.constant 0 : index
    %c0_53 = arith.constant 0 : index
    %c0_54 = arith.constant 0 : index
    %183 = vector.load %arg7[%c0_52, %c0_53, %c0_54] : memref<8x8x12xf32, #tpu.memory_space<vmem>>, vector<8x8x12xf32>
    tpu.vector_store %arg7[%c0_52, %c0_53, %c0_54], %182 {strides = array<i32>} : memref<8x8x12xf32, #tpu.memory_space<vmem>>, vector<8x8x12xf32>,
    return
  }
  func.func @transform_0(%arg0: i32) -> (i32, i32, i32) {
    %c0_i32 = arith.constant 0 : i32
    %c0_i32_0 = arith.constant 0 : i32
    %c0_i32_1 = arith.constant 0 : i32
    return %arg0, %c0_i32, %c0_i32_0 : i32, i32, i32
  }
  func.func @transform_1(%arg0: i32) -> (i32, i32) {
    %c0_i32 = arith.constant 0 : i32
    %c0_i32_0 = arith.constant 0 : i32
    %c0_i32_1 = arith.constant 0 : i32
    return %c0_i32, %c0_i32_0 : i32, i32
  }
  func.func @transform_2(%arg0: i32) -> (i32, i32) {
    %c0_i32 = arith.constant 0 : i32
    %c0_i32_0 = arith.constant 0 : i32
    %c0_i32_1 = arith.constant 0 : i32
    return %c0_i32, %c0_i32_0 : i32, i32
  }
  func.func @transform_3(%arg0: i32) -> (i32, i32) {
    %c0_i32 = arith.constant 0 : i32
    %c0_i32_0 = arith.constant 0 : i32
    %c0_i32_1 = arith.constant 0 : i32
    return %c0_i32, %c0_i32_0 : i32, i32
  }
  func.func @transform_4(%arg0: i32) -> (i32, i32) {
    %c0_i32 = arith.constant 0 : i32
    %c0_i32_0 = arith.constant 0 : i32
    %c0_i32_1 = arith.constant 0 : i32
    return %c0_i32, %c0_i32_0 : i32, i32
  }
  func.func @transform_5(%arg0: i32) -> (i32, i32) {
    %c0_i32 = arith.constant 0 : i32
    %c0_i32_0 = arith.constant 0 : i32
    %c0_i32_1 = arith.constant 0 : i32
    return %c0_i32, %c0_i32_0 : i32, i32
  }
  func.func @transform_6(%arg0: i32) -> (i32, i32, i32) {
    %c0_i32 = arith.constant 0 : i32
    %c0_i32_0 = arith.constant 0 : i32
    %c0_i32_1 = arith.constant 0 : i32
    return %arg0, %c0_i32, %c0_i32_0 : i32, i32, i32
  }
}

</mosaic_0001>

<llo_original>
// kernel: tpu_custom_call.1
$region0: #{tpu_custom_call.1}
  #allocation0 [shape = 'u32[]', space=smem, size = 0x4, offset = 0x4, fixed_abs, tag = 'smem constant byte address 0x4 - core index']
  #allocation1 [shape = 'u32[144,128]{1,0:T(1,128)}', space=vmem, size = 0x12000, scoped, tag = 'internal scratch']
  %s0 = inlined_call_operand.vmem [shape: f32[32,8,12], index: 0, kind: input, shape index: {}]
  %s1 = inlined_call_operand.vmem [shape: bf16[12,36], index: 1, kind: input, shape index: {}]
  %s2 = inlined_call_operand.vmem [shape: bf16[12,12], index: 2, kind: input, shape index: {}]
  %s3 = inlined_call_operand.vmem [shape: bf16[12,24], index: 3, kind: input, shape index: {}]
  %s4 = inlined_call_operand.vmem [shape: bf16[24,12], index: 4, kind: input, shape index: {}]
  %s5 = inlined_call_operand.vmem [shape: f32[10,24], index: 5, kind: input, shape index: {}]
  %s6 = inlined_call_operand.vmem [shape: f32[32,8,12], index: 6, kind: output, shape index: {}]
  %s7 = sld [smem:[#allocation0]]
  $region57: #{tpu_custom_call.1} parent=0
    _
  %s9 = ssub.s32 1, %s7
  %s10 = scalar_select 0, %s9, %s7
  loop: start=0, step=1, limit=6
  $region2: #{tpu_custom_call.1} parent=0 // loop_pre_header
    _
  $region3: #{tpu_custom_call.1} parent=0 // loop_header
    %s12 = sphi 0, %s16
    %p13 = scmp.ge.s32.totalorder %s12, 6
    %s22 = sphi 0, %s24
    %s25 = sphi 0, %s22
    %s26 = sphi 0, %s25
    %s42 = sphi 0, %s26
    %s46 = sphi 0, %s46
    %s48 = sphi 0, %s46
    %s49 = sphi 0, %s48
    %s63 = sphi 0, %s49
    %s67 = sphi 0, %s67
    %s69 = sphi 0, %s67
    %s70 = sphi 0, %s69
    %s84 = sphi 0, %s70
    %s88 = sphi 0, %s88
    %s90 = sphi 0, %s88
    %s91 = sphi 0, %s90
    %s105 = sphi 0, %s91
    %s109 = sphi 0, %s109
    %s111 = sphi 0, %s109
    %s112 = sphi 0, %s111
    %s126 = sphi 0, %s112
    %s130 = sphi 0, %s130
    %s132 = sphi 0, %s130
    %s133 = sphi 0, %s132
    %s147 = sphi 0, %s133
    %s153 = sphi 0, %s155
    %s156 = sphi 0, %s153
    %s157 = sphi 0, %s156
    %s173 = sphi 0, %s157
  $region4: #{tpu_custom_call.1} parent=0 // loop_header_branch
    %15 = sbr.rel (%p13) target = $region8
  $region5: #{tpu_custom_call.1} parent=0 // loop_body
    %s17 = ssub.s32 %s12, 1
    %s18 = ssub.s32 %s12, 2
    %s19 = sadd.s32 %s12, 1
    %s20 = ssub.s32 %s12, %s19
    %p21 = scmp.eq.s32.totalorder %s20, 0
    %s23 = sadd.s32 %s22, 1
    %s24 = scalar_select %p21, %s22, %s23
    %p27 = pneg %p21
    %p28 = scmp.eq.s32.totalorder %s12, 3
    %p29 = por %p27, %p28
    %p30 = scmp.ne.s32.totalorder %s22, %s25
    %p31 = scmp.eq.s32.totalorder %s12, 0
    %p32 = por %p30, %p31
    %p33 = scmp.ne.s32.totalorder %s22, %s25
    %p34 = scmp.eq.s32.totalorder %s17, 3
    %p35 = por %p33, %p34
    %p36 = scmp.ne.s32.totalorder %s25, %s26
    %p37 = scmp.eq.s32.totalorder %s17, 0
    %p38 = por %p36, %p37
    %p39 = scmp.ne.s32.totalorder %s25, %s26
    %p40 = scmp.eq.s32.totalorder %s18, 3
    %p41 = por %p39, %p40
    %p43 = scmp.ne.s32.totalorder %s26, %s42
    %p44 = scmp.eq.s32.totalorder %s18, 0
    %p45 = por %p43, %p44
    %s47 = sadd.s32 %s46, 1
    %p50 = scmp.eq.s32.totalorder %s12, 3
    %p51 = scmp.ne.s32.totalorder %s46, %s48
    %p52 = scmp.eq.s32.totalorder %s12, 0
    %p53 = por %p51, %p52
    %p54 = scmp.ne.s32.totalorder %s46, %s48
    %p55 = scmp.eq.s32.totalorder %s17, 3
    %p56 = por %p54, %p55
    %p57 = scmp.ne.s32.totalorder %s48, %s49
    %p58 = scmp.eq.s32.totalorder %s17, 0
    %p59 = por %p57, %p58
    %p60 = scmp.ne.s32.totalorder %s48, %s49
    %p61 = scmp.eq.s32.totalorder %s18, 3
    %p62 = por %p60, %p61
    %p64 = scmp.ne.s32.totalorder %s49, %s63
    %p65 = scmp.eq.s32.totalorder %s18, 0
    %p66 = por %p64, %p65
    %s68 = sadd.s32 %s67, 1
    %p71 = scmp.eq.s32.totalorder %s12, 3
    %p72 = scmp.ne.s32.totalorder %s67, %s69
    %p73 = scmp.eq.s32.totalorder %s12, 0
    %p74 = por %p72, %p73
    %p75 = scmp.ne.s32.totalorder %s67, %s69
    %p76 = scmp.eq.s32.totalorder %s17, 3
    %p77 = por %p75, %p76
    %p78 = scmp.ne.s32.totalorder %s69, %s70
    %p79 = scmp.eq.s32.totalorder %s17, 0
    %p80 = por %p78, %p79
    %p81 = scmp.ne.s32.totalorder %s69, %s70
    %p82 = scmp.eq.s32.totalorder %s18, 3
    %p83 = por %p81, %p82
    %p85 = scmp.ne.s32.totalorder %s70, %s84
    %p86 = scmp.eq.s32.totalorder %s18, 0
    %p87 = por %p85, %p86
    %s89 = sadd.s32 %s88, 1
    %p92 = scmp.eq.s32.totalorder %s12, 3
    %p93 = scmp.ne.s32.totalorder %s88, %s90
    %p94 = scmp.eq.s32.totalorder %s12, 0
    %p95 = por %p93, %p94
    %p96 = scmp.ne.s32.totalorder %s88, %s90
    %p97 = scmp.eq.s32.totalorder %s17, 3
    %p98 = por %p96, %p97
    %p99 = scmp.ne.s32.totalorder %s90, %s91
    %p100 = scmp.eq.s32.totalorder %s17, 0
    %p101 = por %p99, %p100
    %p102 = scmp.ne.s32.totalorder %s90, %s91
    %p103 = scmp.eq.s32.totalorder %s18, 3
    %p104 = por %p102, %p103
    %p106 = scmp.ne.s32.totalorder %s91, %s105
    %p107 = scmp.eq.s32.totalorder %s18, 0
    %p108 = por %p106, %p107
    %s110 = sadd.s32 %s109, 1
    %p113 = scmp.eq.s32.totalorder %s12, 3
    %p114 = scmp.ne.s32.totalorder %s109, %s111
    %p115 = scmp.eq.s32.totalorder %s12, 0
    %p116 = por %p114, %p115
    %p117 = scmp.ne.s32.totalorder %s109, %s111
    %p118 = scmp.eq.s32.totalorder %s17, 3
    %p119 = por %p117, %p118
    %p120 = scmp.ne.s32.totalorder %s111, %s112
    %p121 = scmp.eq.s32.totalorder %s17, 0
    %p122 = por %p120, %p121
    %p123 = scmp.ne.s32.totalorder %s111, %s112
    %p124 = scmp.eq.s32.totalorder %s18, 3
    %p125 = por %p123, %p124
    %p127 = scmp.ne.s32.totalorder %s112, %s126
    %p128 = scmp.eq.s32.totalorder %s18, 0
    %p129 = por %p127, %p128
    %s131 = sadd.s32 %s130, 1
    %p134 = scmp.eq.s32.totalorder %s12, 3
    %p135 = scmp.ne.s32.totalorder %s130, %s132
    %p136 = scmp.eq.s32.totalorder %s12, 0
    %p137 = por %p135, %p136
    %p138 = scmp.ne.s32.totalorder %s130, %s132
    %p139 = scmp.eq.s32.totalorder %s17, 3
    %p140 = por %p138, %p139
    %p141 = scmp.ne.s32.totalorder %s132, %s133
    %p142 = scmp.eq.s32.totalorder %s17, 0
    %p143 = por %p141, %p142
    %p144 = scmp.ne.s32.totalorder %s132, %s133
    %p145 = scmp.eq.s32.totalorder %s18, 3
    %p146 = por %p144, %p145
    %p148 = scmp.ne.s32.totalorder %s133, %s147
    %p149 = scmp.eq.s32.totalorder %s18, 0
    %p150 = por %p148, %p149
    %s151 = ssub.s32 %s12, %s19
    %p152 = scmp.eq.s32.totalorder %s151, 0
    %s154 = sadd.s32 %s153, 1
    %s155 = scalar_select %p152, %s153, %s154
    %p158 = pneg %p152
    %p159 = scmp.eq.s32.totalorder %s12, 3
    %p160 = por %p158, %p159
    %p161 = scmp.ne.s32.totalorder %s153, %s156
    %p162 = scmp.eq.s32.totalorder %s12, 0
    %p163 = por %p161, %p162
    %p164 = scmp.ne.s32.totalorder %s153, %s156
    %p165 = scmp.eq.s32.totalorder %s17, 3
    %p166 = por %p164, %p165
    %p167 = scmp.ne.s32.totalorder %s156, %s157
    %p168 = scmp.eq.s32.totalorder %s17, 0
    %p169 = por %p167, %p168
    %p170 = scmp.ne.s32.totalorder %s156, %s157
    %p171 = scmp.eq.s32.totalorder %s18, 3
    %p172 = por %p170, %p171
    %p174 = scmp.ne.s32.totalorder %s157, %s173
    %p175 = scmp.eq.s32.totalorder %s18, 0
    %p176 = por %p174, %p175
    %p177 = scmp.le.s32.totalorder 1, %s12
    %p178 = scmp.lt.s32.totalorder %s12, 5
    %p179 = pnand %p177, %p178
    %p180 = pneg %p179
    // Predicated region
    $region9: #{tpu_custom_call.1} parent=5 // pred_check
      _
    $region10: #{tpu_custom_call.1} parent=5 // pred_check_branch
      %182 = sbr.rel (%p179) target = $region12
    $region11: #{tpu_custom_call.1} parent=5 // pred_region
      %s183 = ssub.s32 %s12, 1
      // Predicated region
      $region13: #{tpu_custom_call.1} parent=11 // pred_check
        %p184 = pneg %p59
      $region14: #{tpu_custom_call.1} parent=11 // pred_check_branch
        %186 = sbr.rel (%p184) target = $region16
      $region15: #{tpu_custom_call.1} parent=11 // pred_region
        _
      $region16: #{tpu_custom_call.1} parent=11 // pred_fallthru
        _
      // Predicated region
      $region17: #{tpu_custom_call.1} parent=11 // pred_check
        %p187 = pneg %p80
      $region18: #{tpu_custom_call.1} parent=11 // pred_check_branch
        %189 = sbr.rel (%p187) target = $region20
      $region19: #{tpu_custom_call.1} parent=11 // pred_region
        _
      $region20: #{tpu_custom_call.1} parent=11 // pred_fallthru
        _
      // Predicated region
      $region21: #{tpu_custom_call.1} parent=11 // pred_check
        %p190 = pneg %p101
      $region22: #{tpu_custom_call.1} parent=11 // pred_check_branch
        %192 = sbr.rel (%p190) target = $region24
      $region23: #{tpu_custom_call.1} parent=11 // pred_region
        _
      $region24: #{tpu_custom_call.1} parent=11 // pred_fallthru
        _
      // Predicated region
      $region25: #{tpu_custom_call.1} parent=11 // pred_check
        %p193 = pneg %p122
      $region26: #{tpu_custom_call.1} parent=11 // pred_check_branch
        %195 = sbr.rel (%p193) target = $region28
      $region27: #{tpu_custom_call.1} parent=11 // pred_region
        _
      $region28: #{tpu_custom_call.1} parent=11 // pred_fallthru
        _
      // Predicated region
      $region29: #{tpu_custom_call.1} parent=11 // pred_check
        %p196 = pneg %p143
      $region30: #{tpu_custom_call.1} parent=11 // pred_check_branch
        %198 = sbr.rel (%p196) target = $region32
      $region31: #{tpu_custom_call.1} parent=11 // pred_region
        _
      $region32: #{tpu_custom_call.1} parent=11 // pred_fallthru
        _
    $region12: #{tpu_custom_call.1} parent=5 // pred_fallthru
      _
    %p199 = scmp.lt.s32.totalorder %s12, 4
    // Predicated region
    $region33: #{tpu_custom_call.1} parent=5 // pred_check
      %p200 = pneg %p199
    $region34: #{tpu_custom_call.1} parent=5 // pred_check_branch
      %202 = sbr.rel (%p200) target = $region36
    $region35: #{tpu_custom_call.1} parent=5 // pred_region
      // Predicated region
      $region37: #{tpu_custom_call.1} parent=35 // pred_check
        %p203 = pneg %p32
      $region38: #{tpu_custom_call.1} parent=35 // pred_check_branch
        %205 = sbr.rel (%p203) target = $region40
      $region39: #{tpu_custom_call.1} parent=35 // pred_region
        %s206 = smul.u32 8, %s12
        %p207 = scmp.lt.s32.totalorder %s206, 31
        %s208 = scalar_select %p207, %s206, 31
        %s209 = smul.addr %s208, 8
        %s210 = scalar_lea.vmem %s0, %s209
        %s211 = smul.u32 8, %s12
      $region40: #{tpu_custom_call.1} parent=35 // pred_fallthru
        _
    $region36: #{tpu_custom_call.1} parent=5 // pred_fallthru
      _
    %p212 = scmp.le.s32.totalorder 1, %s12
    %p213 = scmp.lt.s32.totalorder %s12, 5
    %p214 = pnand %p212, %p213
    %p215 = pneg %p214
    // Predicated region
    $region41: #{tpu_custom_call.1} parent=5 // pred_check
      _
    $region42: #{tpu_custom_call.1} parent=5 // pred_check_branch
      %217 = sbr.rel (%p214) target = $region44
    $region43: #{tpu_custom_call.1} parent=5 // pred_region
      %s218 = ssub.s32 %s12, 1
      %s219 = smul.u32 8, %s17
      %p220 = scmp.lt.s32.totalorder %s219, 31
      %s221 = scalar_select %p220, %s219, 31
      %s222 = smul.addr %s221, 8
      %s223 = scalar_lea.vmem %s0, %s222
      %p224 = pneg %p38
      %p225 = pneg %p35
      %p226 = pneg %p59
      %p227 = pneg %p56
      %p228 = pneg %p80
      %p229 = pneg %p77
      %p230 = pneg %p101
      %p231 = pneg %p98
      %p232 = pneg %p122
      %p233 = pneg %p119
      %p234 = pneg %p143
      %p235 = pneg %p140
      %p236 = pneg %p169
      %p237 = pneg %p166
      %s238 = smul.u32 8, %s17
      %p239 = scmp.lt.s32.totalorder %s238, 31
      %s240 = scalar_select %p239, %s238, 31
      %s241 = smul.addr %s240, 8
      %s242 = scalar_lea.vmem %s6, %s241
      %s243 = smul.u32 8, %s17
      %p244 = scmp.lt.s32.totalorder %s243, 31
      %s245 = scalar_select %p244, %s243, 31
      %s246 = smul.addr %s245, 8
      %s247 = scalar_lea.vmem %s0, %s246
      %s248 = smul.u32 8, %s17
      %s249 = smul.u32 8, %s17
      %p250 = scmp.lt.s32.totalorder %s249, 31
      %s251 = scalar_select %p250, %s249, 31
      %s252 = smul.addr %s251, 8
      %s253 = scalar_lea.vmem %s6, %s252
      %s254 = smul.u32 8, %s17
      %v256 = vld [vmem:[%s247] sm:$0xff]
      %v257 = vld [vmem:[%s247 + $0x8] sm:$0xff]
      %v258 = vld [vmem:[%s247 + $0x10] sm:$0xff]
      %v259 = vld [vmem:[%s247 + $0x18] sm:$0xff]
      %v260 = vld [vmem:[%s247 + $0x20] sm:$0xff]
      %v261 = vld [vmem:[%s247 + $0x28] sm:$0xff]
      %v262 = vld [vmem:[%s247 + $0x30] sm:$0xff]
      %v263 = vld [vmem:[%s247 + $0x38] sm:$0xff]
      %v264 = vpack.c.bf16 %v257, %v256
      %v265 = vpack.c.bf16 %v259, %v258
      %v266 = vpack.c.bf16 %v261, %v260
      %v267 = vpack.c.bf16 %v263, %v262
      %v268 = vld [vmem:[%s5] sm:$0xff]
      %v269 = vld [vmem:[%s5 + $0x8] sm:$0x3]
      %v270 = vld [vmem:[%s1] sm:$0xf]
      %v271 = vld [vmem:[%s1 + $0x4] sm:$0x3]
      %v274 = vunpack.c.l.b16 %v270
      %v275 = vunpack.c.l.b16 %v271
      %v276 = vpack.c.b16 %v275, %v274
      %vm277 = vcmask 97280
      %v279 = vsel %vm277, %v264, 0
      %v282 = vsel %vm277, %v265, 0
      %v285 = vsel %vm277, %v266, 0
      %v288 = vsel %vm277, %v267, 0
      %vm290 = vcmask 1045504
      %v292 = vsel %vm290, %v276, 0
      %294 = vmatprep.subr.bf16.mxu0 0
      %295 = vmatpush1.bf16.msra.mxu0 %v292
      %296 = vmatprep.subr.bf16.mxu0 0
      %297 = vmatpush1.bf16.msra.mxu0 0
      %298 = vmatprep.subr.bf16.mxu0 0
      %299 = vmatpush1.bf16.msra.mxu0 0
      %300 = vmatprep.subr.bf16.mxu0 0
      %301 = vmatpush1.bf16.msra.mxu0 0
      %302 = vmatprep.subr.bf16.mxu0 0
      %303 = vmatpush1.bf16.msra.mxu0 0
      %304 = vmatprep.subr.bf16.mxu0 0
      %305 = vmatpush1.bf16.msra.mxu0 0
      %306 = vmatprep.subr.bf16.mxu0 0
      %307 = vmatpush1.bf16.msra.mxu0 0
      %308 = vmatprep.subr.bf16.mxu0 0
      %309 = vmatpush1.bf16.msra.mxu0 0
      %310 = vmatprep.subr.bf16.mxu0 0
      %311 = vmatpush1.bf16.msra.mxu0 0
      %312 = vmatprep.subr.bf16.mxu0 0
      %313 = vmatpush1.bf16.msra.mxu0 0
      %314 = vmatprep.subr.bf16.mxu0 0
      %315 = vmatpush1.bf16.msra.mxu0 0
      %316 = vmatprep.subr.bf16.mxu0 0
      %317 = vmatpush1.bf16.msra.mxu0 0
      %318 = vmatprep.subr.bf16.mxu0 0
      %319 = vmatpush1.bf16.msra.mxu0 0
      %320 = vmatprep.subr.bf16.mxu0 0
      %321 = vmatpush1.bf16.msra.mxu0 0
      %322 = vmatprep.subr.bf16.mxu0 0
      %323 = vmatpush1.bf16.msra.mxu0 0
      %324 = vmatprep.subr.bf16.mxu0 0
      %325 = vmatpush1.bf16.msra.mxu0 0
      %326 = vmatprep.mubr.bf16.mxu0 0
      %327 = vmatmul.mubr.bf16.gmra.mrb[0].mxu0 %v279
      %v328 = vpop.f32.mrb[0].mxu0
      %v329 = vadd.f32 0.0, %v328
      %v330 = vpop.f32.mrb[0].mxu0
      %v331 = vpop.f32.mrb[0].mxu0
      %v332 = vadd.f32 0.0, %v331
      %v333 = vpop.f32.mrb[0].mxu0
      %334 = vmatprep.mubr.bf16.mxu0 0
      %335 = vmatmul.mubr.bf16.gmra.mrb[0].mxu0 %v282
      %v336 = vpop.f32.mrb[0].mxu0
      %v337 = vadd.f32 0.0, %v336
      %v338 = vpop.f32.mrb[0].mxu0
      %v339 = vpop.f32.mrb[0].mxu0
      %v340 = vadd.f32 0.0, %v339
      %v341 = vpop.f32.mrb[0].mxu0
      %342 = vmatprep.mubr.bf16.mxu0 0
      %343 = vmatmul.mubr.bf16.gmra.mrb[0].mxu0 %v285
      %v344 = vpop.f32.mrb[0].mxu0
      %v345 = vadd.f32 0.0, %v344
      %v346 = vpop.f32.mrb[0].mxu0
      %v347 = vpop.f32.mrb[0].mxu0
      %v348 = vadd.f32 0.0, %v347
      %v349 = vpop.f32.mrb[0].mxu0
      %350 = vmatprep.mubr.bf16.mxu0 0
      %351 = vmatmul.mubr.bf16.gmra.mrb[0].mxu0 %v288
      %v352 = vpop.f32.mrb[0].mxu0
      %v353 = vadd.f32 0.0, %v352
      %v354 = vpop.f32.mrb[0].mxu0
      %v355 = vpop.f32.mrb[0].mxu0
      %v356 = vadd.f32 0.0, %v355
      %v357 = vpop.f32.mrb[0].mxu0
      %358 = vdwg.mxu0
      %v359 = vlaneseq
      %v360 = vshrl.u32 %v359, 7
      %v361 = vsub.s32 0, %v360
      %v362 = vrot.slane %v268, %v361
      %v363 = vadd.f32 %v329, %v362
      %v364 = vadd.f32 %v332, %v362
      %v365 = vadd.f32 %v337, %v362
      %v366 = vadd.f32 %v340, %v362
      %v367 = vadd.f32 %v345, %v362
      %v368 = vadd.f32 %v348, %v362
      %v369 = vadd.f32 %v353, %v362
      %v370 = vadd.f32 %v356, %v362
      %v371 = vlaneseq
      %v372 = vshrl.u32 %v371, 7
      %v373 = vsub.s32 1, %v372
      %v374 = vrot.slane %v268, %v373
      %376 = vrot.lane.b32.xlu0 %v374, 12
      %v377 = vpop.permute.xlu0 %376
      %v379 = vadd.f32 %v329, %v377
      %v380 = vadd.f32 %v332, %v377
      %v381 = vadd.f32 %v337, %v377
      %v382 = vadd.f32 %v340, %v377
      %v383 = vadd.f32 %v345, %v377
      %v384 = vadd.f32 %v348, %v377
      %v385 = vadd.f32 %v353, %v377
      %v386 = vadd.f32 %v356, %v377
      %v387 = vlaneseq
      %v388 = vshrl.u32 %v387, 7
      %v389 = vsub.s32 2, %v388
      %v390 = vrot.slane %v268, %v389
      %392 = vrot.lane.b32.xlu0 %v390, 24
      %v393 = vpop.permute.xlu0 %392
      %v395 = vadd.f32 %v329, %v393
      %v396 = vadd.f32 %v332, %v393
      %v397 = vadd.f32 %v337, %v393
      %v398 = vadd.f32 %v340, %v393
      %v399 = vadd.f32 %v345, %v393
      %v400 = vadd.f32 %v348, %v393
      %v401 = vadd.f32 %v353, %v393
      %v402 = vadd.f32 %v356, %v393
      %v403 = vpack.c.bf16 %v364, %v363
      %v404 = vpack.c.bf16 %v366, %v365
      %v405 = vpack.c.bf16 %v368, %v367
      %v406 = vpack.c.bf16 %v370, %v369
      %v411 = vunpack.c.l.b16 %v403
      %v412 = vunpack.c.h.b16 %v403
      %v413 = vunpack.c.l.b16 %v404
      %v414 = vunpack.c.h.b16 %v404
      %v415 = vunpack.c.l.b16 %v405
      %v416 = vunpack.c.h.b16 %v405
      %v417 = vunpack.c.l.b16 %v406
      %v418 = vunpack.c.h.b16 %v406
      %v419 = vpack.c.b16 %v411, %v411
      %v420 = vpack.c.b16 %v412, %v412
      %v421 = vpack.c.b16 %v413, %v413
      %v422 = vpack.c.b16 %v414, %v414
      %v423 = vpack.c.b16 %v415, %v415
      %v424 = vpack.c.b16 %v416, %v416
      %v425 = vpack.c.b16 %v417, %v417
      %v426 = vpack.c.b16 %v418, %v418
      %v427 = vpack.c.bf16 %v380, %v379
      %v428 = vpack.c.bf16 %v382, %v381
      %v429 = vpack.c.bf16 %v384, %v383
      %v430 = vpack.c.bf16 %v386, %v385
      %v435 = vunpack.c.l.b16 %v427
      %v436 = vunpack.c.h.b16 %v427
      %v437 = vunpack.c.l.b16 %v428
      %v438 = vunpack.c.h.b16 %v428
      %v439 = vunpack.c.l.b16 %v429
      %v440 = vunpack.c.h.b16 %v429
      %v441 = vunpack.c.l.b16 %v430
      %v442 = vunpack.c.h.b16 %v430
      %v443 = vpack.c.bf16 %v396, %v395
      %v444 = vpack.c.bf16 %v398, %v397
      %v445 = vpack.c.bf16 %v400, %v399
      %v446 = vpack.c.bf16 %v402, %v401
      %v451 = vunpack.c.l.b16 %v443
      %v452 = vunpack.c.h.b16 %v443
      %v453 = vunpack.c.l.b16 %v444
      %v454 = vunpack.c.h.b16 %v444
      %v455 = vunpack.c.l.b16 %v445
      %v456 = vunpack.c.h.b16 %v445
      %v457 = vunpack.c.l.b16 %v446
      %v458 = vunpack.c.h.b16 %v446
      %v459 = vpack.c.b16 %v435, %v435
      %460 = vrot.lane.b32.xlu0 %v459, 116
      %v461 = vpop.permute.xlu0 %460
      %vm462 = vcmask 31744
      %v464 = vsel %vm462, %v419, 0
      %v467 = vsel %vm462, %v461, 0
      %469 = vmatprep.subr.bf16.mxu0 0
      %470 = vmatpush1.bf16.xpose.msra.mxu0 %v467
      %471 = vmatprep.subr.bf16.mxu0 0
      %472 = vmatpush1.bf16.xpose.msra.mxu0 0
      %473 = vmatprep.subr.bf16.mxu0 0
      %474 = vmatpush1.bf16.xpose.msra.mxu0 0
      %475 = vmatprep.subr.bf16.mxu0 0
      %476 = vmatpush1.bf16.xpose.msra.mxu0 0
      %477 = vmatprep.subr.bf16.mxu0 0
      %478 = vmatpush1.bf16.xpose.msra.mxu0 0
      %479 = vmatprep.subr.bf16.mxu0 0
      %480 = vmatpush1.bf16.xpose.msra.mxu0 0
      %481 = vmatprep.subr.bf16.mxu0 0
      %482 = vmatpush1.bf16.xpose.msra.mxu0 0
      %483 = vmatprep.subr.bf16.mxu0 0
      %484 = vmatpush1.bf16.xpose.msra.mxu0 0
      %485 = vmatprep.subr.bf16.mxu0 0
      %486 = vmatpush1.bf16.xpose.msra.mxu0 0
      %487 = vmatprep.subr.bf16.mxu0 0
      %488 = vmatpush1.bf16.xpose.msra.mxu0 0
      %489 = vmatprep.subr.bf16.mxu0 0
      %490 = vmatpush1.bf16.xpose.msra.mxu0 0
      %491 = vmatprep.subr.bf16.mxu0 0
      %492 = vmatpush1.bf16.xpose.msra.mxu0 0
      %493 = vmatprep.subr.bf16.mxu0 0
      %494 = vmatpush1.bf16.xpose.msra.mxu0 0
      %495 = vmatprep.subr.bf16.mxu0 0
      %496 = vmatpush1.bf16.xpose.msra.mxu0 0
      %497 = vmatprep.subr.bf16.mxu0 0
      %498 = vmatpush1.bf16.xpose.msra.mxu0 0
      %499 = vmatprep.subr.bf16.mxu0 0
      %500 = vmatpush1.bf16.xpose.msra.mxu0 0
      %501 = vmatprep.mubr.bf16.mxu0 0
      %502 = vmatmul.mubr.bf16.gmra.mrb[0].mxu0 %v464
      %v503 = vpop.f32.mrb[0].mxu0
      %v504 = vadd.f32 0.0, %v503
      %v505 = vpop.f32.mrb[0].mxu0
      %v506 = vpop.f32.mrb[0].mxu0
      %v507 = vpop.f32.mrb[0].mxu0
      %508 = vdwg.mxu0
      %v509 = vpack.c.b16 %v436, %v436
      %510 = vrot.lane.b32.xlu0 %v509, 116
      %v511 = vpop.permute.xlu0 %510
      %v513 = vsel %vm462, %v420, 0
      %v516 = vsel %vm462, %v511, 0
      %518 = vmatprep.subr.bf16.mxu0 0
      %519 = vmatpush1.bf16.xpose.msra.mxu0 %v516
      %520 = vmatprep.subr.bf16.mxu0 0
      %521 = vmatpush1.bf16.xpose.msra.mxu0 0
      %522 = vmatprep.subr.bf16.mxu0 0
      %523 = vmatpush1.bf16.xpose.msra.mxu0 0
      %524 = vmatprep.subr.bf16.mxu0 0
      %525 = vmatpush1.bf16.xpose.msra.mxu0 0
      %526 = vmatprep.subr.bf16.mxu0 0
      %527 = vmatpush1.bf16.xpose.msra.mxu0 0
      %528 = vmatprep.subr.bf16.mxu0 0
      %529 = vmatpush1.bf16.xpose.msra.mxu0 0
      %530 = vmatprep.subr.bf16.mxu0 0
      %531 = vmatpush1.bf16.xpose.msra.mxu0 0
      %532 = vmatprep.subr.bf16.mxu0 0
      %533 = vmatpush1.bf16.xpose.msra.mxu0 0
      %534 = vmatprep.subr.bf16.mxu0 0
      %535 = vmatpush1.bf16.xpose.msra.mxu0 0
      %536 = vmatprep.subr.bf16.mxu0 0
      %537 = vmatpush1.bf16.xpose.msra.mxu0 0
      %538 = vmatprep.subr.bf16.mxu0 0
      %539 = vmatpush1.bf16.xpose.msra.mxu0 0
      %540 = vmatprep.subr.bf16.mxu0 0
      %541 = vmatpush1.bf16.xpose.msra.mxu0 0
      %542 = vmatprep.subr.bf16.mxu0 0
      %543 = vmatpush1.bf16.xpose.msra.mxu0 0
      %544 = vmatprep.subr.bf16.mxu0 0
      %545 = vmatpush1.bf16.xpose.msra.mxu0 0
      %546 = vmatprep.subr.bf16.mxu0 0
      %547 = vmatpush1.bf16.xpose.msra.mxu0 0
      %548 = vmatprep.subr.bf16.mxu0 0
      %549 = vmatpush1.bf16.xpose.msra.mxu0 0
      %550 = vmatprep.mubr.bf16.mxu0 0
      %551 = vmatmul.mubr.bf16.gmra.mrb[0].mxu0 %v513
      %v552 = vpop.f32.mrb[0].mxu0
      %v553 = vadd.f32 0.0, %v552
      %v554 = vpop.f32.mrb[0].mxu0
      %v555 = vpop.f32.mrb[0].mxu0
      %v556 = vpop.f32.mrb[0].mxu0
      %557 = vdwg.mxu0
      %v558 = vpack.c.b16 %v437, %v437
      %559 = vrot.lane.b32.xlu0 %v558, 116
      %v560 = vpop.permute.xlu0 %559
      %v562 = vsel %vm462, %v421, 0
      %v565 = vsel %vm462, %v560, 0
      %567 = vmatprep.subr.bf16.mxu0 0
      %568 = vmatpush1.bf16.xpose.msra.mxu0 %v565
      %569 = vmatprep.subr.bf16.mxu0 0
      %570 = vmatpush1.bf16.xpose.msra.mxu0 0
      %571 = vmatprep.subr.bf16.mxu0 0
      %572 = vmatpush1.bf16.xpose.msra.mxu0 0
      %573 = vmatprep.subr.bf16.mxu0 0
      %574 = vmatpush1.bf16.xpose.msra.mxu0 0
      %575 = vmatprep.subr.bf16.mxu0 0
      %576 = vmatpush1.bf16.xpose.msra.mxu0 0
      %577 = vmatprep.subr.bf16.mxu0 0
      %578 = vmatpush1.bf16.xpose.msra.mxu0 0
      %579 = vmatprep.subr.bf16.mxu0 0
      %580 = vmatpush1.bf16.xpose.msra.mxu0 0
      %581 = vmatprep.subr.bf16.mxu0 0
      %582 = vmatpush1.bf16.xpose.msra.mxu0 0
      %583 = vmatprep.subr.bf16.mxu0 0
      %584 = vmatpush1.bf16.xpose.msra.mxu0 0
      %585 = vmatprep.subr.bf16.mxu0 0
      %586 = vmatpush1.bf16.xpose.msra.mxu0 0
      %587 = vmatprep.subr.bf16.mxu0 0
      %588 = vmatpush1.bf16.xpose.msra.mxu0 0
      %589 = vmatprep.subr.bf16.mxu0 0
      %590 = vmatpush1.bf16.xpose.msra.mxu0 0
      %591 = vmatprep.subr.bf16.mxu0 0
      %592 = vmatpush1.bf16.xpose.msra.mxu0 0
      %593 = vmatprep.subr.bf16.mxu0 0
      %594 = vmatpush1.bf16.xpose.msra.mxu0 0
      %595 = vmatprep.subr.bf16.mxu0 0
      %596 = vmatpush1.bf16.xpose.msra.mxu0 0
      %597 = vmatprep.subr.bf16.mxu0 0
      %598 = vmatpush1.bf16.xpose.msra.mxu0 0
      %599 = vmatprep.mubr.bf16.mxu0 0
      %600 = vmatmul.mubr.bf16.gmra.mrb[0].mxu0 %v562
      %v601 = vpop.f32.mrb[0].mxu0
      %v602 = vadd.f32 0.0, %v601
      %v603 = vpop.f32.mrb[0].mxu0
      %v604 = vpop.f32.mrb[0].mxu0
      %v605 = vpop.f32.mrb[0].mxu0
      %606 = vdwg.mxu0
      %v607 = vpack.c.b16 %v438, %v438
      %608 = vrot.lane.b32.xlu0 %v607, 116
      %v609 = vpop.permute.xlu0 %608
      %v611 = vsel %vm462, %v422, 0
      %v614 = vsel %vm462, %v609, 0
      %616 = vmatprep.subr.bf16.mxu0 0
      %617 = vmatpush1.bf16.xpose.msra.mxu0 %v614
      %618 = vmatprep.subr.bf16.mxu0 0
      %619 = vmatpush1.bf16.xpose.msra.mxu0 0
      %620 = vmatprep.subr.bf16.mxu0 0
      %621 = vmatpush1.bf16.xpose.msra.mxu0 0
      %622 = vmatprep.subr.bf16.mxu0 0
      %623 = vmatpush1.bf16.xpose.msra.mxu0 0
      %624 = vmatprep.subr.bf16.mxu0 0
      %625 = vmatpush1.bf16.xpose.msra.mxu0 0
      %626 = vmatprep.subr.bf16.mxu0 0
      %627 = vmatpush1.bf16.xpose.msra.mxu0 0
      %628 = vmatprep.subr.bf16.mxu0 0
      %629 = vmatpush1.bf16.xpose.msra.mxu0 0
      %630 = vmatprep.subr.bf16.mxu0 0
      %631 = vmatpush1.bf16.xpose.msra.mxu0 0
      %632 = vmatprep.subr.bf16.mxu0 0
      %633 = vmatpush1.bf16.xpose.msra.mxu0 0
      %634 = vmatprep.subr.bf16.mxu0 0
      %635 = vmatpush1.bf16.xpose.msra.mxu0 0
      %636 = vmatprep.subr.bf16.mxu0 0
      %637 = vmatpush1.bf16.xpose.msra.mxu0 0
      %638 = vmatprep.subr.bf16.mxu0 0
      %639 = vmatpush1.bf16.xpose.msra.mxu0 0
      %640 = vmatprep.subr.bf16.mxu0 0
      %641 = vmatpush1.bf16.xpose.msra.mxu0 0
      %642 = vmatprep.subr.bf16.mxu0 0
      %643 = vmatpush1.bf16.xpose.msra.mxu0 0
      %644 = vmatprep.subr.bf16.mxu0 0
      %645 = vmatpush1.bf16.xpose.msra.mxu0 0
      %646 = vmatprep.subr.bf16.mxu0 0
      %647 = vmatpush1.bf16.xpose.msra.mxu0 0
      %648 = vmatprep.mubr.bf16.mxu0 0
      %649 = vmatmul.mubr.bf16.gmra.mrb[0].mxu0 %v611
      %v650 = vpop.f32.mrb[0].mxu0
      %v651 = vadd.f32 0.0, %v650
      %v652 = vpop.f32.mrb[0].mxu0
      %v653 = vpop.f32.mrb[0].mxu0
      %v654 = vpop.f32.mrb[0].mxu0
      %655 = vdwg.mxu0
      %v656 = vpack.c.b16 %v439, %v439
      %657 = vrot.lane.b32.xlu0 %v656, 116
      %v658 = vpop.permute.xlu0 %657
      %v660 = vsel %vm462, %v423, 0
      %v663 = vsel %vm462, %v658, 0
      %665 = vmatprep.subr.bf16.mxu0 0
      %666 = vmatpush1.bf16.xpose.msra.mxu0 %v663
      %667 = vmatprep.subr.bf16.mxu0 0
      %668 = vmatpush1.bf16.xpose.msra.mxu0 0
      %669 = vmatprep.subr.bf16.mxu0 0
      %670 = vmatpush1.bf16.xpose.msra.mxu0 0
      %671 = vmatprep.subr.bf16.mxu0 0
      %672 = vmatpush1.bf16.xpose.msra.mxu0 0
      %673 = vmatprep.subr.bf16.mxu0 0
      %674 = vmatpush1.bf16.xpose.msra.mxu0 0
      %675 = vmatprep.subr.bf16.mxu0 0
      %676 = vmatpush1.bf16.xpose.msra.mxu0 0
      %677 = vmatprep.subr.bf16.mxu0 0
      %678 = vmatpush1.bf16.xpose.msra.mxu0 0
      %679 = vmatprep.subr.bf16.mxu0 0
      %680 = vmatpush1.bf16.xpose.msra.mxu0 0
      %681 = vmatprep.subr.bf16.mxu0 0
      %682 = vmatpush1.bf16.xpose.msra.mxu0 0
      %683 = vmatprep.subr.bf16.mxu0 0
      %684 = vmatpush1.bf16.xpose.msra.mxu0 0
      %685 = vmatprep.subr.bf16.mxu0 0
      %686 = vmatpush1.bf16.xpose.msra.mxu0 0
      %687 = vmatprep.subr.bf16.mxu0 0
      %688 = vmatpush1.bf16.xpose.msra.mxu0 0
      %689 = vmatprep.subr.bf16.mxu0 0
      %690 = vmatpush1.bf16.xpose.msra.mxu0 0
      %691 = vmatprep.subr.bf16.mxu0 0
      %692 = vmatpush1.bf16.xpose.msra.mxu0 0
      %693 = vmatprep.subr.bf16.mxu0 0
      %694 = vmatpush1.bf16.xpose.msra.mxu0 0
      %695 = vmatprep.subr.bf16.mxu0 0
      %696 = vmatpush1.bf16.xpose.msra.mxu0 0
      %697 = vmatprep.mubr.bf16.mxu0 0
      %698 = vmatmul.mubr.bf16.gmra.mrb[0].mxu0 %v660
      %v699 = vpop.f32.mrb[0].mxu0
      %v700 = vadd.f32 0.0, %v699
      %v701 = vpop.f32.mrb[0].mxu0
      %v702 = vpop.f32.mrb[0].mxu0
      %v703 = vpop.f32.mrb[0].mxu0
      %704 = vdwg.mxu0
      %v705 = vpack.c.b16 %v440, %v440
      %706 = vrot.lane.b32.xlu0 %v705, 116
      %v707 = vpop.permute.xlu0 %706
      %v709 = vsel %vm462, %v424, 0
      %v712 = vsel %vm462, %v707, 0
      %714 = vmatprep.subr.bf16.mxu0 0
      %715 = vmatpush1.bf16.xpose.msra.mxu0 %v712
      %716 = vmatprep.subr.bf16.mxu0 0
      %717 = vmatpush1.bf16.xpose.msra.mxu0 0
      %718 = vmatprep.subr.bf16.mxu0 0
      %719 = vmatpush1.bf16.xpose.msra.mxu0 0
      %720 = vmatprep.subr.bf16.mxu0 0
      %721 = vmatpush1.bf16.xpose.msra.mxu0 0
      %722 = vmatprep.subr.bf16.mxu0 0
      %723 = vmatpush1.bf16.xpose.msra.mxu0 0
      %724 = vmatprep.subr.bf16.mxu0 0
      %725 = vmatpush1.bf16.xpose.msra.mxu0 0
      %726 = vmatprep.subr.bf16.mxu0 0
      %727 = vmatpush1.bf16.xpose.msra.mxu0 0
      %728 = vmatprep.subr.bf16.mxu0 0
      %729 = vmatpush1.bf16.xpose.msra.mxu0 0
      %730 = vmatprep.subr.bf16.mxu0 0
      %731 = vmatpush1.bf16.xpose.msra.mxu0 0
      %732 = vmatprep.subr.bf16.mxu0 0
      %733 = vmatpush1.bf16.xpose.msra.mxu0 0
      %734 = vmatprep.subr.bf16.mxu0 0
      %735 = vmatpush1.bf16.xpose.msra.mxu0 0
      %736 = vmatprep.subr.bf16.mxu0 0
      %737 = vmatpush1.bf16.xpose.msra.mxu0 0
      %738 = vmatprep.subr.bf16.mxu0 0
      %739 = vmatpush1.bf16.xpose.msra.mxu0 0
      %740 = vmatprep.subr.bf16.mxu0 0
      %741 = vmatpush1.bf16.xpose.msra.mxu0 0
      %742 = vmatprep.subr.bf16.mxu0 0
      %743 = vmatpush1.bf16.xpose.msra.mxu0 0
      %744 = vmatprep.subr.bf16.mxu0 0
      %745 = vmatpush1.bf16.xpose.msra.mxu0 0
      %746 = vmatprep.mubr.bf16.mxu0 0
      %747 = vmatmul.mubr.bf16.gmra.mrb[0].mxu0 %v709
      %v748 = vpop.f32.mrb[0].mxu0
      %v749 = vadd.f32 0.0, %v748
      %v750 = vpop.f32.mrb[0].mxu0
      %v751 = vpop.f32.mrb[0].mxu0
      %v752 = vpop.f32.mrb[0].mxu0
      %753 = vdwg.mxu0
      %v754 = vpack.c.b16 %v441, %v441
      %755 = vrot.lane.b32.xlu0 %v754, 116
      %v756 = vpop.permute.xlu0 %755
      %v758 = vsel %vm462, %v425, 0
      %v761 = vsel %vm462, %v756, 0
      %763 = vmatprep.subr.bf16.mxu0 0
      %764 = vmatpush1.bf16.xpose.msra.mxu0 %v761
      %765 = vmatprep.subr.bf16.mxu0 0
      %766 = vmatpush1.bf16.xpose.msra.mxu0 0
      %767 = vmatprep.subr.bf16.mxu0 0
      %768 = vmatpush1.bf16.xpose.msra.mxu0 0
      %769 = vmatprep.subr.bf16.mxu0 0
      %770 = vmatpush1.bf16.xpose.msra.mxu0 0
      %771 = vmatprep.subr.bf16.mxu0 0
      %772 = vmatpush1.bf16.xpose.msra.mxu0 0
      %773 = vmatprep.subr.bf16.mxu0 0
      %774 = vmatpush1.bf16.xpose.msra.mxu0 0
      %775 = vmatprep.subr.bf16.mxu0 0
      %776 = vmatpush1.bf16.xpose.msra.mxu0 0
      %777 = vmatprep.subr.bf16.mxu0 0
      %778 = vmatpush1.bf16.xpose.msra.mxu0 0
      %779 = vmatprep.subr.bf16.mxu0 0
      %780 = vmatpush1.bf16.xpose.msra.mxu0 0
      %781 = vmatprep.subr.bf16.mxu0 0
      %782 = vmatpush1.bf16.xpose.msra.mxu0 0
      %783 = vmatprep.subr.bf16.mxu0 0
      %784 = vmatpush1.bf16.xpose.msra.mxu0 0
      %785 = vmatprep.subr.bf16.mxu0 0
      %786 = vmatpush1.bf16.xpose.msra.mxu0 0
      %787 = vmatprep.subr.bf16.mxu0 0
      %788 = vmatpush1.bf16.xpose.msra.mxu0 0
      %789 = vmatprep.subr.bf16.mxu0 0
      %790 = vmatpush1.bf16.xpose.msra.mxu0 0
      %791 = vmatprep.subr.bf16.mxu0 0
      %792 = vmatpush1.bf16.xpose.msra.mxu0 0
      %793 = vmatprep.subr.bf16.mxu0 0
      %794 = vmatpush1.bf16.xpose.msra.mxu0 0
      %795 = vmatprep.mubr.bf16.mxu0 0
      %796 = vmatmul.mubr.bf16.gmra.mrb[0].mxu0 %v758
      %v797 = vpop.f32.mrb[0].mxu0
      %v798 = vadd.f32 0.0, %v797
      %v799 = vpop.f32.mrb[0].mxu0
      %v800 = vpop.f32.mrb[0].mxu0
      %v801 = vpop.f32.mrb[0].mxu0
      %802 = vdwg.mxu0
      %v803 = vpack.c.b16 %v442, %v442
      %804 = vrot.lane.b32.xlu0 %v803, 116
      %v805 = vpop.permute.xlu0 %804
      %v807 = vsel %vm462, %v426, 0
      %v810 = vsel %vm462, %v805, 0
      %812 = vmatprep.subr.bf16.mxu0 0
      %813 = vmatpush1.bf16.xpose.msra.mxu0 %v810
      %814 = vmatprep.subr.bf16.mxu0 0
      %815 = vmatpush1.bf16.xpose.msra.mxu0 0
      %816 = vmatprep.subr.bf16.mxu0 0
      %817 = vmatpush1.bf16.xpose.msra.mxu0 0
      %818 = vmatprep.subr.bf16.mxu0 0
      %819 = vmatpush1.bf16.xpose.msra.mxu0 0
      %820 = vmatprep.subr.bf16.mxu0 0
      %821 = vmatpush1.bf16.xpose.msra.mxu0 0
      %822 = vmatprep.subr.bf16.mxu0 0
      %823 = vmatpush1.bf16.xpose.msra.mxu0 0
      %824 = vmatprep.subr.bf16.mxu0 0
      %825 = vmatpush1.bf16.xpose.msra.mxu0 0
      %826 = vmatprep.subr.bf16.mxu0 0
      %827 = vmatpush1.bf16.xpose.msra.mxu0 0
      %828 = vmatprep.subr.bf16.mxu0 0
      %829 = vmatpush1.bf16.xpose.msra.mxu0 0
      %830 = vmatprep.subr.bf16.mxu0 0
      %831 = vmatpush1.bf16.xpose.msra.mxu0 0
      %832 = vmatprep.subr.bf16.mxu0 0
      %833 = vmatpush1.bf16.xpose.msra.mxu0 0
      %834 = vmatprep.subr.bf16.mxu0 0
      %835 = vmatpush1.bf16.xpose.msra.mxu0 0
      %836 = vmatprep.subr.bf16.mxu0 0
      %837 = vmatpush1.bf16.xpose.msra.mxu0 0
      %838 = vmatprep.subr.bf16.mxu0 0
      %839 = vmatpush1.bf16.xpose.msra.mxu0 0
      %840 = vmatprep.subr.bf16.mxu0 0
      %841 = vmatpush1.bf16.xpose.msra.mxu0 0
      %842 = vmatprep.subr.bf16.mxu0 0
      %843 = vmatpush1.bf16.xpose.msra.mxu0 0
      %844 = vmatprep.mubr.bf16.mxu0 0
      %845 = vmatmul.mubr.bf16.gmra.mrb[0].mxu0 %v807
      %v846 = vpop.f32.mrb[0].mxu0
      %v847 = vadd.f32 0.0, %v846
      %v848 = vpop.f32.mrb[0].mxu0
      %v849 = vpop.f32.mrb[0].mxu0
      %v850 = vpop.f32.mrb[0].mxu0
      %851 = vdwg.mxu0
      %vm852 = vcmask 64512
      %v853 = vsel %vm852, %v504, -inf
      %854 = vmax.xlane.f32.xlu0 %v853
      %v855 = vpop.xlane.xlu0 %854
      %v856 = vsel %vm852, %v553, -inf
      %857 = vmax.xlane.f32.xlu0 %v856
      %v858 = vpop.xlane.xlu0 %857
      %v859 = vsel %vm852, %v602, -inf
      %860 = vmax.xlane.f32.xlu0 %v859
      %v861 = vpop.xlane.xlu0 %860
      %v862 = vsel %vm852, %v651, -inf
      %863 = vmax.xlane.f32.xlu0 %v862
      %v864 = vpop.xlane.xlu0 %863
      %v865 = vsel %vm852, %v700, -inf
      %866 = vmax.xlane.f32.xlu0 %v865
      %v867 = vpop.xlane.xlu0 %866
      %v868 = vsel %vm852, %v749, -inf
      %869 = vmax.xlane.f32.xlu0 %v868
      %v870 = vpop.xlane.xlu0 %869
      %v871 = vsel %vm852, %v798, -inf
      %872 = vmax.xlane.f32.xlu0 %v871
      %v873 = vpop.xlane.xlu0 %872
      %v874 = vsel %vm852, %v847, -inf
      %875 = vmax.xlane.f32.xlu0 %v874
      %v876 = vpop.xlane.xlu0 %875
      %v877 = vsub.f32 %v504, %v855
      %v878 = vsub.f32 %v553, %v858
      %v879 = vsub.f32 %v602, %v861
      %v880 = vsub.f32 %v651, %v864
      %v881 = vsub.f32 %v700, %v867
      %v882 = vsub.f32 %v749, %v870
      %v883 = vsub.f32 %v798, %v873
      %v884 = vsub.f32 %v847, %v876
      %v885 = vmul.f32 %v877, 1.442695
      %v886 = vpow.pop %v885
      %v887 = vmul.f32 %v878, 1.442695
      %v888 = vpow.pop %v887
      %v889 = vmul.f32 %v879, 1.442695
      %v890 = vpow.pop %v889
      %v891 = vmul.f32 %v880, 1.442695
      %v892 = vpow.pop %v891
      %v893 = vmul.f32 %v881, 1.442695
      %v894 = vpow.pop %v893
      %v895 = vmul.f32 %v882, 1.442695
      %v896 = vpow.pop %v895
      %v897 = vmul.f32 %v883, 1.442695
      %v898 = vpow.pop %v897
      %v899 = vmul.f32 %v884, 1.442695
      %v900 = vpow.pop %v899
      %v901 = vsel %vm852, %v886, 0.0
      %902 = vadd.xlane.f32.xlu0 %v901
      %v903 = vpop.xlane.xlu0 %902
      %v904 = vsel %vm852, %v888, 0.0
      %905 = vadd.xlane.f32.xlu0 %v904
      %v906 = vpop.xlane.xlu0 %905
      %v907 = vsel %vm852, %v890, 0.0
      %908 = vadd.xlane.f32.xlu0 %v907
      %v909 = vpop.xlane.xlu0 %908
      %v910 = vsel %vm852, %v892, 0.0
      %911 = vadd.xlane.f32.xlu0 %v910
      %v912 = vpop.xlane.xlu0 %911
      %v913 = vsel %vm852, %v894, 0.0
      %914 = vadd.xlane.f32.xlu0 %v913
      %v915 = vpop.xlane.xlu0 %914
      %v916 = vsel %vm852, %v896, 0.0
      %917 = vadd.xlane.f32.xlu0 %v916
      %v918 = vpop.xlane.xlu0 %917
      %v919 = vsel %vm852, %v898, 0.0
      %920 = vadd.xlane.f32.xlu0 %v919
      %v921 = vpop.xlane.xlu0 %920
      %v922 = vsel %vm852, %v900, 0.0
      %923 = vadd.xlane.f32.xlu0 %v922
      %v924 = vpop.xlane.xlu0 %923
      %v925 = vrcp.pop %v903
      %v926 = vrcp.pop %v906
      %v927 = vrcp.pop %v909
      %v928 = vrcp.pop %v912
      %v929 = vrcp.pop %v915
      %v930 = vrcp.pop %v918
      %v931 = vrcp.pop %v921
      %v932 = vrcp.pop %v924
      %v933 = vmul.f32 %v886, %v925
      %v934 = vmul.f32 %v888, %v926
      %v935 = vmul.f32 %v890, %v927
      %v936 = vmul.f32 %v892, %v928
      %v937 = vmul.f32 %v894, %v929
      %v938 = vmul.f32 %v896, %v930
      %v939 = vmul.f32 %v898, %v931
      %v940 = vmul.f32 %v900, %v932
      %v941 = vpack.c.bf16 %v933, %v933
      %v942 = vpack.c.bf16 %v934, %v934
      %v943 = vpack.c.bf16 %v935, %v935
      %v944 = vpack.c.bf16 %v936, %v936
      %v945 = vpack.c.bf16 %v937, %v937
      %v946 = vpack.c.bf16 %v938, %v938
      %v947 = vpack.c.bf16 %v939, %v939
      %v948 = vpack.c.bf16 %v940, %v940
      %v949 = vpack.c.b16 %v451, %v451
      %950 = vrot.lane.b32.xlu0 %v949, 104
      %v951 = vpop.permute.xlu0 %950
      %v953 = vsel %vm852, %v941, 0
      %vm955 = vcmask 1043456
      %v957 = vsel %vm955, %v951, 0
      %959 = vmatprep.subr.bf16.mxu0 0
      %960 = vmatpush1.bf16.msra.mxu0 %v957
      %961 = vmatprep.subr.bf16.mxu0 0
      %962 = vmatpush1.bf16.msra.mxu0 0
      %963 = vmatprep.subr.bf16.mxu0 0
      %964 = vmatpush1.bf16.msra.mxu0 0
      %965 = vmatprep.subr.bf16.mxu0 0
      %966 = vmatpush1.bf16.msra.mxu0 0
      %967 = vmatprep.subr.bf16.mxu0 0
      %968 = vmatpush1.bf16.msra.mxu0 0
      %969 = vmatprep.subr.bf16.mxu0 0
      %970 = vmatpush1.bf16.msra.mxu0 0
      %971 = vmatprep.subr.bf16.mxu0 0
      %972 = vmatpush1.bf16.msra.mxu0 0
      %973 = vmatprep.subr.bf16.mxu0 0
      %974 = vmatpush1.bf16.msra.mxu0 0
      %975 = vmatprep.subr.bf16.mxu0 0
      %976 = vmatpush1.bf16.msra.mxu0 0
      %977 = vmatprep.subr.bf16.mxu0 0
      %978 = vmatpush1.bf16.msra.mxu0 0
      %979 = vmatprep.subr.bf16.mxu0 0
      %980 = vmatpush1.bf16.msra.mxu0 0
      %981 = vmatprep.subr.bf16.mxu0 0
      %982 = vmatpush1.bf16.msra.mxu0 0
      %983 = vmatprep.subr.bf16.mxu0 0
      %984 = vmatpush1.bf16.msra.mxu0 0
      %985 = vmatprep.subr.bf16.mxu0 0
      %986 = vmatpush1.bf16.msra.mxu0 0
      %987 = vmatprep.subr.bf16.mxu0 0
      %988 = vmatpush1.bf16.msra.mxu0 0
      %989 = vmatprep.subr.bf16.mxu0 0
      %990 = vmatpush1.bf16.msra.mxu0 0
      %991 = vmatprep.mubr.bf16.mxu0 0
      %992 = vmatmul.mubr.bf16.gmra.mrb[0].mxu0 %v953
      %v993 = vpop.f32.mrb[0].mxu0
      %v994 = vadd.f32 0.0, %v993
      %v995 = vpop.f32.mrb[0].mxu0
      %v996 = vpop.f32.mrb[0].mxu0
      %v997 = vpop.f32.mrb[0].mxu0
      %998 = vdwg.mxu0
      %v999 = vpack.c.b16 %v452, %v452
      %1000 = vrot.lane.b32.xlu0 %v999, 104
      %v1001 = vpop.permute.xlu0 %1000
      %v1003 = vsel %vm852, %v942, 0
      %v1006 = vsel %vm955, %v1001, 0
      %1008 = vmatprep.subr.bf16.mxu0 0
      %1009 = vmatpush1.bf16.msra.mxu0 %v1006
      %1010 = vmatprep.subr.bf16.mxu0 0
      %1011 = vmatpush1.bf16.msra.mxu0 0
      %1012 = vmatprep.subr.bf16.mxu0 0
      %1013 = vmatpush1.bf16.msra.mxu0 0
      %1014 = vmatprep.subr.bf16.mxu0 0
      %1015 = vmatpush1.bf16.msra.mxu0 0
      %1016 = vmatprep.subr.bf16.mxu0 0
      %1017 = vmatpush1.bf16.msra.mxu0 0
      %1018 = vmatprep.subr.bf16.mxu0 0
      %1019 = vmatpush1.bf16.msra.mxu0 0
      %1020 = vmatprep.subr.bf16.mxu0 0
      %1021 = vmatpush1.bf16.msra.mxu0 0
      %1022 = vmatprep.subr.bf16.mxu0 0
      %1023 = vmatpush1.bf16.msra.mxu0 0
      %1024 = vmatprep.subr.bf16.mxu0 0
      %1025 = vmatpush1.bf16.msra.mxu0 0
      %1026 = vmatprep.subr.bf16.mxu0 0
      %1027 = vmatpush1.bf16.msra.mxu0 0
      %1028 = vmatprep.subr.bf16.mxu0 0
      %1029 = vmatpush1.bf16.msra.mxu0 0
      %1030 = vmatprep.subr.bf16.mxu0 0
      %1031 = vmatpush1.bf16.msra.mxu0 0
      %1032 = vmatprep.subr.bf16.mxu0 0
      %1033 = vmatpush1.bf16.msra.mxu0 0
      %1034 = vmatprep.subr.bf16.mxu0 0
      %1035 = vmatpush1.bf16.msra.mxu0 0
      %1036 = vmatprep.subr.bf16.mxu0 0
      %1037 = vmatpush1.bf16.msra.mxu0 0
      %1038 = vmatprep.subr.bf16.mxu0 0
      %1039 = vmatpush1.bf16.msra.mxu0 0
      %1040 = vmatprep.mubr.bf16.mxu0 0
      %1041 = vmatmul.mubr.bf16.gmra.mrb[0].mxu0 %v1003
      %v1042 = vpop.f32.mrb[0].mxu0
      %v1043 = vadd.f32 0.0, %v1042
      %v1044 = vpop.f32.mrb[0].mxu0
      %v1045 = vpop.f32.mrb[0].mxu0
      %v1046 = vpop.f32.mrb[0].mxu0
      %1047 = vdwg.mxu0
      %v1048 = vpack.c.b16 %v453, %v453
      %1049 = vrot.lane.b32.xlu0 %v1048, 104
      %v1050 = vpop.permute.xlu0 %1049
      %v1052 = vsel %vm852, %v943, 0
      %v1055 = vsel %vm955, %v1050, 0
      %1057 = vmatprep.subr.bf16.mxu0 0
      %1058 = vmatpush1.bf16.msra.mxu0 %v1055
      %1059 = vmatprep.subr.bf16.mxu0 0
      %1060 = vmatpush1.bf16.msra.mxu0 0
      %1061 = vmatprep.subr.bf16.mxu0 0
      %1062 = vmatpush1.bf16.msra.mxu0 0
      %1063 = vmatprep.subr.bf16.mxu0 0
      %1064 = vmatpush1.bf16.msra.mxu0 0
      %1065 = vmatprep.subr.bf16.mxu0 0
      %1066 = vmatpush1.bf16.msra.mxu0 0
      %1067 = vmatprep.subr.bf16.mxu0 0
      %1068 = vmatpush1.bf16.msra.mxu0 0
      %1069 = vmatprep.subr.bf16.mxu0 0
      %1070 = vmatpush1.bf16.msra.mxu0 0
      %1071 = vmatprep.subr.bf16.mxu0 0
      %1072 = vmatpush1.bf16.msra.mxu0 0
      %1073 = vmatprep.subr.bf16.mxu0 0
      %1074 = vmatpush1.bf16.msra.mxu0 0
      %1075 = vmatprep.subr.bf16.mxu0 0
      %1076 = vmatpush1.bf16.msra.mxu0 0
      %1077 = vmatprep.subr.bf16.mxu0 0
      %1078 = vmatpush1.bf16.msra.mxu0 0
      %1079 = vmatprep.subr.bf16.mxu0 0
      %1080 = vmatpush1.bf16.msra.mxu0 0
      %1081 = vmatprep.subr.bf16.mxu0 0
      %1082 = vmatpush1.bf16.msra.mxu0 0
      %1083 = vmatprep.subr.bf16.mxu0 0
      %1084 = vmatpush1.bf16.msra.mxu0 0
      %1085 = vmatprep.subr.bf16.mxu0 0
      %1086 = vmatpush1.bf16.msra.mxu0 0
      %1087 = vmatprep.subr.bf16.mxu0 0
      %1088 = vmatpush1.bf16.msra.mxu0 0
      %1089 = vmatprep.mubr.bf16.mxu0 0
      %1090 = vmatmul.mubr.bf16.gmra.mrb[0].mxu0 %v1052
      %v1091 = vpop.f32.mrb[0].mxu0
      %v1092 = vadd.f32 0.0, %v1091
      %v1093 = vpop.f32.mrb[0].mxu0
      %v1094 = vpop.f32.mrb[0].mxu0
      %v1095 = vpop.f32.mrb[0].mxu0
      %1096 = vdwg.mxu0
      %v1097 = vpack.c.b16 %v454, %v454
      %1098 = vrot.lane.b32.xlu0 %v1097, 104
      %v1099 = vpop.permute.xlu0 %1098
      %v1101 = vsel %vm852, %v944, 0
      %v1104 = vsel %vm955, %v1099, 0
      %1106 = vmatprep.subr.bf16.mxu0 0
      %1107 = vmatpush1.bf16.msra.mxu0 %v1104
      %1108 = vmatprep.subr.bf16.mxu0 0
      %1109 = vmatpush1.bf16.msra.mxu0 0
      %1110 = vmatprep.subr.bf16.mxu0 0
      %1111 = vmatpush1.bf16.msra.mxu0 0
      %1112 = vmatprep.subr.bf16.mxu0 0
      %1113 = vmatpush1.bf16.msra.mxu0 0
      %1114 = vmatprep.subr.bf16.mxu0 0
      %1115 = vmatpush1.bf16.msra.mxu0 0
      %1116 = vmatprep.subr.bf16.mxu0 0
      %1117 = vmatpush1.bf16.msra.mxu0 0
      %1118 = vmatprep.subr.bf16.mxu0 0
      %1119 = vmatpush1.bf16.msra.mxu0 0
      %1120 = vmatprep.subr.bf16.mxu0 0
      %1121 = vmatpush1.bf16.msra.mxu0 0
      %1122 = vmatprep.subr.bf16.mxu0 0
      %1123 = vmatpush1.bf16.msra.mxu0 0
      %1124 = vmatprep.subr.bf16.mxu0 0
      %1125 = vmatpush1.bf16.msra.mxu0 0
      %1126 = vmatprep.subr.bf16.mxu0 0
      %1127 = vmatpush1.bf16.msra.mxu0 0
      %1128 = vmatprep.subr.bf16.mxu0 0
      %1129 = vmatpush1.bf16.msra.mxu0 0
      %1130 = vmatprep.subr.bf16.mxu0 0
      %1131 = vmatpush1.bf16.msra.mxu0 0
      %1132 = vmatprep.subr.bf16.mxu0 0
      %1133 = vmatpush1.bf16.msra.mxu0 0
      %1134 = vmatprep.subr.bf16.mxu0 0
      %1135 = vmatpush1.bf16.msra.mxu0 0
      %1136 = vmatprep.subr.bf16.mxu0 0
      %1137 = vmatpush1.bf16.msra.mxu0 0
      %1138 = vmatprep.mubr.bf16.mxu0 0
      %1139 = vmatmul.mubr.bf16.gmra.mrb[0].mxu0 %v1101
      %v1140 = vpop.f32.mrb[0].mxu0
      %v1141 = vadd.f32 0.0, %v1140
      %v1142 = vpop.f32.mrb[0].mxu0
      %v1143 = vpop.f32.mrb[0].mxu0
      %v1144 = vpop.f32.mrb[0].mxu0
      %1145 = vdwg.mxu0
      %v1146 = vpack.c.b16 %v455, %v455
      %1147 = vrot.lane.b32.xlu0 %v1146, 104
      %v1148 = vpop.permute.xlu0 %1147
      %v1150 = vsel %vm852, %v945, 0
      %v1153 = vsel %vm955, %v1148, 0
      %1155 = vmatprep.subr.bf16.mxu0 0
      %1156 = vmatpush1.bf16.msra.mxu0 %v1153
      %1157 = vmatprep.subr.bf16.mxu0 0
      %1158 = vmatpush1.bf16.msra.mxu0 0
      %1159 = vmatprep.subr.bf16.mxu0 0
      %1160 = vmatpush1.bf16.msra.mxu0 0
      %1161 = vmatprep.subr.bf16.mxu0 0
      %1162 = vmatpush1.bf16.msra.mxu0 0
      %1163 = vmatprep.subr.bf16.mxu0 0
      %1164 = vmatpush1.bf16.msra.mxu0 0
      %1165 = vmatprep.subr.bf16.mxu0 0
      %1166 = vmatpush1.bf16.msra.mxu0 0
      %1167 = vmatprep.subr.bf16.mxu0 0
      %1168 = vmatpush1.bf16.msra.mxu0 0
      %1169 = vmatprep.subr.bf16.mxu0 0
      %1170 = vmatpush1.bf16.msra.mxu0 0
      %1171 = vmatprep.subr.bf16.mxu0 0
      %1172 = vmatpush1.bf16.msra.mxu0 0
      %1173 = vmatprep.subr.bf16.mxu0 0
      %1174 = vmatpush1.bf16.msra.mxu0 0
      %1175 = vmatprep.subr.bf16.mxu0 0
      %1176 = vmatpush1.bf16.msra.mxu0 0
      %1177 = vmatprep.subr.bf16.mxu0 0
      %1178 = vmatpush1.bf16.msra.mxu0 0
      %1179 = vmatprep.subr.bf16.mxu0 0
      %1180 = vmatpush1.bf16.msra.mxu0 0
      %1181 = vmatprep.subr.bf16.mxu0 0
      %1182 = vmatpush1.bf16.msra.mxu0 0
      %1183 = vmatprep.subr.bf16.mxu0 0
      %1184 = vmatpush1.bf16.msra.mxu0 0
      %1185 = vmatprep.subr.bf16.mxu0 0
      %1186 = vmatpush1.bf16.msra.mxu0 0
      %1187 = vmatprep.mubr.bf16.mxu0 0
      %1188 = vmatmul.mubr.bf16.gmra.mrb[0].mxu0 %v1150
      %v1189 = vpop.f32.mrb[0].mxu0
      %v1190 = vadd.f32 0.0, %v1189
      %v1191 = vpop.f32.mrb[0].mxu0
      %v1192 = vpop.f32.mrb[0].mxu0
      %v1193 = vpop.f32.mrb[0].mxu0
      %1194 = vdwg.mxu0
      %v1195 = vpack.c.b16 %v456, %v456
      %1196 = vrot.lane.b32.xlu0 %v1195, 104
      %v1197 = vpop.permute.xlu0 %1196
      %v1199 = vsel %vm852, %v946, 0
      %v1202 = vsel %vm955, %v1197, 0
      %1204 = vmatprep.subr.bf16.mxu0 0
      %1205 = vmatpush1.bf16.msra.mxu0 %v1202
      %1206 = vmatprep.subr.bf16.mxu0 0
      %1207 = vmatpush1.bf16.msra.mxu0 0
      %1208 = vmatprep.subr.bf16.mxu0 0
      %1209 = vmatpush1.bf16.msra.mxu0 0
      %1210 = vmatprep.subr.bf16.mxu0 0
      %1211 = vmatpush1.bf16.msra.mxu0 0
      %1212 = vmatprep.subr.bf16.mxu0 0
      %1213 = vmatpush1.bf16.msra.mxu0 0
      %1214 = vmatprep.subr.bf16.mxu0 0
      %1215 = vmatpush1.bf16.msra.mxu0 0
      %1216 = vmatprep.subr.bf16.mxu0 0
      %1217 = vmatpush1.bf16.msra.mxu0 0
      %1218 = vmatprep.subr.bf16.mxu0 0
      %1219 = vmatpush1.bf16.msra.mxu0 0
      %1220 = vmatprep.subr.bf16.mxu0 0
      %1221 = vmatpush1.bf16.msra.mxu0 0
      %1222 = vmatprep.subr.bf16.mxu0 0
      %1223 = vmatpush1.bf16.msra.mxu0 0
      %1224 = vmatprep.subr.bf16.mxu0 0
      %1225 = vmatpush1.bf16.msra.mxu0 0
      %1226 = vmatprep.subr.bf16.mxu0 0
      %1227 = vmatpush1.bf16.msra.mxu0 0
      %1228 = vmatprep.subr.bf16.mxu0 0
      %1229 = vmatpush1.bf16.msra.mxu0 0
      %1230 = vmatprep.subr.bf16.mxu0 0
      %1231 = vmatpush1.bf16.msra.mxu0 0
      %1232 = vmatprep.subr.bf16.mxu0 0
      %1233 = vmatpush1.bf16.msra.mxu0 0
      %1234 = vmatprep.subr.bf16.mxu0 0
      %1235 = vmatpush1.bf16.msra.mxu0 0
      %1236 = vmatprep.mubr.bf16.mxu0 0
      %1237 = vmatmul.mubr.bf16.gmra.mrb[0].mxu0 %v1199
      %v1238 = vpop.f32.mrb[0].mxu0
      %v1239 = vadd.f32 0.0, %v1238
      %v1240 = vpop.f32.mrb[0].mxu0
      %v1241 = vpop.f32.mrb[0].mxu0
      %v1242 = vpop.f32.mrb[0].mxu0
      %1243 = vdwg.mxu0
      %v1244 = vpack.c.b16 %v457, %v457
      %1245 = vrot.lane.b32.xlu0 %v1244, 104
      %v1246 = vpop.permute.xlu0 %1245
      %v1248 = vsel %vm852, %v947, 0
      %v1251 = vsel %vm955, %v1246, 0
      %1253 = vmatprep.subr.bf16.mxu0 0
      %1254 = vmatpush1.bf16.msra.mxu0 %v1251
      %1255 = vmatprep.subr.bf16.mxu0 0
      %1256 = vmatpush1.bf16.msra.mxu0 0
      %1257 = vmatprep.subr.bf16.mxu0 0
      %1258 = vmatpush1.bf16.msra.mxu0 0
      %1259 = vmatprep.subr.bf16.mxu0 0
      %1260 = vmatpush1.bf16.msra.mxu0 0
      %1261 = vmatprep.subr.bf16.mxu0 0
      %1262 = vmatpush1.bf16.msra.mxu0 0
      %1263 = vmatprep.subr.bf16.mxu0 0
      %1264 = vmatpush1.bf16.msra.mxu0 0
      %1265 = vmatprep.subr.bf16.mxu0 0
      %1266 = vmatpush1.bf16.msra.mxu0 0
      %1267 = vmatprep.subr.bf16.mxu0 0
      %1268 = vmatpush1.bf16.msra.mxu0 0
      %1269 = vmatprep.subr.bf16.mxu0 0
      %1270 = vmatpush1.bf16.msra.mxu0 0
      %1271 = vmatprep.subr.bf16.mxu0 0
      %1272 = vmatpush1.bf16.msra.mxu0 0
      %1273 = vmatprep.subr.bf16.mxu0 0
      %1274 = vmatpush1.bf16.msra.mxu0 0
      %1275 = vmatprep.subr.bf16.mxu0 0
      %1276 = vmatpush1.bf16.msra.mxu0 0
      %1277 = vmatprep.subr.bf16.mxu0 0
      %1278 = vmatpush1.bf16.msra.mxu0 0
      %1279 = vmatprep.subr.bf16.mxu0 0
      %1280 = vmatpush1.bf16.msra.mxu0 0
      %1281 = vmatprep.subr.bf16.mxu0 0
      %1282 = vmatpush1.bf16.msra.mxu0 0
      %1283 = vmatprep.subr.bf16.mxu0 0
      %1284 = vmatpush1.bf16.msra.mxu0 0
      %1285 = vmatprep.mubr.bf16.mxu0 0
      %1286 = vmatmul.mubr.bf16.gmra.mrb[0].mxu0 %v1248
      %v1287 = vpop.f32.mrb[0].mxu0
      %v1288 = vadd.f32 0.0, %v1287
      %v1289 = vpop.f32.mrb[0].mxu0
      %v1290 = vpop.f32.mrb[0].mxu0
      %v1291 = vpop.f32.mrb[0].mxu0
      %1292 = vdwg.mxu0
      %v1293 = vpack.c.b16 %v458, %v458
      %1294 = vrot.lane.b32.xlu0 %v1293, 104
      %v1295 = vpop.permute.xlu0 %1294
      %v1297 = vsel %vm852, %v948, 0
      %v1300 = vsel %vm955, %v1295, 0
      %1302 = vmatprep.subr.bf16.mxu0 0
      %1303 = vmatpush1.bf16.msra.mxu0 %v1300
      %1304 = vmatprep.subr.bf16.mxu0 0
      %1305 = vmatpush1.bf16.msra.mxu0 0
      %1306 = vmatprep.subr.bf16.mxu0 0
      %1307 = vmatpush1.bf16.msra.mxu0 0
      %1308 = vmatprep.subr.bf16.mxu0 0
      %1309 = vmatpush1.bf16.msra.mxu0 0
      %1310 = vmatprep.subr.bf16.mxu0 0
      %1311 = vmatpush1.bf16.msra.mxu0 0
      %1312 = vmatprep.subr.bf16.mxu0 0
      %1313 = vmatpush1.bf16.msra.mxu0 0
      %1314 = vmatprep.subr.bf16.mxu0 0
      %1315 = vmatpush1.bf16.msra.mxu0 0
      %1316 = vmatprep.subr.bf16.mxu0 0
      %1317 = vmatpush1.bf16.msra.mxu0 0
      %1318 = vmatprep.subr.bf16.mxu0 0
      %1319 = vmatpush1.bf16.msra.mxu0 0
      %1320 = vmatprep.subr.bf16.mxu0 0
      %1321 = vmatpush1.bf16.msra.mxu0 0
      %1322 = vmatprep.subr.bf16.mxu0 0
      %1323 = vmatpush1.bf16.msra.mxu0 0
      %1324 = vmatprep.subr.bf16.mxu0 0
      %1325 = vmatpush1.bf16.msra.mxu0 0
      %1326 = vmatprep.subr.bf16.mxu0 0
      %1327 = vmatpush1.bf16.msra.mxu0 0
      %1328 = vmatprep.subr.bf16.mxu0 0
      %1329 = vmatpush1.bf16.msra.mxu0 0
      %1330 = vmatprep.subr.bf16.mxu0 0
      %1331 = vmatpush1.bf16.msra.mxu0 0
      %1332 = vmatprep.subr.bf16.mxu0 0
      %1333 = vmatpush1.bf16.msra.mxu0 0
      %1334 = vmatprep.mubr.bf16.mxu0 0
      %1335 = vmatmul.mubr.bf16.gmra.mrb[0].mxu0 %v1297
      %v1336 = vpop.f32.mrb[0].mxu0
      %v1337 = vadd.f32 0.0, %v1336
      %v1338 = vpop.f32.mrb[0].mxu0
      %v1339 = vpop.f32.mrb[0].mxu0
      %v1340 = vpop.f32.mrb[0].mxu0
      %1341 = vdwg.mxu0
      %1342 = vrot.lane.b32.xlu0 %v419, 124
      %v1343 = vpop.permute.xlu0 %1342
      %1344 = vrot.lane.b32.xlu0 %v459, 112
      %v1345 = vpop.permute.xlu0 %1344
      %v1347 = vsel %vm462, %v1343, 0
      %v1350 = vsel %vm462, %v1345, 0
      %1352 = vmatprep.subr.bf16.mxu0 0
      %1353 = vmatpush1.bf16.xpose.msra.mxu0 %v1350
      %1354 = vmatprep.subr.bf16.mxu0 0
      %1355 = vmatpush1.bf16.xpose.msra.mxu0 0
      %1356 = vmatprep.subr.bf16.mxu0 0
      %1357 = vmatpush1.bf16.xpose.msra.mxu0 0
      %1358 = vmatprep.subr.bf16.mxu0 0
      %1359 = vmatpush1.bf16.xpose.msra.mxu0 0
      %1360 = vmatprep.subr.bf16.mxu0 0
      %1361 = vmatpush1.bf16.xpose.msra.mxu0 0
      %1362 = vmatprep.subr.bf16.mxu0 0
      %1363 = vmatpush1.bf16.xpose.msra.mxu0 0
      %1364 = vmatprep.subr.bf16.mxu0 0
      %1365 = vmatpush1.bf16.xpose.msra.mxu0 0
      %1366 = vmatprep.subr.bf16.mxu0 0
      %1367 = vmatpush1.bf16.xpose.msra.mxu0 0
      %1368 = vmatprep.subr.bf16.mxu0 0
      %1369 = vmatpush1.bf16.xpose.msra.mxu0 0
      %1370 = vmatprep.subr.bf16.mxu0 0
      %1371 = vmatpush1.bf16.xpose.msra.mxu0 0
      %1372 = vmatprep.subr.bf16.mxu0 0
      %1373 = vmatpush1.bf16.xpose.msra.mxu0 0
      %1374 = vmatprep.subr.bf16.mxu0 0
      %1375 = vmatpush1.bf16.xpose.msra.mxu0 0
      %1376 = vmatprep.subr.bf16.mxu0 0
      %1377 = vmatpush1.bf16.xpose.msra.mxu0 0
      %1378 = vmatprep.subr.bf16.mxu0 0
      %1379 = vmatpush1.bf16.xpose.msra.mxu0 0
      %1380 = vmatprep.subr.bf16.mxu0 0
      %1381 = vmatpush1.bf16.xpose.msra.mxu0 0
      %1382 = vmatprep.subr.bf16.mxu0 0
      %1383 = vmatpush1.bf16.xpose.msra.mxu0 0
      %1384 = vmatprep.mubr.bf16.mxu0 0
      %1385 = vmatmul.mubr.bf16.gmra.mrb[0].mxu0 %v1347
      %v1386 = vpop.f32.mrb[0].mxu0
      %v1387 = vadd.f32 0.0, %v1386
      %v1388 = vpop.f32.mrb[0].mxu0
      %v1389 = vpop.f32.mrb[0].mxu0
      %v1390 = vpop.f32.mrb[0].mxu0
      %1391 = vdwg.mxu0
      %1392 = vrot.lane.b32.xlu0 %v420, 124
      %v1393 = vpop.permute.xlu0 %1392
      %1394 = vrot.lane.b32.xlu0 %v509, 112
      %v1395 = vpop.permute.xlu0 %1394
      %v1397 = vsel %vm462, %v1393, 0
      %v1400 = vsel %vm462, %v1395, 0
      %1402 = vmatprep.subr.bf16.mxu0 0
      %1403 = vmatpush1.bf16.xpose.msra.mxu0 %v1400
      %1404 = vmatprep.subr.bf16.mxu0 0
      %1405 = vmatpush1.bf16.xpose.msra.mxu0 0
      %1406 = vmatprep.subr.bf16.mxu0 0
      %1407 = vmatpush1.bf16.xpose.msra.mxu0 0
      %1408 = vmatprep.subr.bf16.mxu0 0
      %1409 = vmatpush1.bf16.xpose.msra.mxu0 0
      %1410 = vmatprep.subr.bf16.mxu0 0
      %1411 = vmatpush1.bf16.xpose.msra.mxu0 0
      %1412 = vmatprep.subr.bf16.mxu0 0
      %1413 = vmatpush1.bf16.xpose.msra.mxu0 0
      %1414 = vmatprep.subr.bf16.mxu0 0
      %1415 = vmatpush1.bf16.xpose.msra.mxu0 0
      %1416 = vmatprep.subr.bf16.mxu0 0
      %1417 = vmatpush1.bf16.xpose.msra.mxu0 0
      %1418 = vmatprep.subr.bf16.mxu0 0
      %1419 = vmatpush1.bf16.xpose.msra.mxu0 0
      %1420 = vmatprep.subr.bf16.mxu0 0
      %1421 = vmatpush1.bf16.xpose.msra.mxu0 0
      %1422 = vmatprep.subr.bf16.mxu0 0
      %1423 = vmatpush1.bf16.xpose.msra.mxu0 0
      %1424 = vmatprep.subr.bf16.mxu0 0
      %1425 = vmatpush1.bf16.xpose.msra.mxu0 0
      %1426 = vmatprep.subr.bf16.mxu0 0
      %1427 = vmatpush1.bf16.xpose.msra.mxu0 0
      %1428 = vmatprep.subr.bf16.mxu0 0
      %1429 = vmatpush1.bf16.xpose.msra.mxu0 0
      %1430 = vmatprep.subr.bf16.mxu0 0
      %1431 = vmatpush1.bf16.xpose.msra.mxu0 0
      %1432 = vmatprep.subr.bf16.mxu0 0
      %1433 = vmatpush1.bf16.xpose.msra.mxu0 0
      %1434 = vmatprep.mubr.bf16.mxu0 0
      %1435 = vmatmul.mubr.bf16.gmra.mrb[0].mxu0 %v1397
      %v1436 = vpop.f32.mrb[0].mxu0
      %v1437 = vadd.f32 0.0, %v1436
      %v1438 = vpop.f32.mrb[0].mxu0
      %v1439 = vpop.f32.mrb[0].mxu0
      %v1440 = vpop.f32.mrb[0].mxu0
      %1441 = vdwg.mxu0
      %1442 = vrot.lane.b32.xlu0 %v421, 124
      %v1443 = vpop.permute.xlu0 %1442
      %1444 = vrot.lane.b32.xlu0 %v558, 112
      %v1445 = vpop.permute.xlu0 %1444
      %v1447 = vsel %vm462, %v1443, 0
      %v1450 = vsel %vm462, %v1445, 0
      %1452 = vmatprep.subr.bf16.mxu0 0
      %1453 = vmatpush1.bf16.xpose.msra.mxu0 %v1450
      %1454 = vmatprep.subr.bf16.mxu0 0
      %1455 = vmatpush1.bf16.xpose.msra.mxu0 0
      %1456 = vmatprep.subr.bf16.mxu0 0
      %1457 = vmatpush1.bf16.xpose.msra.mxu0 0
      %1458 = vmatprep.subr.bf16.mxu0 0
      %1459 = vmatpush1.bf16.xpose.msra.mxu0 0
      %1460 = vmatprep.subr.bf16.mxu0 0
      %1461 = vmatpush1.bf16.xpose.msra.mxu0 0
      %1462 = vmatprep.subr.bf16.mxu0 0
      %1463 = vmatpush1.bf16.xpose.msra.mxu0 0
      %1464 = vmatprep.subr.bf16.mxu0 0
      %1465 = vmatpush1.bf16.xpose.msra.mxu0 0
      %1466 = vmatprep.subr.bf16.mxu0 0
      %1467 = vmatpush1.bf16.xpose.msra.mxu0 0
      %1468 = vmatprep.subr.bf16.mxu0 0
      %1469 = vmatpush1.bf16.xpose.msra.mxu0 0
      %1470 = vmatprep.subr.bf16.mxu0 0
      %1471 = vmatpush1.bf16.xpose.msra.mxu0 0
      %1472 = vmatprep.subr.bf16.mxu0 0
      %1473 = vmatpush1.bf16.xpose.msra.mxu0 0
      %1474 = vmatprep.subr.bf16.mxu0 0
      %1475 = vmatpush1.bf16.xpose.msra.mxu0 0
      %1476 = vmatprep.subr.bf16.mxu0 0
      %1477 = vmatpush1.bf16.xpose.msra.mxu0 0
      %1478 = vmatprep.subr.bf16.mxu0 0
      %1479 = vmatpush1.bf16.xpose.msra.mxu0 0
      %1480 = vmatprep.subr.bf16.mxu0 0
      %1481 = vmatpush1.bf16.xpose.msra.mxu0 0
      %1482 = vmatprep.subr.bf16.mxu0 0
      %1483 = vmatpush1.bf16.xpose.msra.mxu0 0
      %1484 = vmatprep.mubr.bf16.mxu0 0
      %1485 = vmatmul.mubr.bf16.gmra.mrb[0].mxu0 %v1447
      %v1486 = vpop.f32.mrb[0].mxu0
      %v1487 = vadd.f32 0.0, %v1486
      %v1488 = vpop.f32.mrb[0].mxu0
      %v1489 = vpop.f32.mrb[0].mxu0
      %v1490 = vpop.f32.mrb[0].mxu0
      %1491 = vdwg.mxu0
      %1492 = vrot.lane.b32.xlu0 %v422, 124
      %v1493 = vpop.permute.xlu0 %1492
      %1494 = vrot.lane.b32.xlu0 %v607, 112
      %v1495 = vpop.permute.xlu0 %1494
      %v1497 = vsel %vm462, %v1493, 0
      %v1500 = vsel %vm462, %v1495, 0
      %1502 = vmatprep.subr.bf16.mxu0 0
      %1503 = vmatpush1.bf16.xpose.msra.mxu0 %v1500
      %1504 = vmatprep.subr.bf16.mxu0 0
      %1505 = vmatpush1.bf16.xpose.msra.mxu0 0
      %1506 = vmatprep.subr.bf16.mxu0 0
      %1507 = vmatpush1.bf16.xpose.msra.mxu0 0
      %1508 = vmatprep.subr.bf16.mxu0 0
      %1509 = vmatpush1.bf16.xpose.msra.mxu0 0
      %1510 = vmatprep.subr.bf16.mxu0 0
      %1511 = vmatpush1.bf16.xpose.msra.mxu0 0
      %1512 = vmatprep.subr.bf16.mxu0 0
      %1513 = vmatpush1.bf16.xpose.msra.mxu0 0
      %1514 = vmatprep.subr.bf16.mxu0 0
      %1515 = vmatpush1.bf16.xpose.msra.mxu0 0
      %1516 = vmatprep.subr.bf16.mxu0 0
      %1517 = vmatpush1.bf16.xpose.msra.mxu0 0
      %1518 = vmatprep.subr.bf16.mxu0 0
      %1519 = vmatpush1.bf16.xpose.msra.mxu0 0
      %1520 = vmatprep.subr.bf16.mxu0 0
      %1521 = vmatpush1.bf16.xpose.msra.mxu0 0
      %1522 = vmatprep.subr.bf16.mxu0 0
      %1523 = vmatpush1.bf16.xpose.msra.mxu0 0
      %1524 = vmatprep.subr.bf16.mxu0 0
      %1525 = vmatpush1.bf16.xpose.msra.mxu0 0
      %1526 = vmatprep.subr.bf16.mxu0 0
      %1527 = vmatpush1.bf16.xpose.msra.mxu0 0
      %1528 = vmatprep.subr.bf16.mxu0 0
      %1529 = vmatpush1.bf16.xpose.msra.mxu0 0
      %1530 = vmatprep.subr.bf16.mxu0 0
      %1531 = vmatpush1.bf16.xpose.msra.mxu0 0
      %1532 = vmatprep.subr.bf16.mxu0 0
      %1533 = vmatpush1.bf16.xpose.msra.mxu0 0
      %1534 = vmatprep.mubr.bf16.mxu0 0
      %1535 = vmatmul.mubr.bf16.gmra.mrb[0].mxu0 %v1497
      %v1536 = vpop.f32.mrb[0].mxu0
      %v1537 = vadd.f32 0.0, %v1536
      %v1538 = vpop.f32.mrb[0].mxu0
      %v1539 = vpop.f32.mrb[0].mxu0
      %v1540 = vpop.f32.mrb[0].mxu0
      %1541 = vdwg.mxu0
      %1542 = vrot.lane.b32.xlu0 %v423, 124
      %v1543 = vpop.permute.xlu0 %1542
      %1544 = vrot.lane.b32.xlu0 %v656, 112
      %v1545 = vpop.permute.xlu0 %1544
      %v1547 = vsel %vm462, %v1543, 0
      %v1550 = vsel %vm462, %v1545, 0
      %1552 = vmatprep.subr.bf16.mxu0 0
      %1553 = vmatpush1.bf16.xpose.msra.mxu0 %v1550
      %1554 = vmatprep.subr.bf16.mxu0 0
      %1555 = vmatpush1.bf16.xpose.msra.mxu0 0
      %1556 = vmatprep.subr.bf16.mxu0 0
      %1557 = vmatpush1.bf16.xpose.msra.mxu0 0
      %1558 = vmatprep.subr.bf16.mxu0 0
      %1559 = vmatpush1.bf16.xpose.msra.mxu0 0
      %1560 = vmatprep.subr.bf16.mxu0 0
      %1561 = vmatpush1.bf16.xpose.msra.mxu0 0
      %1562 = vmatprep.subr.bf16.mxu0 0
      %1563 = vmatpush1.bf16.xpose.msra.mxu0 0
      %1564 = vmatprep.subr.bf16.mxu0 0
      %1565 = vmatpush1.bf16.xpose.msra.mxu0 0
      %1566 = vmatprep.subr.bf16.mxu0 0
      %1567 = vmatpush1.bf16.xpose.msra.mxu0 0
      %1568 = vmatprep.subr.bf16.mxu0 0
      %1569 = vmatpush1.bf16.xpose.msra.mxu0 0
      %1570 = vmatprep.subr.bf16.mxu0 0
      %1571 = vmatpush1.bf16.xpose.msra.mxu0 0
      %1572 = vmatprep.subr.bf16.mxu0 0
      %1573 = vmatpush1.bf16.xpose.msra.mxu0 0
      %1574 = vmatprep.subr.bf16.mxu0 0
      %1575 = vmatpush1.bf16.xpose.msra.mxu0 0
      %1576 = vmatprep.subr.bf16.mxu0 0
      %1577 = vmatpush1.bf16.xpose.msra.mxu0 0
      %1578 = vmatprep.subr.bf16.mxu0 0
      %1579 = vmatpush1.bf16.xpose.msra.mxu0 0
      %1580 = vmatprep.subr.bf16.mxu0 0
      %1581 = vmatpush1.bf16.xpose.msra.mxu0 0
      %1582 = vmatprep.subr.bf16.mxu0 0
      %1583 = vmatpush1.bf16.xpose.msra.mxu0 0
      %1584 = vmatprep.mubr.bf16.mxu0 0
      %1585 = vmatmul.mubr.bf16.gmra.mrb[0].mxu0 %v1547
      %v1586 = vpop.f32.mrb[0].mxu0
      %v1587 = vadd.f32 0.0, %v1586
      %v1588 = vpop.f32.mrb[0].mxu0
      %v1589 = vpop.f32.mrb[0].mxu0
      %v1590 = vpop.f32.mrb[0].mxu0
      %1591 = vdwg.mxu0
      %1592 = vrot.lane.b32.xlu0 %v424, 124
      %v1593 = vpop.permute.xlu0 %1592
      %1594 = vrot.lane.b32.xlu0 %v705, 112
      %v1595 = vpop.permute.xlu0 %1594
      %v1597 = vsel %vm462, %v1593, 0
      %v1600 = vsel %vm462, %v1595, 0
      %1602 = vmatprep.subr.bf16.mxu0 0
      %1603 = vmatpush1.bf16.xpose.msra.mxu0 %v1600
      %1604 = vmatprep.subr.bf16.mxu0 0
      %1605 = vmatpush1.bf16.xpose.msra.mxu0 0
      %1606 = vmatprep.subr.bf16.mxu0 0
      %1607 = vmatpush1.bf16.xpose.msra.mxu0 0
      %1608 = vmatprep.subr.bf16.mxu0 0
      %1609 = vmatpush1.bf16.xpose.msra.mxu0 0
      %1610 = vmatprep.subr.bf16.mxu0 0
      %1611 = vmatpush1.bf16.xpose.msra.mxu0 0
      %1612 = vmatprep.subr.bf16.mxu0 0
      %1613 = vmatpush1.bf16.xpose.msra.mxu0 0
      %1614 = vmatprep.subr.bf16.mxu0 0
      %1615 = vmatpush1.bf16.xpose.msra.mxu0 0
      %1616 = vmatprep.subr.bf16.mxu0 0
      %1617 = vmatpush1.bf16.xpose.msra.mxu0 0
      %1618 = vmatprep.subr.bf16.mxu0 0
      %1619 = vmatpush1.bf16.xpose.msra.mxu0 0
      %1620 = vmatprep.subr.bf16.mxu0 0
      %1621 = vmatpush1.bf16.xpose.msra.mxu0 0
      %1622 = vmatprep.subr.bf16.mxu0 0
      %1623 = vmatpush1.bf16.xpose.msra.mxu0 0
      %1624 = vmatprep.subr.bf16.mxu0 0
      %1625 = vmatpush1.bf16.xpose.msra.mxu0 0
      %1626 = vmatprep.subr.bf16.mxu0 0
      %1627 = vmatpush1.bf16.xpose.msra.mxu0 0
      %1628 = vmatprep.subr.bf16.mxu0 0
      %1629 = vmatpush1.bf16.xpose.msra.mxu0 0
      %1630 = vmatprep.subr.bf16.mxu0 0
      %1631 = vmatpush1.bf16.xpose.msra.mxu0 0
      %1632 = vmatprep.subr.bf16.mxu0 0
      %1633 = vmatpush1.bf16.xpose.msra.mxu0 0
      %1634 = vmatprep.mubr.bf16.mxu0 0
      %1635 = vmatmul.mubr.bf16.gmra.mrb[0].mxu0 %v1597
      %v1636 = vpop.f32.mrb[0].mxu0
      %v1637 = vadd.f32 0.0, %v1636
      %v1638 = vpop.f32.mrb[0].mxu0
      %v1639 = vpop.f32.mrb[0].mxu0
      %v1640 = vpop.f32.mrb[0].mxu0
      %1641 = vdwg.mxu0
      %1642 = vrot.lane.b32.xlu0 %v425, 124
      %v1643 = vpop.permute.xlu0 %1642
      %1644 = vrot.lane.b32.xlu0 %v754, 112
      %v1645 = vpop.permute.xlu0 %1644
      %v1647 = vsel %vm462, %v1643, 0
      %v1650 = vsel %vm462, %v1645, 0
      %1652 = vmatprep.subr.bf16.mxu0 0
      %1653 = vmatpush1.bf16.xpose.msra.mxu0 %v1650
      %1654 = vmatprep.subr.bf16.mxu0 0
      %1655 = vmatpush1.bf16.xpose.msra.mxu0 0
      %1656 = vmatprep.subr.bf16.mxu0 0
      %1657 = vmatpush1.bf16.xpose.msra.mxu0 0
      %1658 = vmatprep.subr.bf16.mxu0 0
      %1659 = vmatpush1.bf16.xpose.msra.mxu0 0
      %1660 = vmatprep.subr.bf16.mxu0 0
      %1661 = vmatpush1.bf16.xpose.msra.mxu0 0
      %1662 = vmatprep.subr.bf16.mxu0 0
      %1663 = vmatpush1.bf16.xpose.msra.mxu0 0
      %1664 = vmatprep.subr.bf16.mxu0 0
      %1665 = vmatpush1.bf16.xpose.msra.mxu0 0
      %1666 = vmatprep.subr.bf16.mxu0 0
      %1667 = vmatpush1.bf16.xpose.msra.mxu0 0
      %1668 = vmatprep.subr.bf16.mxu0 0
      %1669 = vmatpush1.bf16.xpose.msra.mxu0 0
      %1670 = vmatprep.subr.bf16.mxu0 0
      %1671 = vmatpush1.bf16.xpose.msra.mxu0 0
      %1672 = vmatprep.subr.bf16.mxu0 0
      %1673 = vmatpush1.bf16.xpose.msra.mxu0 0
      %1674 = vmatprep.subr.bf16.mxu0 0
      %1675 = vmatpush1.bf16.xpose.msra.mxu0 0
      %1676 = vmatprep.subr.bf16.mxu0 0
      %1677 = vmatpush1.bf16.xpose.msra.mxu0 0
      %1678 = vmatprep.subr.bf16.mxu0 0
      %1679 = vmatpush1.bf16.xpose.msra.mxu0 0
      %1680 = vmatprep.subr.bf16.mxu0 0
      %1681 = vmatpush1.bf16.xpose.msra.mxu0 0
      %1682 = vmatprep.subr.bf16.mxu0 0
      %1683 = vmatpush1.bf16.xpose.msra.mxu0 0
      %1684 = vmatprep.mubr.bf16.mxu0 0
      %1685 = vmatmul.mubr.bf16.gmra.mrb[0].mxu0 %v1647
      %v1686 = vpop.f32.mrb[0].mxu0
      %v1687 = vadd.f32 0.0, %v1686
      %v1688 = vpop.f32.mrb[0].mxu0
      %v1689 = vpop.f32.mrb[0].mxu0
      %v1690 = vpop.f32.mrb[0].mxu0
      %1691 = vdwg.mxu0
      %1692 = vrot.lane.b32.xlu0 %v426, 124
      %v1693 = vpop.permute.xlu0 %1692
      %1694 = vrot.lane.b32.xlu0 %v803, 112
      %v1695 = vpop.permute.xlu0 %1694
      %v1697 = vsel %vm462, %v1693, 0
      %v1700 = vsel %vm462, %v1695, 0
      %1702 = vmatprep.subr.bf16.mxu0 0
      %1703 = vmatpush1.bf16.xpose.msra.mxu0 %v1700
      %1704 = vmatprep.subr.bf16.mxu0 0
      %1705 = vmatpush1.bf16.xpose.msra.mxu0 0
      %1706 = vmatprep.subr.bf16.mxu0 0
      %1707 = vmatpush1.bf16.xpose.msra.mxu0 0
      %1708 = vmatprep.subr.bf16.mxu0 0
      %1709 = vmatpush1.bf16.xpose.msra.mxu0 0
      %1710 = vmatprep.subr.bf16.mxu0 0
      %1711 = vmatpush1.bf16.xpose.msra.mxu0 0
      %1712 = vmatprep.subr.bf16.mxu0 0
      %1713 = vmatpush1.bf16.xpose.msra.mxu0 0
      %1714 = vmatprep.subr.bf16.mxu0 0
      %1715 = vmatpush1.bf16.xpose.msra.mxu0 0
      %1716 = vmatprep.subr.bf16.mxu0 0
      %1717 = vmatpush1.bf16.xpose.msra.mxu0 0
      %1718 = vmatprep.subr.bf16.mxu0 0
      %1719 = vmatpush1.bf16.xpose.msra.mxu0 0
      %1720 = vmatprep.subr.bf16.mxu0 0
      %1721 = vmatpush1.bf16.xpose.msra.mxu0 0
      %1722 = vmatprep.subr.bf16.mxu0 0
      %1723 = vmatpush1.bf16.xpose.msra.mxu0 0
      %1724 = vmatprep.subr.bf16.mxu0 0
      %1725 = vmatpush1.bf16.xpose.msra.mxu0 0
      %1726 = vmatprep.subr.bf16.mxu0 0
      %1727 = vmatpush1.bf16.xpose.msra.mxu0 0
      %1728 = vmatprep.subr.bf16.mxu0 0
      %1729 = vmatpush1.bf16.xpose.msra.mxu0 0
      %1730 = vmatprep.subr.bf16.mxu0 0
      %1731 = vmatpush1.bf16.xpose.msra.mxu0 0
      %1732 = vmatprep.subr.bf16.mxu0 0
      %1733 = vmatpush1.bf16.xpose.msra.mxu0 0
      %1734 = vmatprep.mubr.bf16.mxu0 0
      %1735 = vmatmul.mubr.bf16.gmra.mrb[0].mxu0 %v1697
      %v1736 = vpop.f32.mrb[0].mxu0
      %v1737 = vadd.f32 0.0, %v1736
      %v1738 = vpop.f32.mrb[0].mxu0
      %v1739 = vpop.f32.mrb[0].mxu0
      %v1740 = vpop.f32.mrb[0].mxu0
      %1741 = vdwg.mxu0
      %v1742 = vsel %vm852, %v1387, -inf
      %1743 = vmax.xlane.f32.xlu0 %v1742
      %v1744 = vpop.xlane.xlu0 %1743
      %v1745 = vsel %vm852, %v1437, -inf
      %1746 = vmax.xlane.f32.xlu0 %v1745
      %v1747 = vpop.xlane.xlu0 %1746
      %v1748 = vsel %vm852, %v1487, -inf
      %1749 = vmax.xlane.f32.xlu0 %v1748
      %v1750 = vpop.xlane.xlu0 %1749
      %v1751 = vsel %vm852, %v1537, -inf
      %1752 = vmax.xlane.f32.xlu0 %v1751
      %v1753 = vpop.xlane.xlu0 %1752
      %v1754 = vsel %vm852, %v1587, -inf
      %1755 = vmax.xlane.f32.xlu0 %v1754
      %v1756 = vpop.xlane.xlu0 %1755
      %v1757 = vsel %vm852, %v1637, -inf
      %1758 = vmax.xlane.f32.xlu0 %v1757
      %v1759 = vpop.xlane.xlu0 %1758
      %v1760 = vsel %vm852, %v1687, -inf
      %1761 = vmax.xlane.f32.xlu0 %v1760
      %v1762 = vpop.xlane.xlu0 %1761
      %v1763 = vsel %vm852, %v1737, -inf
      %1764 = vmax.xlane.f32.xlu0 %v1763
      %v1765 = vpop.xlane.xlu0 %1764
      %v1766 = vsub.f32 %v1387, %v1744
      %v1767 = vsub.f32 %v1437, %v1747
      %v1768 = vsub.f32 %v1487, %v1750
      %v1769 = vsub.f32 %v1537, %v1753
      %v1770 = vsub.f32 %v1587, %v1756
      %v1771 = vsub.f32 %v1637, %v1759
      %v1772 = vsub.f32 %v1687, %v1762
      %v1773 = vsub.f32 %v1737, %v1765
      %v1774 = vmul.f32 %v1766, 1.442695
      %v1775 = vpow.pop %v1774
      %v1776 = vmul.f32 %v1767, 1.442695
      %v1777 = vpow.pop %v1776
      %v1778 = vmul.f32 %v1768, 1.442695
      %v1779 = vpow.pop %v1778
      %v1780 = vmul.f32 %v1769, 1.442695
      %v1781 = vpow.pop %v1780
      %v1782 = vmul.f32 %v1770, 1.442695
      %v1783 = vpow.pop %v1782
      %v1784 = vmul.f32 %v1771, 1.442695
      %v1785 = vpow.pop %v1784
      %v1786 = vmul.f32 %v1772, 1.442695
      %v1787 = vpow.pop %v1786
      %v1788 = vmul.f32 %v1773, 1.442695
      %v1789 = vpow.pop %v1788
      %v1790 = vsel %vm852, %v1775, 0.0
      %1791 = vadd.xlane.f32.xlu0 %v1790
      %v1792 = vpop.xlane.xlu0 %1791
      %v1793 = vsel %vm852, %v1777, 0.0
      %1794 = vadd.xlane.f32.xlu0 %v1793
      %v1795 = vpop.xlane.xlu0 %1794
      %v1796 = vsel %vm852, %v1779, 0.0
      %1797 = vadd.xlane.f32.xlu0 %v1796
      %v1798 = vpop.xlane.xlu0 %1797
      %v1799 = vsel %vm852, %v1781, 0.0
      %1800 = vadd.xlane.f32.xlu0 %v1799
      %v1801 = vpop.xlane.xlu0 %1800
      %v1802 = vsel %vm852, %v1783, 0.0
      %1803 = vadd.xlane.f32.xlu0 %v1802
      %v1804 = vpop.xlane.xlu0 %1803
      %v1805 = vsel %vm852, %v1785, 0.0
      %1806 = vadd.xlane.f32.xlu0 %v1805
      %v1807 = vpop.xlane.xlu0 %1806
      %v1808 = vsel %vm852, %v1787, 0.0
      %1809 = vadd.xlane.f32.xlu0 %v1808
      %v1810 = vpop.xlane.xlu0 %1809
      %v1811 = vsel %vm852, %v1789, 0.0
      %1812 = vadd.xlane.f32.xlu0 %v1811
      %v1813 = vpop.xlane.xlu0 %1812
      %v1814 = vrcp.pop %v1792
      %v1815 = vrcp.pop %v1795
      %v1816 = vrcp.pop %v1798
      %v1817 = vrcp.pop %v1801
      %v1818 = vrcp.pop %v1804
      %v1819 = vrcp.pop %v1807
      %v1820 = vrcp.pop %v1810
      %v1821 = vrcp.pop %v1813
      %v1822 = vmul.f32 %v1775, %v1814
      %v1823 = vmul.f32 %v1777, %v1815
      %v1824 = vmul.f32 %v1779, %v1816
      %v1825 = vmul.f32 %v1781, %v1817
      %v1826 = vmul.f32 %v1783, %v1818
      %v1827 = vmul.f32 %v1785, %v1819
      %v1828 = vmul.f32 %v1787, %v1820
      %v1829 = vmul.f32 %v1789, %v1821
      %v1830 = vpack.c.bf16 %v1822, %v1822
      %v1831 = vpack.c.bf16 %v1823, %v1823
      %v1832 = vpack.c.bf16 %v1824, %v1824
      %v1833 = vpack.c.bf16 %v1825, %v1825
      %v1834 = vpack.c.bf16 %v1826, %v1826
      %v1835 = vpack.c.bf16 %v1827, %v1827
      %v1836 = vpack.c.bf16 %v1828, %v1828
      %v1837 = vpack.c.bf16 %v1829, %v1829
      %1838 = vrot.lane.b32.xlu0 %v949, 100
      %v1839 = vpop.permute.xlu0 %1838
      %v1841 = vsel %vm852, %v1830, 0
      %v1844 = vsel %vm955, %v1839, 0
      %1846 = vmatprep.subr.bf16.mxu0 0
      %1847 = vmatpush1.bf16.msra.mxu0 %v1844
      %1848 = vmatprep.subr.bf16.mxu0 0
      %1849 = vmatpush1.bf16.msra.mxu0 0
      %1850 = vmatprep.subr.bf16.mxu0 0
      %1851 = vmatpush1.bf16.msra.mxu0 0
      %1852 = vmatprep.subr.bf16.mxu0 0
      %1853 = vmatpush1.bf16.msra.mxu0 0
      %1854 = vmatprep.subr.bf16.mxu0 0
      %1855 = vmatpush1.bf16.msra.mxu0 0
      %1856 = vmatprep.subr.bf16.mxu0 0
      %1857 = vmatpush1.bf16.msra.mxu0 0
      %1858 = vmatprep.subr.bf16.mxu0 0
      %1859 = vmatpush1.bf16.msra.mxu0 0
      %1860 = vmatprep.subr.bf16.mxu0 0
      %1861 = vmatpush1.bf16.msra.mxu0 0
      %1862 = vmatprep.subr.bf16.mxu0 0
      %1863 = vmatpush1.bf16.msra.mxu0 0
      %1864 = vmatprep.subr.bf16.mxu0 0
      %1865 = vmatpush1.bf16.msra.mxu0 0
      %1866 = vmatprep.subr.bf16.mxu0 0
      %1867 = vmatpush1.bf16.msra.mxu0 0
      %1868 = vmatprep.subr.bf16.mxu0 0
      %1869 = vmatpush1.bf16.msra.mxu0 0
      %1870 = vmatprep.subr.bf16.mxu0 0
      %1871 = vmatpush1.bf16.msra.mxu0 0
      %1872 = vmatprep.subr.bf16.mxu0 0
      %1873 = vmatpush1.bf16.msra.mxu0 0
      %1874 = vmatprep.subr.bf16.mxu0 0
      %1875 = vmatpush1.bf16.msra.mxu0 0
      %1876 = vmatprep.subr.bf16.mxu0 0
      %1877 = vmatpush1.bf16.msra.mxu0 0
      %1878 = vmatprep.mubr.bf16.mxu0 0
      %1879 = vmatmul.mubr.bf16.gmra.mrb[0].mxu0 %v1841
      %v1880 = vpop.f32.mrb[0].mxu0
      %v1881 = vadd.f32 0.0, %v1880
      %v1882 = vpop.f32.mrb[0].mxu0
      %v1883 = vpop.f32.mrb[0].mxu0
      %v1884 = vpop.f32.mrb[0].mxu0
      %1885 = vdwg.mxu0
      %1886 = vrot.lane.b32.xlu0 %v999, 100
      %v1887 = vpop.permute.xlu0 %1886
      %v1889 = vsel %vm852, %v1831, 0
      %v1892 = vsel %vm955, %v1887, 0
      %1894 = vmatprep.subr.bf16.mxu0 0
      %1895 = vmatpush1.bf16.msra.mxu0 %v1892
      %1896 = vmatprep.subr.bf16.mxu0 0
      %1897 = vmatpush1.bf16.msra.mxu0 0
      %1898 = vmatprep.subr.bf16.mxu0 0
      %1899 = vmatpush1.bf16.msra.mxu0 0
      %1900 = vmatprep.subr.bf16.mxu0 0
      %1901 = vmatpush1.bf16.msra.mxu0 0
      %1902 = vmatprep.subr.bf16.mxu0 0
      %1903 = vmatpush1.bf16.msra.mxu0 0
      %1904 = vmatprep.subr.bf16.mxu0 0
      %1905 = vmatpush1.bf16.msra.mxu0 0
      %1906 = vmatprep.subr.bf16.mxu0 0
      %1907 = vmatpush1.bf16.msra.mxu0 0
      %1908 = vmatprep.subr.bf16.mxu0 0
      %1909 = vmatpush1.bf16.msra.mxu0 0
      %1910 = vmatprep.subr.bf16.mxu0 0
      %1911 = vmatpush1.bf16.msra.mxu0 0
      %1912 = vmatprep.subr.bf16.mxu0 0
      %1913 = vmatpush1.bf16.msra.mxu0 0
      %1914 = vmatprep.subr.bf16.mxu0 0
      %1915 = vmatpush1.bf16.msra.mxu0 0
      %1916 = vmatprep.subr.bf16.mxu0 0
      %1917 = vmatpush1.bf16.msra.mxu0 0
      %1918 = vmatprep.subr.bf16.mxu0 0
      %1919 = vmatpush1.bf16.msra.mxu0 0
      %1920 = vmatprep.subr.bf16.mxu0 0
      %1921 = vmatpush1.bf16.msra.mxu0 0
      %1922 = vmatprep.subr.bf16.mxu0 0
      %1923 = vmatpush1.bf16.msra.mxu0 0
      %1924 = vmatprep.subr.bf16.mxu0 0
      %1925 = vmatpush1.bf16.msra.mxu0 0
      %1926 = vmatprep.mubr.bf16.mxu0 0
      %1927 = vmatmul.mubr.bf16.gmra.mrb[0].mxu0 %v1889
      %v1928 = vpop.f32.mrb[0].mxu0
      %v1929 = vadd.f32 0.0, %v1928
      %v1930 = vpop.f32.mrb[0].mxu0
      %v1931 = vpop.f32.mrb[0].mxu0
      %v1932 = vpop.f32.mrb[0].mxu0
      %1933 = vdwg.mxu0
      %1934 = vrot.lane.b32.xlu0 %v1048, 100
      %v1935 = vpop.permute.xlu0 %1934
      %v1937 = vsel %vm852, %v1832, 0
      %v1940 = vsel %vm955, %v1935, 0
      %1942 = vmatprep.subr.bf16.mxu0 0
      %1943 = vmatpush1.bf16.msra.mxu0 %v1940
      %1944 = vmatprep.subr.bf16.mxu0 0
      %1945 = vmatpush1.bf16.msra.mxu0 0
      %1946 = vmatprep.subr.bf16.mxu0 0
      %1947 = vmatpush1.bf16.msra.mxu0 0
      %1948 = vmatprep.subr.bf16.mxu0 0
      %1949 = vmatpush1.bf16.msra.mxu0 0
      %1950 = vmatprep.subr.bf16.mxu0 0
      %1951 = vmatpush1.bf16.msra.mxu0 0
      %1952 = vmatprep.subr.bf16.mxu0 0
      %1953 = vmatpush1.bf16.msra.mxu0 0
      %1954 = vmatprep.subr.bf16.mxu0 0
      %1955 = vmatpush1.bf16.msra.mxu0 0
      %1956 = vmatprep.subr.bf16.mxu0 0
      %1957 = vmatpush1.bf16.msra.mxu0 0
      %1958 = vmatprep.subr.bf16.mxu0 0
      %1959 = vmatpush1.bf16.msra.mxu0 0
      %1960 = vmatprep.subr.bf16.mxu0 0
      %1961 = vmatpush1.bf16.msra.mxu0 0
      %1962 = vmatprep.subr.bf16.mxu0 0
      %1963 = vmatpush1.bf16.msra.mxu0 0
      %1964 = vmatprep.subr.bf16.mxu0 0
      %1965 = vmatpush1.bf16.msra.mxu0 0
      %1966 = vmatprep.subr.bf16.mxu0 0
      %1967 = vmatpush1.bf16.msra.mxu0 0
      %1968 = vmatprep.subr.bf16.mxu0 0
      %1969 = vmatpush1.bf16.msra.mxu0 0
      %1970 = vmatprep.subr.bf16.mxu0 0
      %1971 = vmatpush1.bf16.msra.mxu0 0
      %1972 = vmatprep.subr.bf16.mxu0 0
      %1973 = vmatpush1.bf16.msra.mxu0 0
      %1974 = vmatprep.mubr.bf16.mxu0 0
      %1975 = vmatmul.mubr.bf16.gmra.mrb[0].mxu0 %v1937
      %v1976 = vpop.f32.mrb[0].mxu0
      %v1977 = vadd.f32 0.0, %v1976
      %v1978 = vpop.f32.mrb[0].mxu0
      %v1979 = vpop.f32.mrb[0].mxu0
      %v1980 = vpop.f32.mrb[0].mxu0
      %1981 = vdwg.mxu0
      %1982 = vrot.lane.b32.xlu0 %v1097, 100
      %v1983 = vpop.permute.xlu0 %1982
      %v1985 = vsel %vm852, %v1833, 0
      %v1988 = vsel %vm955, %v1983, 0
      %1990 = vmatprep.subr.bf16.mxu0 0
      %1991 = vmatpush1.bf16.msra.mxu0 %v1988
      %1992 = vmatprep.subr.bf16.mxu0 0
      %1993 = vmatpush1.bf16.msra.mxu0 0
      %1994 = vmatprep.subr.bf16.mxu0 0
      %1995 = vmatpush1.bf16.msra.mxu0 0
      %1996 = vmatprep.subr.bf16.mxu0 0
      %1997 = vmatpush1.bf16.msra.mxu0 0
      %1998 = vmatprep.subr.bf16.mxu0 0
      %1999 = vmatpush1.bf16.msra.mxu0 0
      %2000 = vmatprep.subr.bf16.mxu0 0
      %2001 = vmatpush1.bf16.msra.mxu0 0
      %2002 = vmatprep.subr.bf16.mxu0 0
      %2003 = vmatpush1.bf16.msra.mxu0 0
      %2004 = vmatprep.subr.bf16.mxu0 0
      %2005 = vmatpush1.bf16.msra.mxu0 0
      %2006 = vmatprep.subr.bf16.mxu0 0
      %2007 = vmatpush1.bf16.msra.mxu0 0
      %2008 = vmatprep.subr.bf16.mxu0 0
      %2009 = vmatpush1.bf16.msra.mxu0 0
      %2010 = vmatprep.subr.bf16.mxu0 0
      %2011 = vmatpush1.bf16.msra.mxu0 0
      %2012 = vmatprep.subr.bf16.mxu0 0
      %2013 = vmatpush1.bf16.msra.mxu0 0
      %2014 = vmatprep.subr.bf16.mxu0 0
      %2015 = vmatpush1.bf16.msra.mxu0 0
      %2016 = vmatprep.subr.bf16.mxu0 0
      %2017 = vmatpush1.bf16.msra.mxu0 0
      %2018 = vmatprep.subr.bf16.mxu0 0
      %2019 = vmatpush1.bf16.msra.mxu0 0
      %2020 = vmatprep.subr.bf16.mxu0 0
      %2021 = vmatpush1.bf16.msra.mxu0 0
      %2022 = vmatprep.mubr.bf16.mxu0 0
      %2023 = vmatmul.mubr.bf16.gmra.mrb[0].mxu0 %v1985
      %v2024 = vpop.f32.mrb[0].mxu0
      %v2025 = vadd.f32 0.0, %v2024
      %v2026 = vpop.f32.mrb[0].mxu0
      %v2027 = vpop.f32.mrb[0].mxu0
      %v2028 = vpop.f32.mrb[0].mxu0
      %2029 = vdwg.mxu0
      %2030 = vrot.lane.b32.xlu0 %v1146, 100
      %v2031 = vpop.permute.xlu0 %2030
      %v2033 = vsel %vm852, %v1834, 0
      %v2036 = vsel %vm955, %v2031, 0
      %2038 = vmatprep.subr.bf16.mxu0 0
      %2039 = vmatpush1.bf16.msra.mxu0 %v2036
      %2040 = vmatprep.subr.bf16.mxu0 0
      %2041 = vmatpush1.bf16.msra.mxu0 0
      %2042 = vmatprep.subr.bf16.mxu0 0
      %2043 = vmatpush1.bf16.msra.mxu0 0
      %2044 = vmatprep.subr.bf16.mxu0 0
      %2045 = vmatpush1.bf16.msra.mxu0 0
      %2046 = vmatprep.subr.bf16.mxu0 0
      %2047 = vmatpush1.bf16.msra.mxu0 0
      %2048 = vmatprep.subr.bf16.mxu0 0
      %2049 = vmatpush1.bf16.msra.mxu0 0
      %2050 = vmatprep.subr.bf16.mxu0 0
      %2051 = vmatpush1.bf16.msra.mxu0 0
      %2052 = vmatprep.subr.bf16.mxu0 0
      %2053 = vmatpush1.bf16.msra.mxu0 0
      %2054 = vmatprep.subr.bf16.mxu0 0
      %2055 = vmatpush1.bf16.msra.mxu0 0
      %2056 = vmatprep.subr.bf16.mxu0 0
      %2057 = vmatpush1.bf16.msra.mxu0 0
      %2058 = vmatprep.subr.bf16.mxu0 0
      %2059 = vmatpush1.bf16.msra.mxu0 0
      %2060 = vmatprep.subr.bf16.mxu0 0
      %2061 = vmatpush1.bf16.msra.mxu0 0
      %2062 = vmatprep.subr.bf16.mxu0 0
      %2063 = vmatpush1.bf16.msra.mxu0 0
      %2064 = vmatprep.subr.bf16.mxu0 0
      %2065 = vmatpush1.bf16.msra.mxu0 0
      %2066 = vmatprep.subr.bf16.mxu0 0
      %2067 = vmatpush1.bf16.msra.mxu0 0
      %2068 = vmatprep.subr.bf16.mxu0 0
      %2069 = vmatpush1.bf16.msra.mxu0 0
      %2070 = vmatprep.mubr.bf16.mxu0 0
      %2071 = vmatmul.mubr.bf16.gmra.mrb[0].mxu0 %v2033
      %v2072 = vpop.f32.mrb[0].mxu0
      %v2073 = vadd.f32 0.0, %v2072
      %v2074 = vpop.f32.mrb[0].mxu0
      %v2075 = vpop.f32.mrb[0].mxu0
      %v2076 = vpop.f32.mrb[0].mxu0
      %2077 = vdwg.mxu0
      %2078 = vrot.lane.b32.xlu0 %v1195, 100
      %v2079 = vpop.permute.xlu0 %2078
      %v2081 = vsel %vm852, %v1835, 0
      %v2084 = vsel %vm955, %v2079, 0
      %2086 = vmatprep.subr.bf16.mxu0 0
      %2087 = vmatpush1.bf16.msra.mxu0 %v2084
      %2088 = vmatprep.subr.bf16.mxu0 0
      %2089 = vmatpush1.bf16.msra.mxu0 0
      %2090 = vmatprep.subr.bf16.mxu0 0
      %2091 = vmatpush1.bf16.msra.mxu0 0
      %2092 = vmatprep.subr.bf16.mxu0 0
      %2093 = vmatpush1.bf16.msra.mxu0 0
      %2094 = vmatprep.subr.bf16.mxu0 0
      %2095 = vmatpush1.bf16.msra.mxu0 0
      %2096 = vmatprep.subr.bf16.mxu0 0
      %2097 = vmatpush1.bf16.msra.mxu0 0
      %2098 = vmatprep.subr.bf16.mxu0 0
      %2099 = vmatpush1.bf16.msra.mxu0 0
      %2100 = vmatprep.subr.bf16.mxu0 0
      %2101 = vmatpush1.bf16.msra.mxu0 0
      %2102 = vmatprep.subr.bf16.mxu0 0
      %2103 = vmatpush1.bf16.msra.mxu0 0
      %2104 = vmatprep.subr.bf16.mxu0 0
      %2105 = vmatpush1.bf16.msra.mxu0 0
      %2106 = vmatprep.subr.bf16.mxu0 0
      %2107 = vmatpush1.bf16.msra.mxu0 0
      %2108 = vmatprep.subr.bf16.mxu0 0
      %2109 = vmatpush1.bf16.msra.mxu0 0
      %2110 = vmatprep.subr.bf16.mxu0 0
      %2111 = vmatpush1.bf16.msra.mxu0 0
      %2112 = vmatprep.subr.bf16.mxu0 0
      %2113 = vmatpush1.bf16.msra.mxu0 0
      %2114 = vmatprep.subr.bf16.mxu0 0
      %2115 = vmatpush1.bf16.msra.mxu0 0
      %2116 = vmatprep.subr.bf16.mxu0 0
      %2117 = vmatpush1.bf16.msra.mxu0 0
      %2118 = vmatprep.mubr.bf16.mxu0 0
      %2119 = vmatmul.mubr.bf16.gmra.mrb[0].mxu0 %v2081
      %v2120 = vpop.f32.mrb[0].mxu0
      %v2121 = vadd.f32 0.0, %v2120
      %v2122 = vpop.f32.mrb[0].mxu0
      %v2123 = vpop.f32.mrb[0].mxu0
      %v2124 = vpop.f32.mrb[0].mxu0
      %2125 = vdwg.mxu0
      %2126 = vrot.lane.b32.xlu0 %v1244, 100
      %v2127 = vpop.permute.xlu0 %2126
      %v2129 = vsel %vm852, %v1836, 0
      %v2132 = vsel %vm955, %v2127, 0
      %2134 = vmatprep.subr.bf16.mxu0 0
      %2135 = vmatpush1.bf16.msra.mxu0 %v2132
      %2136 = vmatprep.subr.bf16.mxu0 0
      %2137 = vmatpush1.bf16.msra.mxu0 0
      %2138 = vmatprep.subr.bf16.mxu0 0
      %2139 = vmatpush1.bf16.msra.mxu0 0
      %2140 = vmatprep.subr.bf16.mxu0 0
      %2141 = vmatpush1.bf16.msra.mxu0 0
      %2142 = vmatprep.subr.bf16.mxu0 0
      %2143 = vmatpush1.bf16.msra.mxu0 0
      %2144 = vmatprep.subr.bf16.mxu0 0
      %2145 = vmatpush1.bf16.msra.mxu0 0
      %2146 = vmatprep.subr.bf16.mxu0 0
      %2147 = vmatpush1.bf16.msra.mxu0 0
      %2148 = vmatprep.subr.bf16.mxu0 0
      %2149 = vmatpush1.bf16.msra.mxu0 0
      %2150 = vmatprep.subr.bf16.mxu0 0
      %2151 = vmatpush1.bf16.msra.mxu0 0
      %2152 = vmatprep.subr.bf16.mxu0 0
      %2153 = vmatpush1.bf16.msra.mxu0 0
      %2154 = vmatprep.subr.bf16.mxu0 0
      %2155 = vmatpush1.bf16.msra.mxu0 0
      %2156 = vmatprep.subr.bf16.mxu0 0
      %2157 = vmatpush1.bf16.msra.mxu0 0
      %2158 = vmatprep.subr.bf16.mxu0 0
      %2159 = vmatpush1.bf16.msra.mxu0 0
      %2160 = vmatprep.subr.bf16.mxu0 0
      %2161 = vmatpush1.bf16.msra.mxu0 0
      %2162 = vmatprep.subr.bf16.mxu0 0
      %2163 = vmatpush1.bf16.msra.mxu0 0
      %2164 = vmatprep.subr.bf16.mxu0 0
      %2165 = vmatpush1.bf16.msra.mxu0 0
      %2166 = vmatprep.mubr.bf16.mxu0 0
      %2167 = vmatmul.mubr.bf16.gmra.mrb[0].mxu0 %v2129
      %v2168 = vpop.f32.mrb[0].mxu0
      %v2169 = vadd.f32 0.0, %v2168
      %v2170 = vpop.f32.mrb[0].mxu0
      %v2171 = vpop.f32.mrb[0].mxu0
      %v2172 = vpop.f32.mrb[0].mxu0
      %2173 = vdwg.mxu0
      %2174 = vrot.lane.b32.xlu0 %v1293, 100
      %v2175 = vpop.permute.xlu0 %2174
      %v2177 = vsel %vm852, %v1837, 0
      %v2180 = vsel %vm955, %v2175, 0
      %2182 = vmatprep.subr.bf16.mxu0 0
      %2183 = vmatpush1.bf16.msra.mxu0 %v2180
      %2184 = vmatprep.subr.bf16.mxu0 0
      %2185 = vmatpush1.bf16.msra.mxu0 0
      %2186 = vmatprep.subr.bf16.mxu0 0
      %2187 = vmatpush1.bf16.msra.mxu0 0
      %2188 = vmatprep.subr.bf16.mxu0 0
      %2189 = vmatpush1.bf16.msra.mxu0 0
      %2190 = vmatprep.subr.bf16.mxu0 0
      %2191 = vmatpush1.bf16.msra.mxu0 0
      %2192 = vmatprep.subr.bf16.mxu0 0
      %2193 = vmatpush1.bf16.msra.mxu0 0
      %2194 = vmatprep.subr.bf16.mxu0 0
      %2195 = vmatpush1.bf16.msra.mxu0 0
      %2196 = vmatprep.subr.bf16.mxu0 0
      %2197 = vmatpush1.bf16.msra.mxu0 0
      %2198 = vmatprep.subr.bf16.mxu0 0
      %2199 = vmatpush1.bf16.msra.mxu0 0
      %2200 = vmatprep.subr.bf16.mxu0 0
      %2201 = vmatpush1.bf16.msra.mxu0 0
      %2202 = vmatprep.subr.bf16.mxu0 0
      %2203 = vmatpush1.bf16.msra.mxu0 0
      %2204 = vmatprep.subr.bf16.mxu0 0
      %2205 = vmatpush1.bf16.msra.mxu0 0
      %2206 = vmatprep.subr.bf16.mxu0 0
      %2207 = vmatpush1.bf16.msra.mxu0 0
      %2208 = vmatprep.subr.bf16.mxu0 0
      %2209 = vmatpush1.bf16.msra.mxu0 0
      %2210 = vmatprep.subr.bf16.mxu0 0
      %2211 = vmatpush1.bf16.msra.mxu0 0
      %2212 = vmatprep.subr.bf16.mxu0 0
      %2213 = vmatpush1.bf16.msra.mxu0 0
      %2214 = vmatprep.mubr.bf16.mxu0 0
      %2215 = vmatmul.mubr.bf16.gmra.mrb[0].mxu0 %v2177
      %v2216 = vpop.f32.mrb[0].mxu0
      %v2217 = vadd.f32 0.0, %v2216
      %v2218 = vpop.f32.mrb[0].mxu0
      %v2219 = vpop.f32.mrb[0].mxu0
      %v2220 = vpop.f32.mrb[0].mxu0
      %2221 = vdwg.mxu0
      %2222 = vrot.lane.b32.xlu0 %v419, 120
      %v2223 = vpop.permute.xlu0 %2222
      %2224 = vrot.lane.b32.xlu0 %v459, 108
      %v2225 = vpop.permute.xlu0 %2224
      %v2227 = vsel %vm462, %v2223, 0
      %v2230 = vsel %vm462, %v2225, 0
      %2232 = vmatprep.subr.bf16.mxu0 0
      %2233 = vmatpush1.bf16.xpose.msra.mxu0 %v2230
      %2234 = vmatprep.subr.bf16.mxu0 0
      %2235 = vmatpush1.bf16.xpose.msra.mxu0 0
      %2236 = vmatprep.subr.bf16.mxu0 0
      %2237 = vmatpush1.bf16.xpose.msra.mxu0 0
      %2238 = vmatprep.subr.bf16.mxu0 0
      %2239 = vmatpush1.bf16.xpose.msra.mxu0 0
      %2240 = vmatprep.subr.bf16.mxu0 0
      %2241 = vmatpush1.bf16.xpose.msra.mxu0 0
      %2242 = vmatprep.subr.bf16.mxu0 0
      %2243 = vmatpush1.bf16.xpose.msra.mxu0 0
      %2244 = vmatprep.subr.bf16.mxu0 0
      %2245 = vmatpush1.bf16.xpose.msra.mxu0 0
      %2246 = vmatprep.subr.bf16.mxu0 0
      %2247 = vmatpush1.bf16.xpose.msra.mxu0 0
      %2248 = vmatprep.subr.bf16.mxu0 0
      %2249 = vmatpush1.bf16.xpose.msra.mxu0 0
      %2250 = vmatprep.subr.bf16.mxu0 0
      %2251 = vmatpush1.bf16.xpose.msra.mxu0 0
      %2252 = vmatprep.subr.bf16.mxu0 0
      %2253 = vmatpush1.bf16.xpose.msra.mxu0 0
      %2254 = vmatprep.subr.bf16.mxu0 0
      %2255 = vmatpush1.bf16.xpose.msra.mxu0 0
      %2256 = vmatprep.subr.bf16.mxu0 0
      %2257 = vmatpush1.bf16.xpose.msra.mxu0 0
      %2258 = vmatprep.subr.bf16.mxu0 0
      %2259 = vmatpush1.bf16.xpose.msra.mxu0 0
      %2260 = vmatprep.subr.bf16.mxu0 0
      %2261 = vmatpush1.bf16.xpose.msra.mxu0 0
      %2262 = vmatprep.subr.bf16.mxu0 0
      %2263 = vmatpush1.bf16.xpose.msra.mxu0 0
      %2264 = vmatprep.mubr.bf16.mxu0 0
      %2265 = vmatmul.mubr.bf16.gmra.mrb[0].mxu0 %v2227
      %v2266 = vpop.f32.mrb[0].mxu0
      %v2267 = vadd.f32 0.0, %v2266
      %v2268 = vpop.f32.mrb[0].mxu0
      %v2269 = vpop.f32.mrb[0].mxu0
      %v2270 = vpop.f32.mrb[0].mxu0
      %2271 = vdwg.mxu0
      %2272 = vrot.lane.b32.xlu0 %v420, 120
      %v2273 = vpop.permute.xlu0 %2272
      %2274 = vrot.lane.b32.xlu0 %v509, 108
      %v2275 = vpop.permute.xlu0 %2274
      %v2277 = vsel %vm462, %v2273, 0
      %v2280 = vsel %vm462, %v2275, 0
      %2282 = vmatprep.subr.bf16.mxu0 0
      %2283 = vmatpush1.bf16.xpose.msra.mxu0 %v2280
      %2284 = vmatprep.subr.bf16.mxu0 0
      %2285 = vmatpush1.bf16.xpose.msra.mxu0 0
      %2286 = vmatprep.subr.bf16.mxu0 0
      %2287 = vmatpush1.bf16.xpose.msra.mxu0 0
      %2288 = vmatprep.subr.bf16.mxu0 0
      %2289 = vmatpush1.bf16.xpose.msra.mxu0 0
      %2290 = vmatprep.subr.bf16.mxu0 0
      %2291 = vmatpush1.bf16.xpose.msra.mxu0 0
      %2292 = vmatprep.subr.bf16.mxu0 0
      %2293 = vmatpush1.bf16.xpose.msra.mxu0 0
      %2294 = vmatprep.subr.bf16.mxu0 0
      %2295 = vmatpush1.bf16.xpose.msra.mxu0 0
      %2296 = vmatprep.subr.bf16.mxu0 0
      %2297 = vmatpush1.bf16.xpose.msra.mxu0 0
      %2298 = vmatprep.subr.bf16.mxu0 0
      %2299 = vmatpush1.bf16.xpose.msra.mxu0 0
      %2300 = vmatprep.subr.bf16.mxu0 0
      %2301 = vmatpush1.bf16.xpose.msra.mxu0 0
      %2302 = vmatprep.subr.bf16.mxu0 0
      %2303 = vmatpush1.bf16.xpose.msra.mxu0 0
      %2304 = vmatprep.subr.bf16.mxu0 0
      %2305 = vmatpush1.bf16.xpose.msra.mxu0 0
      %2306 = vmatprep.subr.bf16.mxu0 0
      %2307 = vmatpush1.bf16.xpose.msra.mxu0 0
      %2308 = vmatprep.subr.bf16.mxu0 0
      %2309 = vmatpush1.bf16.xpose.msra.mxu0 0
      %2310 = vmatprep.subr.bf16.mxu0 0
      %2311 = vmatpush1.bf16.xpose.msra.mxu0 0
      %2312 = vmatprep.subr.bf16.mxu0 0
      %2313 = vmatpush1.bf16.xpose.msra.mxu0 0
      %2314 = vmatprep.mubr.bf16.mxu0 0
      %2315 = vmatmul.mubr.bf16.gmra.mrb[0].mxu0 %v2277
      %v2316 = vpop.f32.mrb[0].mxu0
      %v2317 = vadd.f32 0.0, %v2316
      %v2318 = vpop.f32.mrb[0].mxu0
      %v2319 = vpop.f32.mrb[0].mxu0
      %v2320 = vpop.f32.mrb[0].mxu0
      %2321 = vdwg.mxu0
      %2322 = vrot.lane.b32.xlu0 %v421, 120
      %v2323 = vpop.permute.xlu0 %2322
      %2324 = vrot.lane.b32.xlu0 %v558, 108
      %v2325 = vpop.permute.xlu0 %2324
      %v2327 = vsel %vm462, %v2323, 0
      %v2330 = vsel %vm462, %v2325, 0
      %2332 = vmatprep.subr.bf16.mxu0 0
      %2333 = vmatpush1.bf16.xpose.msra.mxu0 %v2330
      %2334 = vmatprep.subr.bf16.mxu0 0
      %2335 = vmatpush1.bf16.xpose.msra.mxu0 0
      %2336 = vmatprep.subr.bf16.mxu0 0
      %2337 = vmatpush1.bf16.xpose.msra.mxu0 0
      %2338 = vmatprep.subr.bf16.mxu0 0
      %2339 = vmatpush1.bf16.xpose.msra.mxu0 0
      %2340 = vmatprep.subr.bf16.mxu0 0
      %2341 = vmatpush1.bf16.xpose.msra.mxu0 0
      %2342 = vmatprep.subr.bf16.mxu0 0
      %2343 = vmatpush1.bf16.xpose.msra.mxu0 0
      %2344 = vmatprep.subr.bf16.mxu0 0
      %2345 = vmatpush1.bf16.xpose.msra.mxu0 0
      %2346 = vmatprep.subr.bf16.mxu0 0
      %2347 = vmatpush1.bf16.xpose.msra.mxu0 0
      %2348 = vmatprep.subr.bf16.mxu0 0
      %2349 = vmatpush1.bf16.xpose.msra.mxu0 0
      %2350 = vmatprep.subr.bf16.mxu0 0
      %2351 = vmatpush1.bf16.xpose.msra.mxu0 0
      %2352 = vmatprep.subr.bf16.mxu0 0
      %2353 = vmatpush1.bf16.xpose.msra.mxu0 0
      %2354 = vmatprep.subr.bf16.mxu0 0
      %2355 = vmatpush1.bf16.xpose.msra.mxu0 0
      %2356 = vmatprep.subr.bf16.mxu0 0
      %2357 = vmatpush1.bf16.xpose.msra.mxu0 0
      %2358 = vmatprep.subr.bf16.mxu0 0
      %2359 = vmatpush1.bf16.xpose.msra.mxu0 0
      %2360 = vmatprep.subr.bf16.mxu0 0
      %2361 = vmatpush1.bf16.xpose.msra.mxu0 0
      %2362 = vmatprep.subr.bf16.mxu0 0
      %2363 = vmatpush1.bf16.xpose.msra.mxu0 0
      %2364 = vmatprep.mubr.bf16.mxu0 0
      %2365 = vmatmul.mubr.bf16.gmra.mrb[0].mxu0 %v2327
      %v2366 = vpop.f32.mrb[0].mxu0
      %v2367 = vadd.f32 0.0, %v2366
      %v2368 = vpop.f32.mrb[0].mxu0
      %v2369 = vpop.f32.mrb[0].mxu0
      %v2370 = vpop.f32.mrb[0].mxu0
      %2371 = vdwg.mxu0
      %2372 = vrot.lane.b32.xlu0 %v422, 120
      %v2373 = vpop.permute.xlu0 %2372
      %2374 = vrot.lane.b32.xlu0 %v607, 108
      %v2375 = vpop.permute.xlu0 %2374
      %v2377 = vsel %vm462, %v2373, 0
      %v2380 = vsel %vm462, %v2375, 0
      %2382 = vmatprep.subr.bf16.mxu0 0
      %2383 = vmatpush1.bf16.xpose.msra.mxu0 %v2380
      %2384 = vmatprep.subr.bf16.mxu0 0
      %2385 = vmatpush1.bf16.xpose.msra.mxu0 0
      %2386 = vmatprep.subr.bf16.mxu0 0
      %2387 = vmatpush1.bf16.xpose.msra.mxu0 0
      %2388 = vmatprep.subr.bf16.mxu0 0
      %2389 = vmatpush1.bf16.xpose.msra.mxu0 0
      %2390 = vmatprep.subr.bf16.mxu0 0
      %2391 = vmatpush1.bf16.xpose.msra.mxu0 0
      %2392 = vmatprep.subr.bf16.mxu0 0
      %2393 = vmatpush1.bf16.xpose.msra.mxu0 0
      %2394 = vmatprep.subr.bf16.mxu0 0
      %2395 = vmatpush1.bf16.xpose.msra.mxu0 0
      %2396 = vmatprep.subr.bf16.mxu0 0
      %2397 = vmatpush1.bf16.xpose.msra.mxu0 0
      %2398 = vmatprep.subr.bf16.mxu0 0
      %2399 = vmatpush1.bf16.xpose.msra.mxu0 0
      %2400 = vmatprep.subr.bf16.mxu0 0
      %2401 = vmatpush1.bf16.xpose.msra.mxu0 0
      %2402 = vmatprep.subr.bf16.mxu0 0
      %2403 = vmatpush1.bf16.xpose.msra.mxu0 0
      %2404 = vmatprep.subr.bf16.mxu0 0
      %2405 = vmatpush1.bf16.xpose.msra.mxu0 0
      %2406 = vmatprep.subr.bf16.mxu0 0
      %2407 = vmatpush1.bf16.xpose.msra.mxu0 0
      %2408 = vmatprep.subr.bf16.mxu0 0
      %2409 = vmatpush1.bf16.xpose.msra.mxu0 0
      %2410 = vmatprep.subr.bf16.mxu0 0
      %2411 = vmatpush1.bf16.xpose.msra.mxu0 0
      %2412 = vmatprep.subr.bf16.mxu0 0
      %2413 = vmatpush1.bf16.xpose.msra.mxu0 0
      %2414 = vmatprep.mubr.bf16.mxu0 0
      %2415 = vmatmul.mubr.bf16.gmra.mrb[0].mxu0 %v2377
      %v2416 = vpop.f32.mrb[0].mxu0
      %v2417 = vadd.f32 0.0, %v2416
      %v2418 = vpop.f32.mrb[0].mxu0
      %v2419 = vpop.f32.mrb[0].mxu0
      %v2420 = vpop.f32.mrb[0].mxu0
      %2421 = vdwg.mxu0
      %2422 = vrot.lane.b32.xlu0 %v423, 120
      %v2423 = vpop.permute.xlu0 %2422
      %2424 = vrot.lane.b32.xlu0 %v656, 108
      %v2425 = vpop.permute.xlu0 %2424
      %v2427 = vsel %vm462, %v2423, 0
      %v2430 = vsel %vm462, %v2425, 0
      %2432 = vmatprep.subr.bf16.mxu0 0
      %2433 = vmatpush1.bf16.xpose.msra.mxu0 %v2430
      %2434 = vmatprep.subr.bf16.mxu0 0
      %2435 = vmatpush1.bf16.xpose.msra.mxu0 0
      %2436 = vmatprep.subr.bf16.mxu0 0
      %2437 = vmatpush1.bf16.xpose.msra.mxu0 0
      %2438 = vmatprep.subr.bf16.mxu0 0
      %2439 = vmatpush1.bf16.xpose.msra.mxu0 0
      %2440 = vmatprep.subr.bf16.mxu0 0
      %2441 = vmatpush1.bf16.xpose.msra.mxu0 0
      %2442 = vmatprep.subr.bf16.mxu0 0
      %2443 = vmatpush1.bf16.xpose.msra.mxu0 0
      %2444 = vmatprep.subr.bf16.mxu0 0
      %2445 = vmatpush1.bf16.xpose.msra.mxu0 0
      %2446 = vmatprep.subr.bf16.mxu0 0
      %2447 = vmatpush1.bf16.xpose.msra.mxu0 0
      %2448 = vmatprep.subr.bf16.mxu0 0
      %2449 = vmatpush1.bf16.xpose.msra.mxu0 0
      %2450 = vmatprep.subr.bf16.mxu0 0
      %2451 = vmatpush1.bf16.xpose.msra.mxu0 0
      %2452 = vmatprep.subr.bf16.mxu0 0
      %2453 = vmatpush1.bf16.xpose.msra.mxu0 0
      %2454 = vmatprep.subr.bf16.mxu0 0
      %2455 = vmatpush1.bf16.xpose.msra.mxu0 0
      %2456 = vmatprep.subr.bf16.mxu0 0
      %2457 = vmatpush1.bf16.xpose.msra.mxu0 0
      %2458 = vmatprep.subr.bf16.mxu0 0
      %2459 = vmatpush1.bf16.xpose.msra.mxu0 0
      %2460 = vmatprep.subr.bf16.mxu0 0
      %2461 = vmatpush1.bf16.xpose.msra.mxu0 0
      %2462 = vmatprep.subr.bf16.mxu0 0
      %2463 = vmatpush1.bf16.xpose.msra.mxu0 0
      %2464 = vmatprep.mubr.bf16.mxu0 0
      %2465 = vmatmul.mubr.bf16.gmra.mrb[0].mxu0 %v2427
      %v2466 = vpop.f32.mrb[0].mxu0
      %v2467 = vadd.f32 0.0, %v2466
      %v2468 = vpop.f32.mrb[0].mxu0
      %v2469 = vpop.f32.mrb[0].mxu0
      %v2470 = vpop.f32.mrb[0].mxu0
      %2471 = vdwg.mxu0
      %2472 = vrot.lane.b32.xlu0 %v424, 120
      %v2473 = vpop.permute.xlu0 %2472
      %2474 = vrot.lane.b32.xlu0 %v705, 108
      %v2475 = vpop.permute.xlu0 %2474
      %v2477 = vsel %vm462, %v2473, 0
      %v2480 = vsel %vm462, %v2475, 0
      %2482 = vmatprep.subr.bf16.mxu0 0
      %2483 = vmatpush1.bf16.xpose.msra.mxu0 %v2480
      %2484 = vmatprep.subr.bf16.mxu0 0
      %2485 = vmatpush1.bf16.xpose.msra.mxu0 0
      %2486 = vmatprep.subr.bf16.mxu0 0
      %2487 = vmatpush1.bf16.xpose.msra.mxu0 0
      %2488 = vmatprep.subr.bf16.mxu0 0
      %2489 = vmatpush1.bf16.xpose.msra.mxu0 0
      %2490 = vmatprep.subr.bf16.mxu0 0
      %2491 = vmatpush1.bf16.xpose.msra.mxu0 0
      %2492 = vmatprep.subr.bf16.mxu0 0
      %2493 = vmatpush1.bf16.xpose.msra.mxu0 0
      %2494 = vmatprep.subr.bf16.mxu0 0
      %2495 = vmatpush1.bf16.xpose.msra.mxu0 0
      %2496 = vmatprep.subr.bf16.mxu0 0
      %2497 = vmatpush1.bf16.xpose.msra.mxu0 0
      %2498 = vmatprep.subr.bf16.mxu0 0
      %2499 = vmatpush1.bf16.xpose.msra.mxu0 0
      %2500 = vmatprep.subr.bf16.mxu0 0
      %2501 = vmatpush1.bf16.xpose.msra.mxu0 0
      %2502 = vmatprep.subr.bf16.mxu0 0
      %2503 = vmatpush1.bf16.xpose.msra.mxu0 0
      %2504 = vmatprep.subr.bf16.mxu0 0
      %2505 = vmatpush1.bf16.xpose.msra.mxu0 0
      %2506 = vmatprep.subr.bf16.mxu0 0
      %2507 = vmatpush1.bf16.xpose.msra.mxu0 0
      %2508 = vmatprep.subr.bf16.mxu0 0
      %2509 = vmatpush1.bf16.xpose.msra.mxu0 0
      %2510 = vmatprep.subr.bf16.mxu0 0
      %2511 = vmatpush1.bf16.xpose.msra.mxu0 0
      %2512 = vmatprep.subr.bf16.mxu0 0
      %2513 = vmatpush1.bf16.xpose.msra.mxu0 0
      %2514 = vmatprep.mubr.bf16.mxu0 0
      %2515 = vmatmul.mubr.bf16.gmra.mrb[0].mxu0 %v2477
      %v2516 = vpop.f32.mrb[0].mxu0
      %v2517 = vadd.f32 0.0, %v2516
      %v2518 = vpop.f32.mrb[0].mxu0
      %v2519 = vpop.f32.mrb[0].mxu0
      %v2520 = vpop.f32.mrb[0].mxu0
      %2521 = vdwg.mxu0
      %2522 = vrot.lane.b32.xlu0 %v425, 120
      %v2523 = vpop.permute.xlu0 %2522
      %2524 = vrot.lane.b32.xlu0 %v754, 108
      %v2525 = vpop.permute.xlu0 %2524
      %v2527 = vsel %vm462, %v2523, 0
      %v2530 = vsel %vm462, %v2525, 0
      %2532 = vmatprep.subr.bf16.mxu0 0
      %2533 = vmatpush1.bf16.xpose.msra.mxu0 %v2530
      %2534 = vmatprep.subr.bf16.mxu0 0
      %2535 = vmatpush1.bf16.xpose.msra.mxu0 0
      %2536 = vmatprep.subr.bf16.mxu0 0
      %2537 = vmatpush1.bf16.xpose.msra.mxu0 0
      %2538 = vmatprep.subr.bf16.mxu0 0
      %2539 = vmatpush1.bf16.xpose.msra.mxu0 0
      %2540 = vmatprep.subr.bf16.mxu0 0
      %2541 = vmatpush1.bf16.xpose.msra.mxu0 0
      %2542 = vmatprep.subr.bf16.mxu0 0
      %2543 = vmatpush1.bf16.xpose.msra.mxu0 0
      %2544 = vmatprep.subr.bf16.mxu0 0
      %2545 = vmatpush1.bf16.xpose.msra.mxu0 0
      %2546 = vmatprep.subr.bf16.mxu0 0
      %2547 = vmatpush1.bf16.xpose.msra.mxu0 0
      %2548 = vmatprep.subr.bf16.mxu0 0
      %2549 = vmatpush1.bf16.xpose.msra.mxu0 0
      %2550 = vmatprep.subr.bf16.mxu0 0
      %2551 = vmatpush1.bf16.xpose.msra.mxu0 0
      %2552 = vmatprep.subr.bf16.mxu0 0
      %2553 = vmatpush1.bf16.xpose.msra.mxu0 0
      %2554 = vmatprep.subr.bf16.mxu0 0
      %2555 = vmatpush1.bf16.xpose.msra.mxu0 0
      %2556 = vmatprep.subr.bf16.mxu0 0
      %2557 = vmatpush1.bf16.xpose.msra.mxu0 0
      %2558 = vmatprep.subr.bf16.mxu0 0
      %2559 = vmatpush1.bf16.xpose.msra.mxu0 0
      %2560 = vmatprep.subr.bf16.mxu0 0
      %2561 = vmatpush1.bf16.xpose.msra.mxu0 0
      %2562 = vmatprep.subr.bf16.mxu0 0
      %2563 = vmatpush1.bf16.xpose.msra.mxu0 0
      %2564 = vmatprep.mubr.bf16.mxu0 0
      %2565 = vmatmul.mubr.bf16.gmra.mrb[0].mxu0 %v2527
      %v2566 = vpop.f32.mrb[0].mxu0
      %v2567 = vadd.f32 0.0, %v2566
      %v2568 = vpop.f32.mrb[0].mxu0
      %v2569 = vpop.f32.mrb[0].mxu0
      %v2570 = vpop.f32.mrb[0].mxu0
      %2571 = vdwg.mxu0
      %2572 = vrot.lane.b32.xlu0 %v426, 120
      %v2573 = vpop.permute.xlu0 %2572
      %2574 = vrot.lane.b32.xlu0 %v803, 108
      %v2575 = vpop.permute.xlu0 %2574
      %v2577 = vsel %vm462, %v2573, 0
      %v2580 = vsel %vm462, %v2575, 0
      %2582 = vmatprep.subr.bf16.mxu0 0
      %2583 = vmatpush1.bf16.xpose.msra.mxu0 %v2580
      %2584 = vmatprep.subr.bf16.mxu0 0
      %2585 = vmatpush1.bf16.xpose.msra.mxu0 0
      %2586 = vmatprep.subr.bf16.mxu0 0
      %2587 = vmatpush1.bf16.xpose.msra.mxu0 0
      %2588 = vmatprep.subr.bf16.mxu0 0
      %2589 = vmatpush1.bf16.xpose.msra.mxu0 0
      %2590 = vmatprep.subr.bf16.mxu0 0
      %2591 = vmatpush1.bf16.xpose.msra.mxu0 0
      %2592 = vmatprep.subr.bf16.mxu0 0
      %2593 = vmatpush1.bf16.xpose.msra.mxu0 0
      %2594 = vmatprep.subr.bf16.mxu0 0
      %2595 = vmatpush1.bf16.xpose.msra.mxu0 0
      %2596 = vmatprep.subr.bf16.mxu0 0
      %2597 = vmatpush1.bf16.xpose.msra.mxu0 0
      %2598 = vmatprep.subr.bf16.mxu0 0
      %2599 = vmatpush1.bf16.xpose.msra.mxu0 0
      %2600 = vmatprep.subr.bf16.mxu0 0
      %2601 = vmatpush1.bf16.xpose.msra.mxu0 0
      %2602 = vmatprep.subr.bf16.mxu0 0
      %2603 = vmatpush1.bf16.xpose.msra.mxu0 0
      %2604 = vmatprep.subr.bf16.mxu0 0
      %2605 = vmatpush1.bf16.xpose.msra.mxu0 0
      %2606 = vmatprep.subr.bf16.mxu0 0
      %2607 = vmatpush1.bf16.xpose.msra.mxu0 0
      %2608 = vmatprep.subr.bf16.mxu0 0
      %2609 = vmatpush1.bf16.xpose.msra.mxu0 0
      %2610 = vmatprep.subr.bf16.mxu0 0
      %2611 = vmatpush1.bf16.xpose.msra.mxu0 0
      %2612 = vmatprep.subr.bf16.mxu0 0
      %2613 = vmatpush1.bf16.xpose.msra.mxu0 0
      %2614 = vmatprep.mubr.bf16.mxu0 0
      %2615 = vmatmul.mubr.bf16.gmra.mrb[0].mxu0 %v2577
      %v2616 = vpop.f32.mrb[0].mxu0
      %v2617 = vadd.f32 0.0, %v2616
      %v2618 = vpop.f32.mrb[0].mxu0
      %v2619 = vpop.f32.mrb[0].mxu0
      %v2620 = vpop.f32.mrb[0].mxu0
      %2621 = vdwg.mxu0
      %v2622 = vsel %vm852, %v2267, -inf
      %2623 = vmax.xlane.f32.xlu0 %v2622
      %v2624 = vpop.xlane.xlu0 %2623
      %v2625 = vsel %vm852, %v2317, -inf
      %2626 = vmax.xlane.f32.xlu0 %v2625
      %v2627 = vpop.xlane.xlu0 %2626
      %v2628 = vsel %vm852, %v2367, -inf
      %2629 = vmax.xlane.f32.xlu0 %v2628
      %v2630 = vpop.xlane.xlu0 %2629
      %v2631 = vsel %vm852, %v2417, -inf
      %2632 = vmax.xlane.f32.xlu0 %v2631
      %v2633 = vpop.xlane.xlu0 %2632
      %v2634 = vsel %vm852, %v2467, -inf
      %2635 = vmax.xlane.f32.xlu0 %v2634
      %v2636 = vpop.xlane.xlu0 %2635
      %v2637 = vsel %vm852, %v2517, -inf
      %2638 = vmax.xlane.f32.xlu0 %v2637
      %v2639 = vpop.xlane.xlu0 %2638
      %v2640 = vsel %vm852, %v2567, -inf
      %2641 = vmax.xlane.f32.xlu0 %v2640
      %v2642 = vpop.xlane.xlu0 %2641
      %v2643 = vsel %vm852, %v2617, -inf
      %2644 = vmax.xlane.f32.xlu0 %v2643
      %v2645 = vpop.xlane.xlu0 %2644
      %v2646 = vsub.f32 %v2267, %v2624
      %v2647 = vsub.f32 %v2317, %v2627
      %v2648 = vsub.f32 %v2367, %v2630
      %v2649 = vsub.f32 %v2417, %v2633
      %v2650 = vsub.f32 %v2467, %v2636
      %v2651 = vsub.f32 %v2517, %v2639
      %v2652 = vsub.f32 %v2567, %v2642
      %v2653 = vsub.f32 %v2617, %v2645
      %v2654 = vmul.f32 %v2646, 1.442695
      %v2655 = vpow.pop %v2654
      %v2656 = vmul.f32 %v2647, 1.442695
      %v2657 = vpow.pop %v2656
      %v2658 = vmul.f32 %v2648, 1.442695
      %v2659 = vpow.pop %v2658
      %v2660 = vmul.f32 %v2649, 1.442695
      %v2661 = vpow.pop %v2660
      %v2662 = vmul.f32 %v2650, 1.442695
      %v2663 = vpow.pop %v2662
      %v2664 = vmul.f32 %v2651, 1.442695
      %v2665 = vpow.pop %v2664
      %v2666 = vmul.f32 %v2652, 1.442695
      %v2667 = vpow.pop %v2666
      %v2668 = vmul.f32 %v2653, 1.442695
      %v2669 = vpow.pop %v2668
      %v2670 = vsel %vm852, %v2655, 0.0
      %2671 = vadd.xlane.f32.xlu0 %v2670
      %v2672 = vpop.xlane.xlu0 %2671
      %v2673 = vsel %vm852, %v2657, 0.0
      %2674 = vadd.xlane.f32.xlu0 %v2673
      %v2675 = vpop.xlane.xlu0 %2674
      %v2676 = vsel %vm852, %v2659, 0.0
      %2677 = vadd.xlane.f32.xlu0 %v2676
      %v2678 = vpop.xlane.xlu0 %2677
      %v2679 = vsel %vm852, %v2661, 0.0
      %2680 = vadd.xlane.f32.xlu0 %v2679
      %v2681 = vpop.xlane.xlu0 %2680
      %v2682 = vsel %vm852, %v2663, 0.0
      %2683 = vadd.xlane.f32.xlu0 %v2682
      %v2684 = vpop.xlane.xlu0 %2683
      %v2685 = vsel %vm852, %v2665, 0.0
      %2686 = vadd.xlane.f32.xlu0 %v2685
      %v2687 = vpop.xlane.xlu0 %2686
      %v2688 = vsel %vm852, %v2667, 0.0
      %2689 = vadd.xlane.f32.xlu0 %v2688
      %v2690 = vpop.xlane.xlu0 %2689
      %v2691 = vsel %vm852, %v2669, 0.0
      %2692 = vadd.xlane.f32.xlu0 %v2691
      %v2693 = vpop.xlane.xlu0 %2692
      %v2694 = vrcp.pop %v2672
      %v2695 = vrcp.pop %v2675
      %v2696 = vrcp.pop %v2678
      %v2697 = vrcp.pop %v2681
      %v2698 = vrcp.pop %v2684
      %v2699 = vrcp.pop %v2687
      %v2700 = vrcp.pop %v2690
      %v2701 = vrcp.pop %v2693
      %v2702 = vmul.f32 %v2655, %v2694
      %v2703 = vmul.f32 %v2657, %v2695
      %v2704 = vmul.f32 %v2659, %v2696
      %v2705 = vmul.f32 %v2661, %v2697
      %v2706 = vmul.f32 %v2663, %v2698
      %v2707 = vmul.f32 %v2665, %v2699
      %v2708 = vmul.f32 %v2667, %v2700
      %v2709 = vmul.f32 %v2669, %v2701
      %v2710 = vpack.c.bf16 %v2702, %v2702
      %v2711 = vpack.c.bf16 %v2703, %v2703
      %v2712 = vpack.c.bf16 %v2704, %v2704
      %v2713 = vpack.c.bf16 %v2705, %v2705
      %v2714 = vpack.c.bf16 %v2706, %v2706
      %v2715 = vpack.c.bf16 %v2707, %v2707
      %v2716 = vpack.c.bf16 %v2708, %v2708
      %v2717 = vpack.c.bf16 %v2709, %v2709
      %2718 = vrot.lane.b32.xlu0 %v949, 96
      %v2719 = vpop.permute.xlu0 %2718
      %v2721 = vsel %vm852, %v2710, 0
      %v2724 = vsel %vm955, %v2719, 0
      %2726 = vmatprep.subr.bf16.mxu0 0
      %2727 = vmatpush1.bf16.msra.mxu0 %v2724
      %2728 = vmatprep.subr.bf16.mxu0 0
      %2729 = vmatpush1.bf16.msra.mxu0 0
      %2730 = vmatprep.subr.bf16.mxu0 0
      %2731 = vmatpush1.bf16.msra.mxu0 0
      %2732 = vmatprep.subr.bf16.mxu0 0
      %2733 = vmatpush1.bf16.msra.mxu0 0
      %2734 = vmatprep.subr.bf16.mxu0 0
      %2735 = vmatpush1.bf16.msra.mxu0 0
      %2736 = vmatprep.subr.bf16.mxu0 0
      %2737 = vmatpush1.bf16.msra.mxu0 0
      %2738 = vmatprep.subr.bf16.mxu0 0
      %2739 = vmatpush1.bf16.msra.mxu0 0
      %2740 = vmatprep.subr.bf16.mxu0 0
      %2741 = vmatpush1.bf16.msra.mxu0 0
      %2742 = vmatprep.subr.bf16.mxu0 0
      %2743 = vmatpush1.bf16.msra.mxu0 0
      %2744 = vmatprep.subr.bf16.mxu0 0
      %2745 = vmatpush1.bf16.msra.mxu0 0
      %2746 = vmatprep.subr.bf16.mxu0 0
      %2747 = vmatpush1.bf16.msra.mxu0 0
      %2748 = vmatprep.subr.bf16.mxu0 0
      %2749 = vmatpush1.bf16.msra.mxu0 0
      %2750 = vmatprep.subr.bf16.mxu0 0
      %2751 = vmatpush1.bf16.msra.mxu0 0
      %2752 = vmatprep.subr.bf16.mxu0 0
      %2753 = vmatpush1.bf16.msra.mxu0 0
      %2754 = vmatprep.subr.bf16.mxu0 0
      %2755 = vmatpush1.bf16.msra.mxu0 0
      %2756 = vmatprep.subr.bf16.mxu0 0
      %2757 = vmatpush1.bf16.msra.mxu0 0
      %2758 = vmatprep.mubr.bf16.mxu0 0
      %2759 = vmatmul.mubr.bf16.gmra.mrb[0].mxu0 %v2721
      %v2760 = vpop.f32.mrb[0].mxu0
      %v2761 = vadd.f32 0.0, %v2760
      %v2762 = vpop.f32.mrb[0].mxu0
      %v2763 = vpop.f32.mrb[0].mxu0
      %v2764 = vpop.f32.mrb[0].mxu0
      %2765 = vdwg.mxu0
      %2766 = vrot.lane.b32.xlu0 %v999, 96
      %v2767 = vpop.permute.xlu0 %2766
      %v2769 = vsel %vm852, %v2711, 0
      %v2772 = vsel %vm955, %v2767, 0
      %2774 = vmatprep.subr.bf16.mxu0 0
      %2775 = vmatpush1.bf16.msra.mxu0 %v2772
      %2776 = vmatprep.subr.bf16.mxu0 0
      %2777 = vmatpush1.bf16.msra.mxu0 0
      %2778 = vmatprep.subr.bf16.mxu0 0
      %2779 = vmatpush1.bf16.msra.mxu0 0
      %2780 = vmatprep.subr.bf16.mxu0 0
      %2781 = vmatpush1.bf16.msra.mxu0 0
      %2782 = vmatprep.subr.bf16.mxu0 0
      %2783 = vmatpush1.bf16.msra.mxu0 0
      %2784 = vmatprep.subr.bf16.mxu0 0
      %2785 = vmatpush1.bf16.msra.mxu0 0
      %2786 = vmatprep.subr.bf16.mxu0 0
      %2787 = vmatpush1.bf16.msra.mxu0 0
      %2788 = vmatprep.subr.bf16.mxu0 0
      %2789 = vmatpush1.bf16.msra.mxu0 0
      %2790 = vmatprep.subr.bf16.mxu0 0
      %2791 = vmatpush1.bf16.msra.mxu0 0
      %2792 = vmatprep.subr.bf16.mxu0 0
      %2793 = vmatpush1.bf16.msra.mxu0 0
      %2794 = vmatprep.subr.bf16.mxu0 0
      %2795 = vmatpush1.bf16.msra.mxu0 0
      %2796 = vmatprep.subr.bf16.mxu0 0
      %2797 = vmatpush1.bf16.msra.mxu0 0
      %2798 = vmatprep.subr.bf16.mxu0 0
      %2799 = vmatpush1.bf16.msra.mxu0 0
      %2800 = vmatprep.subr.bf16.mxu0 0
      %2801 = vmatpush1.bf16.msra.mxu0 0
      %2802 = vmatprep.subr.bf16.mxu0 0
      %2803 = vmatpush1.bf16.msra.mxu0 0
      %2804 = vmatprep.subr.bf16.mxu0 0
      %2805 = vmatpush1.bf16.msra.mxu0 0
      %2806 = vmatprep.mubr.bf16.mxu0 0
      %2807 = vmatmul.mubr.bf16.gmra.mrb[0].mxu0 %v2769
      %v2808 = vpop.f32.mrb[0].mxu0
      %v2809 = vadd.f32 0.0, %v2808
      %v2810 = vpop.f32.mrb[0].mxu0
      %v2811 = vpop.f32.mrb[0].mxu0
      %v2812 = vpop.f32.mrb[0].mxu0
      %2813 = vdwg.mxu0
      %2814 = vrot.lane.b32.xlu0 %v1048, 96
      %v2815 = vpop.permute.xlu0 %2814
      %v2817 = vsel %vm852, %v2712, 0
      %v2820 = vsel %vm955, %v2815, 0
      %2822 = vmatprep.subr.bf16.mxu0 0
      %2823 = vmatpush1.bf16.msra.mxu0 %v2820
      %2824 = vmatprep.subr.bf16.mxu0 0
      %2825 = vmatpush1.bf16.msra.mxu0 0
      %2826 = vmatprep.subr.bf16.mxu0 0
      %2827 = vmatpush1.bf16.msra.mxu0 0
      %2828 = vmatprep.subr.bf16.mxu0 0
      %2829 = vmatpush1.bf16.msra.mxu0 0
      %2830 = vmatprep.subr.bf16.mxu0 0
      %2831 = vmatpush1.bf16.msra.mxu0 0
      %2832 = vmatprep.subr.bf16.mxu0 0
      %2833 = vmatpush1.bf16.msra.mxu0 0
      %2834 = vmatprep.subr.bf16.mxu0 0
      %2835 = vmatpush1.bf16.msra.mxu0 0
      %2836 = vmatprep.subr.bf16.mxu0 0
      %2837 = vmatpush1.bf16.msra.mxu0 0
      %2838 = vmatprep.subr.bf16.mxu0 0
      %2839 = vmatpush1.bf16.msra.mxu0 0
      %2840 = vmatprep.subr.bf16.mxu0 0
      %2841 = vmatpush1.bf16.msra.mxu0 0
      %2842 = vmatprep.subr.bf16.mxu0 0
      %2843 = vmatpush1.bf16.msra.mxu0 0
      %2844 = vmatprep.subr.bf16.mxu0 0
      %2845 = vmatpush1.bf16.msra.mxu0 0
      %2846 = vmatprep.subr.bf16.mxu0 0
      %2847 = vmatpush1.bf16.msra.mxu0 0
      %2848 = vmatprep.subr.bf16.mxu0 0
      %2849 = vmatpush1.bf16.msra.mxu0 0
      %2850 = vmatprep.subr.bf16.mxu0 0
      %2851 = vmatpush1.bf16.msra.mxu0 0
      %2852 = vmatprep.subr.bf16.mxu0 0
      %2853 = vmatpush1.bf16.msra.mxu0 0
      %2854 = vmatprep.mubr.bf16.mxu0 0
      %2855 = vmatmul.mubr.bf16.gmra.mrb[0].mxu0 %v2817
      %v2856 = vpop.f32.mrb[0].mxu0
      %v2857 = vadd.f32 0.0, %v2856
      %v2858 = vpop.f32.mrb[0].mxu0
      %v2859 = vpop.f32.mrb[0].mxu0
      %v2860 = vpop.f32.mrb[0].mxu0
      %2861 = vdwg.mxu0
      %2862 = vrot.lane.b32.xlu0 %v1097, 96
      %v2863 = vpop.permute.xlu0 %2862
      %v2865 = vsel %vm852, %v2713, 0
      %v2868 = vsel %vm955, %v2863, 0
      %2870 = vmatprep.subr.bf16.mxu0 0
      %2871 = vmatpush1.bf16.msra.mxu0 %v2868
      %2872 = vmatprep.subr.bf16.mxu0 0
      %2873 = vmatpush1.bf16.msra.mxu0 0
      %2874 = vmatprep.subr.bf16.mxu0 0
      %2875 = vmatpush1.bf16.msra.mxu0 0
      %2876 = vmatprep.subr.bf16.mxu0 0
      %2877 = vmatpush1.bf16.msra.mxu0 0
      %2878 = vmatprep.subr.bf16.mxu0 0
      %2879 = vmatpush1.bf16.msra.mxu0 0
      %2880 = vmatprep.subr.bf16.mxu0 0
      %2881 = vmatpush1.bf16.msra.mxu0 0
      %2882 = vmatprep.subr.bf16.mxu0 0
      %2883 = vmatpush1.bf16.msra.mxu0 0
      %2884 = vmatprep.subr.bf16.mxu0 0
      %2885 = vmatpush1.bf16.msra.mxu0 0
      %2886 = vmatprep.subr.bf16.mxu0 0
      %2887 = vmatpush1.bf16.msra.mxu0 0
      %2888 = vmatprep.subr.bf16.mxu0 0
      %2889 = vmatpush1.bf16.msra.mxu0 0
      %2890 = vmatprep.subr.bf16.mxu0 0
      %2891 = vmatpush1.bf16.msra.mxu0 0
      %2892 = vmatprep.subr.bf16.mxu0 0
      %2893 = vmatpush1.bf16.msra.mxu0 0
      %2894 = vmatprep.subr.bf16.mxu0 0
      %2895 = vmatpush1.bf16.msra.mxu0 0
      %2896 = vmatprep.subr.bf16.mxu0 0
      %2897 = vmatpush1.bf16.msra.mxu0 0
      %2898 = vmatprep.subr.bf16.mxu0 0
      %2899 = vmatpush1.bf16.msra.mxu0 0
      %2900 = vmatprep.subr.bf16.mxu0 0
      %2901 = vmatpush1.bf16.msra.mxu0 0
      %2902 = vmatprep.mubr.bf16.mxu0 0
      %2903 = vmatmul.mubr.bf16.gmra.mrb[0].mxu0 %v2865
      %v2904 = vpop.f32.mrb[0].mxu0
      %v2905 = vadd.f32 0.0, %v2904
      %v2906 = vpop.f32.mrb[0].mxu0
      %v2907 = vpop.f32.mrb[0].mxu0
      %v2908 = vpop.f32.mrb[0].mxu0
      %2909 = vdwg.mxu0
      %2910 = vrot.lane.b32.xlu0 %v1146, 96
      %v2911 = vpop.permute.xlu0 %2910
      %v2913 = vsel %vm852, %v2714, 0
      %v2916 = vsel %vm955, %v2911, 0
      %2918 = vmatprep.subr.bf16.mxu0 0
      %2919 = vmatpush1.bf16.msra.mxu0 %v2916
      %2920 = vmatprep.subr.bf16.mxu0 0
      %2921 = vmatpush1.bf16.msra.mxu0 0
      %2922 = vmatprep.subr.bf16.mxu0 0
      %2923 = vmatpush1.bf16.msra.mxu0 0
      %2924 = vmatprep.subr.bf16.mxu0 0
      %2925 = vmatpush1.bf16.msra.mxu0 0
      %2926 = vmatprep.subr.bf16.mxu0 0
      %2927 = vmatpush1.bf16.msra.mxu0 0
      %2928 = vmatprep.subr.bf16.mxu0 0
      %2929 = vmatpush1.bf16.msra.mxu0 0
      %2930 = vmatprep.subr.bf16.mxu0 0
      %2931 = vmatpush1.bf16.msra.mxu0 0
      %2932 = vmatprep.subr.bf16.mxu0 0
      %2933 = vmatpush1.bf16.msra.mxu0 0
      %2934 = vmatprep.subr.bf16.mxu0 0
      %2935 = vmatpush1.bf16.msra.mxu0 0
      %2936 = vmatprep.subr.bf16.mxu0 0
      %2937 = vmatpush1.bf16.msra.mxu0 0
      %2938 = vmatprep.subr.bf16.mxu0 0
      %2939 = vmatpush1.bf16.msra.mxu0 0
      %2940 = vmatprep.subr.bf16.mxu0 0
      %2941 = vmatpush1.bf16.msra.mxu0 0
      %2942 = vmatprep.subr.bf16.mxu0 0
      %2943 = vmatpush1.bf16.msra.mxu0 0
      %2944 = vmatprep.subr.bf16.mxu0 0
      %2945 = vmatpush1.bf16.msra.mxu0 0
      %2946 = vmatprep.subr.bf16.mxu0 0
      %2947 = vmatpush1.bf16.msra.mxu0 0
      %2948 = vmatprep.subr.bf16.mxu0 0
      %2949 = vmatpush1.bf16.msra.mxu0 0
      %2950 = vmatprep.mubr.bf16.mxu0 0
      %2951 = vmatmul.mubr.bf16.gmra.mrb[0].mxu0 %v2913
      %v2952 = vpop.f32.mrb[0].mxu0
      %v2953 = vadd.f32 0.0, %v2952
      %v2954 = vpop.f32.mrb[0].mxu0
      %v2955 = vpop.f32.mrb[0].mxu0
      %v2956 = vpop.f32.mrb[0].mxu0
      %2957 = vdwg.mxu0
      %2958 = vrot.lane.b32.xlu0 %v1195, 96
      %v2959 = vpop.permute.xlu0 %2958
      %v2961 = vsel %vm852, %v2715, 0
      %v2964 = vsel %vm955, %v2959, 0
      %2966 = vmatprep.subr.bf16.mxu0 0
      %2967 = vmatpush1.bf16.msra.mxu0 %v2964
      %2968 = vmatprep.subr.bf16.mxu0 0
      %2969 = vmatpush1.bf16.msra.mxu0 0
      %2970 = vmatprep.subr.bf16.mxu0 0
      %2971 = vmatpush1.bf16.msra.mxu0 0
      %2972 = vmatprep.subr.bf16.mxu0 0
      %2973 = vmatpush1.bf16.msra.mxu0 0
      %2974 = vmatprep.subr.bf16.mxu0 0
      %2975 = vmatpush1.bf16.msra.mxu0 0
      %2976 = vmatprep.subr.bf16.mxu0 0
      %2977 = vmatpush1.bf16.msra.mxu0 0
      %2978 = vmatprep.subr.bf16.mxu0 0
      %2979 = vmatpush1.bf16.msra.mxu0 0
      %2980 = vmatprep.subr.bf16.mxu0 0
      %2981 = vmatpush1.bf16.msra.mxu0 0
      %2982 = vmatprep.subr.bf16.mxu0 0
      %2983 = vmatpush1.bf16.msra.mxu0 0
      %2984 = vmatprep.subr.bf16.mxu0 0
      %2985 = vmatpush1.bf16.msra.mxu0 0
      %2986 = vmatprep.subr.bf16.mxu0 0
      %2987 = vmatpush1.bf16.msra.mxu0 0
      %2988 = vmatprep.subr.bf16.mxu0 0
      %2989 = vmatpush1.bf16.msra.mxu0 0
      %2990 = vmatprep.subr.bf16.mxu0 0
      %2991 = vmatpush1.bf16.msra.mxu0 0
      %2992 = vmatprep.subr.bf16.mxu0 0
      %2993 = vmatpush1.bf16.msra.mxu0 0
      %2994 = vmatprep.subr.bf16.mxu0 0
      %2995 = vmatpush1.bf16.msra.mxu0 0
      %2996 = vmatprep.subr.bf16.mxu0 0
      %2997 = vmatpush1.bf16.msra.mxu0 0
      %2998 = vmatprep.mubr.bf16.mxu0 0
      %2999 = vmatmul.mubr.bf16.gmra.mrb[0].mxu0 %v2961
      %v3000 = vpop.f32.mrb[0].mxu0
      %v3001 = vadd.f32 0.0, %v3000
      %v3002 = vpop.f32.mrb[0].mxu0
      %v3003 = vpop.f32.mrb[0].mxu0
      %v3004 = vpop.f32.mrb[0].mxu0
      %3005 = vdwg.mxu0
      %3006 = vrot.lane.b32.xlu0 %v1244, 96
      %v3007 = vpop.permute.xlu0 %3006
      %v3009 = vsel %vm852, %v2716, 0
      %v3012 = vsel %vm955, %v3007, 0
      %3014 = vmatprep.subr.bf16.mxu0 0
      %3015 = vmatpush1.bf16.msra.mxu0 %v3012
      %3016 = vmatprep.subr.bf16.mxu0 0
      %3017 = vmatpush1.bf16.msra.mxu0 0
      %3018 = vmatprep.subr.bf16.mxu0 0
      %3019 = vmatpush1.bf16.msra.mxu0 0
      %3020 = vmatprep.subr.bf16.mxu0 0
      %3021 = vmatpush1.bf16.msra.mxu0 0
      %3022 = vmatprep.subr.bf16.mxu0 0
      %3023 = vmatpush1.bf16.msra.mxu0 0
      %3024 = vmatprep.subr.bf16.mxu0 0
      %3025 = vmatpush1.bf16.msra.mxu0 0
      %3026 = vmatprep.subr.bf16.mxu0 0
      %3027 = vmatpush1.bf16.msra.mxu0 0
      %3028 = vmatprep.subr.bf16.mxu0 0
      %3029 = vmatpush1.bf16.msra.mxu0 0
      %3030 = vmatprep.subr.bf16.mxu0 0
      %3031 = vmatpush1.bf16.msra.mxu0 0
      %3032 = vmatprep.subr.bf16.mxu0 0
      %3033 = vmatpush1.bf16.msra.mxu0 0
      %3034 = vmatprep.subr.bf16.mxu0 0
      %3035 = vmatpush1.bf16.msra.mxu0 0
      %3036 = vmatprep.subr.bf16.mxu0 0
      %3037 = vmatpush1.bf16.msra.mxu0 0
      %3038 = vmatprep.subr.bf16.mxu0 0
      %3039 = vmatpush1.bf16.msra.mxu0 0
      %3040 = vmatprep.subr.bf16.mxu0 0
      %3041 = vmatpush1.bf16.msra.mxu0 0
      %3042 = vmatprep.subr.bf16.mxu0 0
      %3043 = vmatpush1.bf16.msra.mxu0 0
      %3044 = vmatprep.subr.bf16.mxu0 0
      %3045 = vmatpush1.bf16.msra.mxu0 0
      %3046 = vmatprep.mubr.bf16.mxu0 0
      %3047 = vmatmul.mubr.bf16.gmra.mrb[0].mxu0 %v3009
      %v3048 = vpop.f32.mrb[0].mxu0
      %v3049 = vadd.f32 0.0, %v3048
      %v3050 = vpop.f32.mrb[0].mxu0
      %v3051 = vpop.f32.mrb[0].mxu0
      %v3052 = vpop.f32.mrb[0].mxu0
      %3053 = vdwg.mxu0
      %3054 = vrot.lane.b32.xlu0 %v1293, 96
      %v3055 = vpop.permute.xlu0 %3054
      %v3057 = vsel %vm852, %v2717, 0
      %v3060 = vsel %vm955, %v3055, 0
      %3062 = vmatprep.subr.bf16.mxu0 0
      %3063 = vmatpush1.bf16.msra.mxu0 %v3060
      %3064 = vmatprep.subr.bf16.mxu0 0
      %3065 = vmatpush1.bf16.msra.mxu0 0
      %3066 = vmatprep.subr.bf16.mxu0 0
      %3067 = vmatpush1.bf16.msra.mxu0 0
      %3068 = vmatprep.subr.bf16.mxu0 0
      %3069 = vmatpush1.bf16.msra.mxu0 0
      %3070 = vmatprep.subr.bf16.mxu0 0
      %3071 = vmatpush1.bf16.msra.mxu0 0
      %3072 = vmatprep.subr.bf16.mxu0 0
      %3073 = vmatpush1.bf16.msra.mxu0 0
      %3074 = vmatprep.subr.bf16.mxu0 0
      %3075 = vmatpush1.bf16.msra.mxu0 0
      %3076 = vmatprep.subr.bf16.mxu0 0
      %3077 = vmatpush1.bf16.msra.mxu0 0
      %3078 = vmatprep.subr.bf16.mxu0 0
      %3079 = vmatpush1.bf16.msra.mxu0 0
      %3080 = vmatprep.subr.bf16.mxu0 0
      %3081 = vmatpush1.bf16.msra.mxu0 0
      %3082 = vmatprep.subr.bf16.mxu0 0
      %3083 = vmatpush1.bf16.msra.mxu0 0
      %3084 = vmatprep.subr.bf16.mxu0 0
      %3085 = vmatpush1.bf16.msra.mxu0 0
      %3086 = vmatprep.subr.bf16.mxu0 0
      %3087 = vmatpush1.bf16.msra.mxu0 0
      %3088 = vmatprep.subr.bf16.mxu0 0
      %3089 = vmatpush1.bf16.msra.mxu0 0
      %3090 = vmatprep.subr.bf16.mxu0 0
      %3091 = vmatpush1.bf16.msra.mxu0 0
      %3092 = vmatprep.subr.bf16.mxu0 0
      %3093 = vmatpush1.bf16.msra.mxu0 0
      %3094 = vmatprep.mubr.bf16.mxu0 0
      %3095 = vmatmul.mubr.bf16.gmra.mrb[0].mxu0 %v3057
      %v3096 = vpop.f32.mrb[0].mxu0
      %v3097 = vadd.f32 0.0, %v3096
      %v3098 = vpop.f32.mrb[0].mxu0
      %v3099 = vpop.f32.mrb[0].mxu0
      %v3100 = vpop.f32.mrb[0].mxu0
      %3101 = vdwg.mxu0
      %3110 = vrot.lane.b32.xlu0 %v1881, 4
      %v3111 = vpop.permute.xlu0 %3110
      %3112 = vrot.lane.b32.xlu0 %v1929, 4
      %v3113 = vpop.permute.xlu0 %3112
      %3114 = vrot.lane.b32.xlu0 %v1977, 4
      %v3115 = vpop.permute.xlu0 %3114
      %3116 = vrot.lane.b32.xlu0 %v2025, 4
      %v3117 = vpop.permute.xlu0 %3116
      %3118 = vrot.lane.b32.xlu0 %v2073, 4
      %v3119 = vpop.permute.xlu0 %3118
      %3120 = vrot.lane.b32.xlu0 %v2121, 4
      %v3121 = vpop.permute.xlu0 %3120
      %3122 = vrot.lane.b32.xlu0 %v2169, 4
      %v3123 = vpop.permute.xlu0 %3122
      %3124 = vrot.lane.b32.xlu0 %v2217, 4
      %v3125 = vpop.permute.xlu0 %3124
      %3142 = vrot.lane.b32.xlu0 %v2761, 8
      %v3143 = vpop.permute.xlu0 %3142
      %3144 = vrot.lane.b32.xlu0 %v2809, 8
      %v3145 = vpop.permute.xlu0 %3144
      %3146 = vrot.lane.b32.xlu0 %v2857, 8
      %v3147 = vpop.permute.xlu0 %3146
      %3148 = vrot.lane.b32.xlu0 %v2905, 8
      %v3149 = vpop.permute.xlu0 %3148
      %3150 = vrot.lane.b32.xlu0 %v2953, 8
      %v3151 = vpop.permute.xlu0 %3150
      %3152 = vrot.lane.b32.xlu0 %v3001, 8
      %v3153 = vpop.permute.xlu0 %3152
      %3154 = vrot.lane.b32.xlu0 %v3049, 8
      %v3155 = vpop.permute.xlu0 %3154
      %3156 = vrot.lane.b32.xlu0 %v3097, 8
      %v3157 = vpop.permute.xlu0 %3156
      %v3166 = vsel %vm462, %v994, %v3111
      %v3167 = vsel %vm462, %v1043, %v3113
      %v3168 = vsel %vm462, %v1092, %v3115
      %v3169 = vsel %vm462, %v1141, %v3117
      %v3170 = vsel %vm462, %v1190, %v3119
      %v3171 = vsel %vm462, %v1239, %v3121
      %v3172 = vsel %vm462, %v1288, %v3123
      %v3173 = vsel %vm462, %v1337, %v3125
      %v3174 = vsel %vm852, %v3166, %v3143
      %v3175 = vsel %vm852, %v3167, %v3145
      %v3176 = vsel %vm852, %v3168, %v3147
      %v3177 = vsel %vm852, %v3169, %v3149
      %v3178 = vsel %vm852, %v3170, %v3151
      %v3179 = vsel %vm852, %v3171, %v3153
      %v3180 = vsel %vm852, %v3172, %v3155
      %v3181 = vsel %vm852, %v3173, %v3157
      %v3182 = vpack.c.bf16 %v3175, %v3174
      %v3183 = vpack.c.bf16 %v3177, %v3176
      %v3184 = vpack.c.bf16 %v3179, %v3178
      %v3185 = vpack.c.bf16 %v3181, %v3180
      %v3186 = vld [vmem:[%s2] sm:$0xf]
      %v3187 = vld [vmem:[%s2 + $0x4] sm:$0x3]
      %v3188 = vlaneseq
      %v3189 = vshrl.u32 %v3188, 7
      %v3190 = vsub.s32 3, %v3189
      %v3191 = vrot.slane %v268, %v3190
      %v3194 = vunpack.c.l.b16 %v3186
      %v3195 = vunpack.c.l.b16 %v3187
      %v3196 = vpack.c.b16 %v3195, %v3194
      %v3198 = vsel %vm277, %v3182, 0
      %v3201 = vsel %vm277, %v3183, 0
      %v3204 = vsel %vm277, %v3184, 0
      %v3207 = vsel %vm277, %v3185, 0
      %v3210 = vsel %vm290, %v3196, 0
      %3212 = vmatprep.subr.bf16.mxu0 0
      %3213 = vmatpush1.bf16.msra.mxu0 %v3210
      %3214 = vmatprep.subr.bf16.mxu0 0
      %3215 = vmatpush1.bf16.msra.mxu0 0
      %3216 = vmatprep.subr.bf16.mxu0 0
      %3217 = vmatpush1.bf16.msra.mxu0 0
      %3218 = vmatprep.subr.bf16.mxu0 0
      %3219 = vmatpush1.bf16.msra.mxu0 0
      %3220 = vmatprep.subr.bf16.mxu0 0
      %3221 = vmatpush1.bf16.msra.mxu0 0
      %3222 = vmatprep.subr.bf16.mxu0 0
      %3223 = vmatpush1.bf16.msra.mxu0 0
      %3224 = vmatprep.subr.bf16.mxu0 0
      %3225 = vmatpush1.bf16.msra.mxu0 0
      %3226 = vmatprep.subr.bf16.mxu0 0
      %3227 = vmatpush1.bf16.msra.mxu0 0
      %3228 = vmatprep.subr.bf16.mxu0 0
      %3229 = vmatpush1.bf16.msra.mxu0 0
      %3230 = vmatprep.subr.bf16.mxu0 0
      %3231 = vmatpush1.bf16.msra.mxu0 0
      %3232 = vmatprep.subr.bf16.mxu0 0
      %3233 = vmatpush1.bf16.msra.mxu0 0
      %3234 = vmatprep.subr.bf16.mxu0 0
      %3235 = vmatpush1.bf16.msra.mxu0 0
      %3236 = vmatprep.subr.bf16.mxu0 0
      %3237 = vmatpush1.bf16.msra.mxu0 0
      %3238 = vmatprep.subr.bf16.mxu0 0
      %3239 = vmatpush1.bf16.msra.mxu0 0
      %3240 = vmatprep.subr.bf16.mxu0 0
      %3241 = vmatpush1.bf16.msra.mxu0 0
      %3242 = vmatprep.subr.bf16.mxu0 0
      %3243 = vmatpush1.bf16.msra.mxu0 0
      %3244 = vmatprep.mubr.bf16.mxu0 0
      %3245 = vmatmul.mubr.bf16.gmra.mrb[0].mxu0 %v3198
      %v3246 = vpop.f32.mrb[0].mxu0
      %v3247 = vadd.f32 %v3191, %v3246
      %v3248 = vpop.f32.mrb[0].mxu0
      %v3249 = vpop.f32.mrb[0].mxu0
      %v3250 = vadd.f32 %v3191, %v3249
      %v3251 = vpop.f32.mrb[0].mxu0
      %3252 = vmatprep.mubr.bf16.mxu0 0
      %3253 = vmatmul.mubr.bf16.gmra.mrb[0].mxu0 %v3201
      %v3254 = vpop.f32.mrb[0].mxu0
      %v3255 = vadd.f32 %v3191, %v3254
      %v3256 = vpop.f32.mrb[0].mxu0
      %v3257 = vpop.f32.mrb[0].mxu0
      %v3258 = vadd.f32 %v3191, %v3257
      %v3259 = vpop.f32.mrb[0].mxu0
      %3260 = vmatprep.mubr.bf16.mxu0 0
      %3261 = vmatmul.mubr.bf16.gmra.mrb[0].mxu0 %v3204
      %v3262 = vpop.f32.mrb[0].mxu0
      %v3263 = vadd.f32 %v3191, %v3262
      %v3264 = vpop.f32.mrb[0].mxu0
      %v3265 = vpop.f32.mrb[0].mxu0
      %v3266 = vadd.f32 %v3191, %v3265
      %v3267 = vpop.f32.mrb[0].mxu0
      %3268 = vmatprep.mubr.bf16.mxu0 0
      %3269 = vmatmul.mubr.bf16.gmra.mrb[0].mxu0 %v3207
      %v3270 = vpop.f32.mrb[0].mxu0
      %v3271 = vadd.f32 %v3191, %v3270
      %v3272 = vpop.f32.mrb[0].mxu0
      %v3273 = vpop.f32.mrb[0].mxu0
      %v3274 = vadd.f32 %v3191, %v3273
      %v3275 = vpop.f32.mrb[0].mxu0
      %3276 = vdwg.mxu0
      %v3277 = vadd.f32 %v3247, %v256
      %v3278 = vadd.f32 %v3250, %v257
      %v3279 = vadd.f32 %v3255, %v258
      %v3280 = vadd.f32 %v3258, %v259
      %v3281 = vadd.f32 %v3263, %v260
      %v3282 = vadd.f32 %v3266, %v261
      %v3283 = vadd.f32 %v3271, %v262
      %v3284 = vadd.f32 %v3274, %v263
      %v3285 = vsel %vm277, %v3277, 0.0
      %3286 = vadd.xlane.f32.xlu0 %v3285
      %v3287 = vpop.xlane.xlu0 %3286
      %v3288 = vsel %vm277, %v3278, 0.0
      %3289 = vadd.xlane.f32.xlu0 %v3288
      %v3290 = vpop.xlane.xlu0 %3289
      %v3291 = vsel %vm277, %v3279, 0.0
      %3292 = vadd.xlane.f32.xlu0 %v3291
      %v3293 = vpop.xlane.xlu0 %3292
      %v3294 = vsel %vm277, %v3280, 0.0
      %3295 = vadd.xlane.f32.xlu0 %v3294
      %v3296 = vpop.xlane.xlu0 %3295
      %v3297 = vsel %vm277, %v3281, 0.0
      %3298 = vadd.xlane.f32.xlu0 %v3297
      %v3299 = vpop.xlane.xlu0 %3298
      %v3300 = vsel %vm277, %v3282, 0.0
      %3301 = vadd.xlane.f32.xlu0 %v3300
      %v3302 = vpop.xlane.xlu0 %3301
      %v3303 = vsel %vm277, %v3283, 0.0
      %3304 = vadd.xlane.f32.xlu0 %v3303
      %v3305 = vpop.xlane.xlu0 %3304
      %v3306 = vsel %vm277, %v3284, 0.0
      %3307 = vadd.xlane.f32.xlu0 %v3306
      %v3308 = vpop.xlane.xlu0 %3307
      %v3309 = vrcp.pop 12.0
      %v3310 = vmul.f32 %v3287, %v3309
      %v3311 = vmul.f32 %v3290, %v3309
      %v3312 = vmul.f32 %v3293, %v3309
      %v3313 = vmul.f32 %v3296, %v3309
      %v3314 = vmul.f32 %v3299, %v3309
      %v3315 = vmul.f32 %v3302, %v3309
      %v3316 = vmul.f32 %v3305, %v3309
      %v3317 = vmul.f32 %v3308, %v3309
      %v3318 = vsub.f32 %v3277, %v3310
      %v3319 = vsub.f32 %v3278, %v3311
      %v3320 = vsub.f32 %v3279, %v3312
      %v3321 = vsub.f32 %v3280, %v3313
      %v3322 = vsub.f32 %v3281, %v3314
      %v3323 = vsub.f32 %v3282, %v3315
      %v3324 = vsub.f32 %v3283, %v3316
      %v3325 = vsub.f32 %v3284, %v3317
      %v3326 = vmul.f32 %v3318, %v3318
      %v3327 = vmul.f32 %v3319, %v3319
      %v3328 = vmul.f32 %v3320, %v3320
      %v3329 = vmul.f32 %v3321, %v3321
      %v3330 = vmul.f32 %v3322, %v3322
      %v3331 = vmul.f32 %v3323, %v3323
      %v3332 = vmul.f32 %v3324, %v3324
      %v3333 = vmul.f32 %v3325, %v3325
      %v3334 = vsel %vm277, %v3326, 0.0
      %3335 = vadd.xlane.f32.xlu0 %v3334
      %v3336 = vpop.xlane.xlu0 %3335
      %v3337 = vsel %vm277, %v3327, 0.0
      %3338 = vadd.xlane.f32.xlu0 %v3337
      %v3339 = vpop.xlane.xlu0 %3338
      %v3340 = vsel %vm277, %v3328, 0.0
      %3341 = vadd.xlane.f32.xlu0 %v3340
      %v3342 = vpop.xlane.xlu0 %3341
      %v3343 = vsel %vm277, %v3329, 0.0
      %3344 = vadd.xlane.f32.xlu0 %v3343
      %v3345 = vpop.xlane.xlu0 %3344
      %v3346 = vsel %vm277, %v3330, 0.0
      %3347 = vadd.xlane.f32.xlu0 %v3346
      %v3348 = vpop.xlane.xlu0 %3347
      %v3349 = vsel %vm277, %v3331, 0.0
      %3350 = vadd.xlane.f32.xlu0 %v3349
      %v3351 = vpop.xlane.xlu0 %3350
      %v3352 = vsel %vm277, %v3332, 0.0
      %3353 = vadd.xlane.f32.xlu0 %v3352
      %v3354 = vpop.xlane.xlu0 %3353
      %v3355 = vsel %vm277, %v3333, 0.0
      %3356 = vadd.xlane.f32.xlu0 %v3355
      %v3357 = vpop.xlane.xlu0 %3356
      %v3358 = vmul.f32 %v3336, %v3309
      %v3359 = vmul.f32 %v3339, %v3309
      %v3360 = vmul.f32 %v3342, %v3309
      %v3361 = vmul.f32 %v3345, %v3309
      %v3362 = vmul.f32 %v3348, %v3309
      %v3363 = vmul.f32 %v3351, %v3309
      %v3364 = vmul.f32 %v3354, %v3309
      %v3365 = vmul.f32 %v3357, %v3309
      %v3366 = vadd.f32 %v3358, 1e-05
      %v3367 = vadd.f32 %v3359, 1e-05
      %v3368 = vadd.f32 %v3360, 1e-05
      %v3369 = vadd.f32 %v3361, 1e-05
      %v3370 = vadd.f32 %v3362, 1e-05
      %v3371 = vadd.f32 %v3363, 1e-05
      %v3372 = vadd.f32 %v3364, 1e-05
      %v3373 = vadd.f32 %v3365, 1e-05
      %v3374 = vrsqrt.pop %v3366
      %v3375 = vrsqrt.pop %v3367
      %v3376 = vrsqrt.pop %v3368
      %v3377 = vrsqrt.pop %v3369
      %v3378 = vrsqrt.pop %v3370
      %v3379 = vrsqrt.pop %v3371
      %v3380 = vrsqrt.pop %v3372
      %v3381 = vrsqrt.pop %v3373
      %v3382 = vmul.f32 %v3318, %v3374
      %v3383 = vmul.f32 %v3319, %v3375
      %v3384 = vmul.f32 %v3320, %v3376
      %v3385 = vmul.f32 %v3321, %v3377
      %v3386 = vmul.f32 %v3322, %v3378
      %v3387 = vmul.f32 %v3323, %v3379
      %v3388 = vmul.f32 %v3324, %v3380
      %v3389 = vmul.f32 %v3325, %v3381
      %v3390 = vlaneseq
      %v3391 = vshrl.u32 %v3390, 7
      %v3392 = vsub.s32 6, %v3391
      %v3393 = vrot.slane %v268, %v3392
      %v3394 = vmul.f32 %v3382, %v3393
      %v3395 = vmul.f32 %v3383, %v3393
      %v3396 = vmul.f32 %v3384, %v3393
      %v3397 = vmul.f32 %v3385, %v3393
      %v3398 = vmul.f32 %v3386, %v3393
      %v3399 = vmul.f32 %v3387, %v3393
      %v3400 = vmul.f32 %v3388, %v3393
      %v3401 = vmul.f32 %v3389, %v3393
      %v3402 = vlaneseq
      %v3403 = vshrl.u32 %v3402, 7
      %v3404 = vsub.s32 7, %v3403
      %v3405 = vrot.slane %v268, %v3404
      %v3406 = vadd.f32 %v3394, %v3405
      %v3407 = vadd.f32 %v3395, %v3405
      %v3408 = vadd.f32 %v3396, %v3405
      %v3409 = vadd.f32 %v3397, %v3405
      %v3410 = vadd.f32 %v3398, %v3405
      %v3411 = vadd.f32 %v3399, %v3405
      %v3412 = vadd.f32 %v3400, %v3405
      %v3413 = vadd.f32 %v3401, %v3405
      %v3414 = vpack.c.bf16 %v3407, %v3406
      %v3415 = vpack.c.bf16 %v3409, %v3408
      %v3416 = vpack.c.bf16 %v3411, %v3410
      %v3417 = vpack.c.bf16 %v3413, %v3412
      %v3418 = vld [vmem:[%s3] sm:$0xf]
      %v3419 = vld [vmem:[%s3 + $0x4] sm:$0x3]
      %v3420 = vlaneseq
      %v3421 = vshrl.u32 %v3420, 7
      %v3422 = vsub.s32 4, %v3421
      %v3423 = vrot.slane %v268, %v3422
      %v3426 = vunpack.c.l.b16 %v3418
      %v3427 = vunpack.c.l.b16 %v3419
      %v3428 = vpack.c.b16 %v3427, %v3426
      %v3430 = vsel %vm277, %v3414, 0
      %v3433 = vsel %vm277, %v3415, 0
      %v3436 = vsel %vm277, %v3416, 0
      %v3439 = vsel %vm277, %v3417, 0
      %v3442 = vsel %vm290, %v3428, 0
      %3444 = vmatprep.subr.bf16.mxu0 0
      %3445 = vmatpush1.bf16.msra.mxu0 %v3442
      %3446 = vmatprep.subr.bf16.mxu0 0
      %3447 = vmatpush1.bf16.msra.mxu0 0
      %3448 = vmatprep.subr.bf16.mxu0 0
      %3449 = vmatpush1.bf16.msra.mxu0 0
      %3450 = vmatprep.subr.bf16.mxu0 0
      %3451 = vmatpush1.bf16.msra.mxu0 0
      %3452 = vmatprep.subr.bf16.mxu0 0
      %3453 = vmatpush1.bf16.msra.mxu0 0
      %3454 = vmatprep.subr.bf16.mxu0 0
      %3455 = vmatpush1.bf16.msra.mxu0 0
      %3456 = vmatprep.subr.bf16.mxu0 0
      %3457 = vmatpush1.bf16.msra.mxu0 0
      %3458 = vmatprep.subr.bf16.mxu0 0
      %3459 = vmatpush1.bf16.msra.mxu0 0
      %3460 = vmatprep.subr.bf16.mxu0 0
      %3461 = vmatpush1.bf16.msra.mxu0 0
      %3462 = vmatprep.subr.bf16.mxu0 0
      %3463 = vmatpush1.bf16.msra.mxu0 0
      %3464 = vmatprep.subr.bf16.mxu0 0
      %3465 = vmatpush1.bf16.msra.mxu0 0
      %3466 = vmatprep.subr.bf16.mxu0 0
      %3467 = vmatpush1.bf16.msra.mxu0 0
      %3468 = vmatprep.subr.bf16.mxu0 0
      %3469 = vmatpush1.bf16.msra.mxu0 0
      %3470 = vmatprep.subr.bf16.mxu0 0
      %3471 = vmatpush1.bf16.msra.mxu0 0
      %3472 = vmatprep.subr.bf16.mxu0 0
      %3473 = vmatpush1.bf16.msra.mxu0 0
      %3474 = vmatprep.subr.bf16.mxu0 0
      %3475 = vmatpush1.bf16.msra.mxu0 0
      %3476 = vmatprep.mubr.bf16.mxu0 0
      %3477 = vmatmul.mubr.bf16.gmra.mrb[0].mxu0 %v3430
      %v3478 = vpop.f32.mrb[0].mxu0
      %v3479 = vadd.f32 %v3423, %v3478
      %v3480 = vpop.f32.mrb[0].mxu0
      %v3481 = vpop.f32.mrb[0].mxu0
      %v3482 = vadd.f32 %v3423, %v3481
      %v3483 = vpop.f32.mrb[0].mxu0
      %3484 = vmatprep.mubr.bf16.mxu0 0
      %3485 = vmatmul.mubr.bf16.gmra.mrb[0].mxu0 %v3433
      %v3486 = vpop.f32.mrb[0].mxu0
      %v3487 = vadd.f32 %v3423, %v3486
      %v3488 = vpop.f32.mrb[0].mxu0
      %v3489 = vpop.f32.mrb[0].mxu0
      %v3490 = vadd.f32 %v3423, %v3489
      %v3491 = vpop.f32.mrb[0].mxu0
      %3492 = vmatprep.mubr.bf16.mxu0 0
      %3493 = vmatmul.mubr.bf16.gmra.mrb[0].mxu0 %v3436
      %v3494 = vpop.f32.mrb[0].mxu0
      %v3495 = vadd.f32 %v3423, %v3494
      %v3496 = vpop.f32.mrb[0].mxu0
      %v3497 = vpop.f32.mrb[0].mxu0
      %v3498 = vadd.f32 %v3423, %v3497
      %v3499 = vpop.f32.mrb[0].mxu0
      %3500 = vmatprep.mubr.bf16.mxu0 0
      %3501 = vmatmul.mubr.bf16.gmra.mrb[0].mxu0 %v3439
      %v3502 = vpop.f32.mrb[0].mxu0
      %v3503 = vadd.f32 %v3423, %v3502
      %v3504 = vpop.f32.mrb[0].mxu0
      %v3505 = vpop.f32.mrb[0].mxu0
      %v3506 = vadd.f32 %v3423, %v3505
      %v3507 = vpop.f32.mrb[0].mxu0
      %3508 = vdwg.mxu0
      %v3509 = vmul.f32 %v3479, 0.5
      %v3510 = vmul.f32 %v3482, 0.5
      %v3511 = vmul.f32 %v3487, 0.5
      %v3512 = vmul.f32 %v3490, 0.5
      %v3513 = vmul.f32 %v3495, 0.5
      %v3514 = vmul.f32 %v3498, 0.5
      %v3515 = vmul.f32 %v3503, 0.5
      %v3516 = vmul.f32 %v3506, 0.5
      %v3517 = vmul.f32 %v3479, 0.70710677
      %v3518 = vmul.f32 %v3482, 0.70710677
      %v3519 = vmul.f32 %v3487, 0.70710677
      %v3520 = vmul.f32 %v3490, 0.70710677
      %v3521 = vmul.f32 %v3495, 0.70710677
      %v3522 = vmul.f32 %v3498, 0.70710677
      %v3523 = vmul.f32 %v3503, 0.70710677
      %v3524 = vmul.f32 %v3506, 0.70710677
      %v3525 = vand.u32 2147483647, %v3517
      %v3526 = vand.u32 2147483647, %v3518
      %v3527 = vand.u32 2147483647, %v3519
      %v3528 = vand.u32 2147483647, %v3520
      %v3529 = vand.u32 2147483647, %v3521
      %v3530 = vand.u32 2147483647, %v3522
      %v3531 = vand.u32 2147483647, %v3523
      %v3532 = vand.u32 2147483647, %v3524
      %v3533 = vmul.f32 %v3525, 0.3275911
      %v3534 = vmul.f32 %v3526, 0.3275911
      %v3535 = vmul.f32 %v3527, 0.3275911
      %v3536 = vmul.f32 %v3528, 0.3275911
      %v3537 = vmul.f32 %v3529, 0.3275911
      %v3538 = vmul.f32 %v3530, 0.3275911
      %v3539 = vmul.f32 %v3531, 0.3275911
      %v3540 = vmul.f32 %v3532, 0.3275911
      %v3541 = vadd.f32 %v3533, 1.0
      %v3542 = vadd.f32 %v3534, 1.0
      %v3543 = vadd.f32 %v3535, 1.0
      %v3544 = vadd.f32 %v3536, 1.0
      %v3545 = vadd.f32 %v3537, 1.0
      %v3546 = vadd.f32 %v3538, 1.0
      %v3547 = vadd.f32 %v3539, 1.0
      %v3548 = vadd.f32 %v3540, 1.0
      %v3549 = vrcp.pop %v3541
      %v3550 = vmul.f32 1.0, %v3549
      %v3551 = vrcp.pop %v3542
      %v3552 = vmul.f32 1.0, %v3551
      %v3553 = vrcp.pop %v3543
      %v3554 = vmul.f32 1.0, %v3553
      %v3555 = vrcp.pop %v3544
      %v3556 = vmul.f32 1.0, %v3555
      %v3557 = vrcp.pop %v3545
      %v3558 = vmul.f32 1.0, %v3557
      %v3559 = vrcp.pop %v3546
      %v3560 = vmul.f32 1.0, %v3559
      %v3561 = vrcp.pop %v3547
      %v3562 = vmul.f32 1.0, %v3561
      %v3563 = vrcp.pop %v3548
      %v3564 = vmul.f32 1.0, %v3563
      %v3565 = vmul.f32 %v3550, 1.0614054
      %v3566 = vmul.f32 %v3552, 1.0614054
      %v3567 = vmul.f32 %v3554, 1.0614054
      %v3568 = vmul.f32 %v3556, 1.0614054
      %v3569 = vmul.f32 %v3558, 1.0614054
      %v3570 = vmul.f32 %v3560, 1.0614054
      %v3571 = vmul.f32 %v3562, 1.0614054
      %v3572 = vmul.f32 %v3564, 1.0614054
      %v3573 = vadd.f32 %v3565, -1.4531521
      %v3574 = vadd.f32 %v3566, -1.4531521
      %v3575 = vadd.f32 %v3567, -1.4531521
      %v3576 = vadd.f32 %v3568, -1.4531521
      %v3577 = vadd.f32 %v3569, -1.4531521
      %v3578 = vadd.f32 %v3570, -1.4531521
      %v3579 = vadd.f32 %v3571, -1.4531521
      %v3580 = vadd.f32 %v3572, -1.4531521
      %v3581 = vmul.f32 %v3573, %v3550
      %v3582 = vmul.f32 %v3574, %v3552
      %v3583 = vmul.f32 %v3575, %v3554
      %v3584 = vmul.f32 %v3576, %v3556
      %v3585 = vmul.f32 %v3577, %v3558
      %v3586 = vmul.f32 %v3578, %v3560
      %v3587 = vmul.f32 %v3579, %v3562
      %v3588 = vmul.f32 %v3580, %v3564
      %v3589 = vadd.f32 %v3581, 1.4214138
      %v3590 = vadd.f32 %v3582, 1.4214138
      %v3591 = vadd.f32 %v3583, 1.4214138
      %v3592 = vadd.f32 %v3584, 1.4214138
      %v3593 = vadd.f32 %v3585, 1.4214138
      %v3594 = vadd.f32 %v3586, 1.4214138
      %v3595 = vadd.f32 %v3587, 1.4214138
      %v3596 = vadd.f32 %v3588, 1.4214138
      %v3597 = vmul.f32 %v3589, %v3550
      %v3598 = vmul.f32 %v3590, %v3552
      %v3599 = vmul.f32 %v3591, %v3554
      %v3600 = vmul.f32 %v3592, %v3556
      %v3601 = vmul.f32 %v3593, %v3558
      %v3602 = vmul.f32 %v3594, %v3560
      %v3603 = vmul.f32 %v3595, %v3562
      %v3604 = vmul.f32 %v3596, %v3564
      %v3605 = vadd.f32 %v3597, -0.28449672
      %v3606 = vadd.f32 %v3598, -0.28449672
      %v3607 = vadd.f32 %v3599, -0.28449672
      %v3608 = vadd.f32 %v3600, -0.28449672
      %v3609 = vadd.f32 %v3601, -0.28449672
      %v3610 = vadd.f32 %v3602, -0.28449672
      %v3611 = vadd.f32 %v3603, -0.28449672
      %v3612 = vadd.f32 %v3604, -0.28449672
      %v3613 = vmul.f32 %v3605, %v3550
      %v3614 = vmul.f32 %v3606, %v3552
      %v3615 = vmul.f32 %v3607, %v3554
      %v3616 = vmul.f32 %v3608, %v3556
      %v3617 = vmul.f32 %v3609, %v3558
      %v3618 = vmul.f32 %v3610, %v3560
      %v3619 = vmul.f32 %v3611, %v3562
      %v3620 = vmul.f32 %v3612, %v3564
      %v3621 = vadd.f32 %v3613, 0.2548296
      %v3622 = vadd.f32 %v3614, 0.2548296
      %v3623 = vadd.f32 %v3615, 0.2548296
      %v3624 = vadd.f32 %v3616, 0.2548296
      %v3625 = vadd.f32 %v3617, 0.2548296
      %v3626 = vadd.f32 %v3618, 0.2548296
      %v3627 = vadd.f32 %v3619, 0.2548296
      %v3628 = vadd.f32 %v3620, 0.2548296
      %v3629 = vmul.f32 %v3621, %v3550
      %v3630 = vmul.f32 %v3622, %v3552
      %v3631 = vmul.f32 %v3623, %v3554
      %v3632 = vmul.f32 %v3624, %v3556
      %v3633 = vmul.f32 %v3625, %v3558
      %v3634 = vmul.f32 %v3626, %v3560
      %v3635 = vmul.f32 %v3627, %v3562
      %v3636 = vmul.f32 %v3628, %v3564
      %v3637 = vmul.f32 %v3525, %v3525
      %v3638 = vmul.f32 %v3526, %v3526
      %v3639 = vmul.f32 %v3527, %v3527
      %v3640 = vmul.f32 %v3528, %v3528
      %v3641 = vmul.f32 %v3529, %v3529
      %v3642 = vmul.f32 %v3530, %v3530
      %v3643 = vmul.f32 %v3531, %v3531
      %v3644 = vmul.f32 %v3532, %v3532
      %v3645 = vsub.f32 0.0, %v3637
      %v3646 = vsub.f32 0.0, %v3638
      %v3647 = vsub.f32 0.0, %v3639
      %v3648 = vsub.f32 0.0, %v3640
      %v3649 = vsub.f32 0.0, %v3641
      %v3650 = vsub.f32 0.0, %v3642
      %v3651 = vsub.f32 0.0, %v3643
      %v3652 = vsub.f32 0.0, %v3644
      %v3653 = vmul.f32 %v3645, 1.442695
      %v3654 = vpow.pop %v3653
      %v3655 = vmul.f32 %v3646, 1.442695
      %v3656 = vpow.pop %v3655
      %v3657 = vmul.f32 %v3647, 1.442695
      %v3658 = vpow.pop %v3657
      %v3659 = vmul.f32 %v3648, 1.442695
      %v3660 = vpow.pop %v3659
      %v3661 = vmul.f32 %v3649, 1.442695
      %v3662 = vpow.pop %v3661
      %v3663 = vmul.f32 %v3650, 1.442695
      %v3664 = vpow.pop %v3663
      %v3665 = vmul.f32 %v3651, 1.442695
      %v3666 = vpow.pop %v3665
      %v3667 = vmul.f32 %v3652, 1.442695
      %v3668 = vpow.pop %v3667
      %v3669 = vmul.f32 %v3629, %v3654
      %v3670 = vmul.f32 %v3630, %v3656
      %v3671 = vmul.f32 %v3631, %v3658
      %v3672 = vmul.f32 %v3632, %v3660
      %v3673 = vmul.f32 %v3633, %v3662
      %v3674 = vmul.f32 %v3634, %v3664
      %v3675 = vmul.f32 %v3635, %v3666
      %v3676 = vmul.f32 %v3636, %v3668
      %v3677 = vsub.f32 1.0, %v3669
      %v3678 = vsub.f32 1.0, %v3670
      %v3679 = vsub.f32 1.0, %v3671
      %v3680 = vsub.f32 1.0, %v3672
      %v3681 = vsub.f32 1.0, %v3673
      %v3682 = vsub.f32 1.0, %v3674
      %v3683 = vsub.f32 1.0, %v3675
      %v3684 = vsub.f32 1.0, %v3676
      %vm3685 = vcmp.lt.f32.partialorder %v3517, 0.0
      %vm3686 = vcmp.lt.f32.partialorder %v3518, 0.0
      %vm3687 = vcmp.lt.f32.partialorder %v3519, 0.0
      %vm3688 = vcmp.lt.f32.partialorder %v3520, 0.0
      %vm3689 = vcmp.lt.f32.partialorder %v3521, 0.0
      %vm3690 = vcmp.lt.f32.partialorder %v3522, 0.0
      %vm3691 = vcmp.lt.f32.partialorder %v3523, 0.0
      %vm3692 = vcmp.lt.f32.partialorder %v3524, 0.0
      %v3693 = vsub.f32 0.0, %v3677
      %v3694 = vsub.f32 0.0, %v3678
      %v3695 = vsub.f32 0.0, %v3679
      %v3696 = vsub.f32 0.0, %v3680
      %v3697 = vsub.f32 0.0, %v3681
      %v3698 = vsub.f32 0.0, %v3682
      %v3699 = vsub.f32 0.0, %v3683
      %v3700 = vsub.f32 0.0, %v3684
      %v3701 = vsel %vm3685, %v3693, %v3677
      %v3702 = vsel %vm3686, %v3694, %v3678
      %v3703 = vsel %vm3687, %v3695, %v3679
      %v3704 = vsel %vm3688, %v3696, %v3680
      %v3705 = vsel %vm3689, %v3697, %v3681
      %v3706 = vsel %vm3690, %v3698, %v3682
      %v3707 = vsel %vm3691, %v3699, %v3683
      %v3708 = vsel %vm3692, %v3700, %v3684
      %v3709 = vadd.f32 %v3701, 1.0
      %v3710 = vadd.f32 %v3702, 1.0
      %v3711 = vadd.f32 %v3703, 1.0
      %v3712 = vadd.f32 %v3704, 1.0
      %v3713 = vadd.f32 %v3705, 1.0
      %v3714 = vadd.f32 %v3706, 1.0
      %v3715 = vadd.f32 %v3707, 1.0
      %v3716 = vadd.f32 %v3708, 1.0
      %v3717 = vmul.f32 %v3509, %v3709
      %v3718 = vmul.f32 %v3510, %v3710
      %v3719 = vmul.f32 %v3511, %v3711
      %v3720 = vmul.f32 %v3512, %v3712
      %v3721 = vmul.f32 %v3513, %v3713
      %v3722 = vmul.f32 %v3514, %v3714
      %v3723 = vmul.f32 %v3515, %v3715
      %v3724 = vmul.f32 %v3516, %v3716
      %v3725 = vpack.c.bf16 %v3718, %v3717
      %v3726 = vpack.c.bf16 %v3720, %v3719
      %v3727 = vpack.c.bf16 %v3722, %v3721
      %v3728 = vpack.c.bf16 %v3724, %v3723
      %v3729 = vld [vmem:[%s4] sm:$0xf]
      %v3730 = vld [vmem:[%s4 + $0x4] sm:$0xf]
      %v3731 = vld [vmem:[%s4 + $0x8] sm:$0xf]
      %v3732 = vlaneseq
      %v3733 = vshrl.u32 %v3732, 7
      %v3734 = vsub.s32 5, %v3733
      %v3735 = vrot.slane %v268, %v3734
      %v3739 = vunpack.c.l.b16 %v3729
      %v3740 = vunpack.c.l.b16 %v3730
      %v3741 = vunpack.c.l.b16 %v3731
      %v3742 = vpack.c.b16 %v3740, %v3739
      %v3743 = vpack.c.b16 %v3741, %v3741
      %vm3745 = vcmask 195584
      %v3747 = vsel %vm3745, %v3725, 0
      %v3750 = vsel %vm3745, %v3726, 0
      %v3753 = vsel %vm3745, %v3727, 0
      %v3756 = vsel %vm3745, %v3728, 0
      %v3759 = vsel %vm955, %v3743, 0
      %3761 = vmatprep.subr.bf16.mxu0 0
      %3762 = vmatpush1.bf16.msra.mxu0 %v3742
      %3763 = vmatprep.subr.bf16.mxu0 0
      %3764 = vmatpush1.bf16.msra.mxu0 %v3759
      %3765 = vmatprep.subr.bf16.mxu0 0
      %3766 = vmatpush1.bf16.msra.mxu0 0
      %3767 = vmatprep.subr.bf16.mxu0 0
      %3768 = vmatpush1.bf16.msra.mxu0 0
      %3769 = vmatprep.subr.bf16.mxu0 0
      %3770 = vmatpush1.bf16.msra.mxu0 0
      %3771 = vmatprep.subr.bf16.mxu0 0
      %3772 = vmatpush1.bf16.msra.mxu0 0
      %3773 = vmatprep.subr.bf16.mxu0 0
      %3774 = vmatpush1.bf16.msra.mxu0 0
      %3775 = vmatprep.subr.bf16.mxu0 0
      %3776 = vmatpush1.bf16.msra.mxu0 0
      %3777 = vmatprep.subr.bf16.mxu0 0
      %3778 = vmatpush1.bf16.msra.mxu0 0
      %3779 = vmatprep.subr.bf16.mxu0 0
      %3780 = vmatpush1.bf16.msra.mxu0 0
      %3781 = vmatprep.subr.bf16.mxu0 0
      %3782 = vmatpush1.bf16.msra.mxu0 0
      %3783 = vmatprep.subr.bf16.mxu0 0
      %3784 = vmatpush1.bf16.msra.mxu0 0
      %3785 = vmatprep.subr.bf16.mxu0 0
      %3786 = vmatpush1.bf16.msra.mxu0 0
      %3787 = vmatprep.subr.bf16.mxu0 0
      %3788 = vmatpush1.bf16.msra.mxu0 0
      %3789 = vmatprep.subr.bf16.mxu0 0
      %3790 = vmatpush1.bf16.msra.mxu0 0
      %3791 = vmatprep.subr.bf16.mxu0 0
      %3792 = vmatpush1.bf16.msra.mxu0 0
      %3793 = vmatprep.mubr.bf16.mxu0 0
      %3794 = vmatmul.mubr.bf16.gmra.mrb[0].mxu0 %v3747
      %v3795 = vpop.f32.mrb[0].mxu0
      %v3796 = vadd.f32 %v3735, %v3795
      %v3797 = vpop.f32.mrb[0].mxu0
      %v3798 = vpop.f32.mrb[0].mxu0
      %v3799 = vadd.f32 %v3735, %v3798
      %v3800 = vpop.f32.mrb[0].mxu0
      %3801 = vmatprep.mubr.bf16.mxu0 0
      %3802 = vmatmul.mubr.bf16.gmra.mrb[0].mxu0 %v3750
      %v3803 = vpop.f32.mrb[0].mxu0
      %v3804 = vadd.f32 %v3735, %v3803
      %v3805 = vpop.f32.mrb[0].mxu0
      %v3806 = vpop.f32.mrb[0].mxu0
      %v3807 = vadd.f32 %v3735, %v3806
      %v3808 = vpop.f32.mrb[0].mxu0
      %3809 = vmatprep.mubr.bf16.mxu0 0
      %3810 = vmatmul.mubr.bf16.gmra.mrb[0].mxu0 %v3753
      %v3811 = vpop.f32.mrb[0].mxu0
      %v3812 = vadd.f32 %v3735, %v3811
      %v3813 = vpop.f32.mrb[0].mxu0
      %v3814 = vpop.f32.mrb[0].mxu0
      %v3815 = vadd.f32 %v3735, %v3814
      %v3816 = vpop.f32.mrb[0].mxu0
      %3817 = vmatprep.mubr.bf16.mxu0 0
      %3818 = vmatmul.mubr.bf16.gmra.mrb[0].mxu0 %v3756
      %v3819 = vpop.f32.mrb[0].mxu0
      %v3820 = vadd.f32 %v3735, %v3819
      %v3821 = vpop.f32.mrb[0].mxu0
      %v3822 = vpop.f32.mrb[0].mxu0
      %v3823 = vadd.f32 %v3735, %v3822
      %v3824 = vpop.f32.mrb[0].mxu0
      %3825 = vdwg.mxu0
      %v3826 = vadd.f32 %v3406, %v3796
      %v3827 = vadd.f32 %v3407, %v3799
      %v3828 = vadd.f32 %v3408, %v3804
      %v3829 = vadd.f32 %v3409, %v3807
      %v3830 = vadd.f32 %v3410, %v3812
      %v3831 = vadd.f32 %v3411, %v3815
      %v3832 = vadd.f32 %v3412, %v3820
      %v3833 = vadd.f32 %v3413, %v3823
      %v3834 = vsel %vm277, %v3826, 0.0
      %3835 = vadd.xlane.f32.xlu0 %v3834
      %v3836 = vpop.xlane.xlu0 %3835
      %v3837 = vsel %vm277, %v3827, 0.0
      %3838 = vadd.xlane.f32.xlu0 %v3837
      %v3839 = vpop.xlane.xlu0 %3838
      %v3840 = vsel %vm277, %v3828, 0.0
      %3841 = vadd.xlane.f32.xlu0 %v3840
      %v3842 = vpop.xlane.xlu0 %3841
      %v3843 = vsel %vm277, %v3829, 0.0
      %3844 = vadd.xlane.f32.xlu0 %v3843
      %v3845 = vpop.xlane.xlu0 %3844
      %v3846 = vsel %vm277, %v3830, 0.0
      %3847 = vadd.xlane.f32.xlu0 %v3846
      %v3848 = vpop.xlane.xlu0 %3847
      %v3849 = vsel %vm277, %v3831, 0.0
      %3850 = vadd.xlane.f32.xlu0 %v3849
      %v3851 = vpop.xlane.xlu0 %3850
      %v3852 = vsel %vm277, %v3832, 0.0
      %3853 = vadd.xlane.f32.xlu0 %v3852
      %v3854 = vpop.xlane.xlu0 %3853
      %v3855 = vsel %vm277, %v3833, 0.0
      %3856 = vadd.xlane.f32.xlu0 %v3855
      %v3857 = vpop.xlane.xlu0 %3856
      %v3858 = vmul.f32 %v3836, %v3309
      %v3859 = vmul.f32 %v3839, %v3309
      %v3860 = vmul.f32 %v3842, %v3309
      %v3861 = vmul.f32 %v3845, %v3309
      %v3862 = vmul.f32 %v3848, %v3309
      %v3863 = vmul.f32 %v3851, %v3309
      %v3864 = vmul.f32 %v3854, %v3309
      %v3865 = vmul.f32 %v3857, %v3309
      %v3866 = vsub.f32 %v3826, %v3858
      %v3867 = vsub.f32 %v3827, %v3859
      %v3868 = vsub.f32 %v3828, %v3860
      %v3869 = vsub.f32 %v3829, %v3861
      %v3870 = vsub.f32 %v3830, %v3862
      %v3871 = vsub.f32 %v3831, %v3863
      %v3872 = vsub.f32 %v3832, %v3864
      %v3873 = vsub.f32 %v3833, %v3865
      %v3874 = vmul.f32 %v3866, %v3866
      %v3875 = vmul.f32 %v3867, %v3867
      %v3876 = vmul.f32 %v3868, %v3868
      %v3877 = vmul.f32 %v3869, %v3869
      %v3878 = vmul.f32 %v3870, %v3870
      %v3879 = vmul.f32 %v3871, %v3871
      %v3880 = vmul.f32 %v3872, %v3872
      %v3881 = vmul.f32 %v3873, %v3873
      %v3882 = vsel %vm277, %v3874, 0.0
      %3883 = vadd.xlane.f32.xlu0 %v3882
      %v3884 = vpop.xlane.xlu0 %3883
      %v3885 = vsel %vm277, %v3875, 0.0
      %3886 = vadd.xlane.f32.xlu0 %v3885
      %v3887 = vpop.xlane.xlu0 %3886
      %v3888 = vsel %vm277, %v3876, 0.0
      %3889 = vadd.xlane.f32.xlu0 %v3888
      %v3890 = vpop.xlane.xlu0 %3889
      %v3891 = vsel %vm277, %v3877, 0.0
      %3892 = vadd.xlane.f32.xlu0 %v3891
      %v3893 = vpop.xlane.xlu0 %3892
      %v3894 = vsel %vm277, %v3878, 0.0
      %3895 = vadd.xlane.f32.xlu0 %v3894
      %v3896 = vpop.xlane.xlu0 %3895
      %v3897 = vsel %vm277, %v3879, 0.0
      %3898 = vadd.xlane.f32.xlu0 %v3897
      %v3899 = vpop.xlane.xlu0 %3898
      %v3900 = vsel %vm277, %v3880, 0.0
      %3901 = vadd.xlane.f32.xlu0 %v3900
      %v3902 = vpop.xlane.xlu0 %3901
      %v3903 = vsel %vm277, %v3881, 0.0
      %3904 = vadd.xlane.f32.xlu0 %v3903
      %v3905 = vpop.xlane.xlu0 %3904
      %v3906 = vmul.f32 %v3884, %v3309
      %v3907 = vmul.f32 %v3887, %v3309
      %v3908 = vmul.f32 %v3890, %v3309
      %v3909 = vmul.f32 %v3893, %v3309
      %v3910 = vmul.f32 %v3896, %v3309
      %v3911 = vmul.f32 %v3899, %v3309
      %v3912 = vmul.f32 %v3902, %v3309
      %v3913 = vmul.f32 %v3905, %v3309
      %v3914 = vadd.f32 %v3906, 1e-05
      %v3915 = vadd.f32 %v3907, 1e-05
      %v3916 = vadd.f32 %v3908, 1e-05
      %v3917 = vadd.f32 %v3909, 1e-05
      %v3918 = vadd.f32 %v3910, 1e-05
      %v3919 = vadd.f32 %v3911, 1e-05
      %v3920 = vadd.f32 %v3912, 1e-05
      %v3921 = vadd.f32 %v3913, 1e-05
      %v3922 = vrsqrt.pop %v3914
      %v3923 = vrsqrt.pop %v3915
      %v3924 = vrsqrt.pop %v3916
      %v3925 = vrsqrt.pop %v3917
      %v3926 = vrsqrt.pop %v3918
      %v3927 = vrsqrt.pop %v3919
      %v3928 = vrsqrt.pop %v3920
      %v3929 = vrsqrt.pop %v3921
      %v3930 = vmul.f32 %v3866, %v3922
      %v3931 = vmul.f32 %v3867, %v3923
      %v3932 = vmul.f32 %v3868, %v3924
      %v3933 = vmul.f32 %v3869, %v3925
      %v3934 = vmul.f32 %v3870, %v3926
      %v3935 = vmul.f32 %v3871, %v3927
      %v3936 = vmul.f32 %v3872, %v3928
      %v3937 = vmul.f32 %v3873, %v3929
      %v3938 = vlaneseq
      %v3939 = vshrl.u32 %v3938, 7
      %v3940 = vsub.s32 0, %v3939
      %v3941 = vrot.slane %v269, %v3940
      %v3942 = vmul.f32 %v3930, %v3941
      %v3943 = vmul.f32 %v3931, %v3941
      %v3944 = vmul.f32 %v3932, %v3941
      %v3945 = vmul.f32 %v3933, %v3941
      %v3946 = vmul.f32 %v3934, %v3941
      %v3947 = vmul.f32 %v3935, %v3941
      %v3948 = vmul.f32 %v3936, %v3941
      %v3949 = vmul.f32 %v3937, %v3941
      %v3950 = vlaneseq
      %v3951 = vshrl.u32 %v3950, 7
      %v3952 = vsub.s32 1, %v3951
      %v3953 = vrot.slane %v269, %v3952
      %v3954 = vadd.f32 %v3942, %v3953
      %v3955 = vadd.f32 %v3943, %v3953
      %v3956 = vadd.f32 %v3944, %v3953
      %v3957 = vadd.f32 %v3945, %v3953
      %v3958 = vadd.f32 %v3946, %v3953
      %v3959 = vadd.f32 %v3947, %v3953
      %v3960 = vadd.f32 %v3948, %v3953
      %v3961 = vadd.f32 %v3949, %v3953
      %3962 = vst.msk [vmem:[%s253] sm:$0xff] %vm277, %v3954
      %3963 = vst.msk [vmem:[%s253 + $0x8] sm:$0xff] %vm277, %v3955
      %3964 = vst.msk [vmem:[%s253 + $0x10] sm:$0xff] %vm277, %v3956
      %3965 = vst.msk [vmem:[%s253 + $0x18] sm:$0xff] %vm277, %v3957
      %3966 = vst.msk [vmem:[%s253 + $0x20] sm:$0xff] %vm277, %v3958
      %3967 = vst.msk [vmem:[%s253 + $0x28] sm:$0xff] %vm277, %v3959
      %3968 = vst.msk [vmem:[%s253 + $0x30] sm:$0xff] %vm277, %v3960
      %3969 = vst.msk [vmem:[%s253 + $0x38] sm:$0xff] %vm277, %v3961
      %s3970 = smul.u32 8, %s17
      %p3971 = scmp.lt.s32.totalorder %s3970, 31
      %s3972 = scalar_select %p3971, %s3970, 31
      %s3973 = smul.addr %s3972, 8
      %s3974 = scalar_lea.vmem %s6, %s3973
      // Predicated region
      $region45: #{tpu_custom_call.1} parent=43 // pred_check
        %p3975 = pneg %p166
      $region46: #{tpu_custom_call.1} parent=43 // pred_check_branch
        %3977 = sbr.rel (%p3975) target = $region48
      $region47: #{tpu_custom_call.1} parent=43 // pred_region
        %s3978 = smul.u32 8, %s17
      $region48: #{tpu_custom_call.1} parent=43 // pred_fallthru
        _
    $region44: #{tpu_custom_call.1} parent=5 // pred_fallthru
      _
    %p3979 = scmp.le.s32.totalorder 2, %s12
    // Predicated region
    $region49: #{tpu_custom_call.1} parent=5 // pred_check
      %p3980 = pneg %p3979
    $region50: #{tpu_custom_call.1} parent=5 // pred_check_branch
      %3982 = sbr.rel (%p3980) target = $region52
    $region51: #{tpu_custom_call.1} parent=5 // pred_region
      %s3983 = ssub.s32 %s12, 2
      // Predicated region
      $region53: #{tpu_custom_call.1} parent=51 // pred_check
        %p3984 = pneg %p172
      $region54: #{tpu_custom_call.1} parent=51 // pred_check_branch
        %3986 = sbr.rel (%p3984) target = $region56
      $region55: #{tpu_custom_call.1} parent=51 // pred_region
        %s3987 = smul.u32 8, %s18
        %p3988 = scmp.lt.s32.totalorder %s3987, 31
        %s3989 = scalar_select %p3988, %s3987, 31
        %s3990 = smul.addr %s3989, 8
        %s3991 = scalar_lea.vmem %s6, %s3990
      $region56: #{tpu_custom_call.1} parent=51 // pred_fallthru
        _
    $region52: #{tpu_custom_call.1} parent=5 // pred_fallthru
      _
  $region6: #{tpu_custom_call.1} parent=0 // loop_footer
    %s16 = sadd.s32 1, %s12
  $region7: #{tpu_custom_call.1} parent=0 // loop_footer_branch
    %11 = sbr.rel target = $region3
  $region8: #{tpu_custom_call.1} parent=0 // loop_exit
    _

</llo_original>
